<compile_context>
chip_gen: v7x
topology: tpu7x:2x2x1
jax: 0.10.0
libtpu: 0.0.40
codegen_flags: <defaults>
</compile_context>

<pallas_src>
import functools

import jax
import jax.numpy as jnp
import numpy as np
from jax import lax
from jax.experimental import pallas as pl
from jax.experimental.pallas import tpu as pltpu


def _round_up(x, m):
    return ((x + m - 1) // m) * m


def _pick_t_chunk(t, cap=32):
    best = 1
    for d in range(1, min(t, cap) + 1):
        if t % d == 0:
            best = d
    return best


# -----------------------------------------------------------------------------
# Fused multi-layer GroupedGRU kernel.
#
# Ref layout (all lane/sublane aligned):
#   x       : (T * B_PAD, IN0)       time-major rows, row = t * B_PAD + b
#   h0      : (L, B_PAD, H_LANE)
#   per layer l:
#     w_ih  : (IN_l, 3 * H_LANE)     block-diag over groups, gate-major columns
#     w_hh  : (H_LANE, 3 * H_LANE)   block-diag over groups, gate-major columns
#     bias_i: (1, 3 * H_LANE)        b_ih (+ b_hh for r,z gates) folded in
#     bias_hn:(1, H_LANE)            b_hh of the n gate (needed inside r*(...))
#   out     : (T * B_PAD, H_LANE)    last layer's outputs
#   h_fin   : (L, B_PAD, H_LANE)
# Grid = (T // T_CHUNK,)  (sequential recurrence -> "arbitrary").
# -----------------------------------------------------------------------------
def _make_fused_kernel(num_layers, t_chunk, b_pad, h_lane):
    def kernel(*refs):
        x_ref = refs[0]
        h0_ref = refs[1]
        layer_refs = refs[2:2 + 4 * num_layers]
        out_ref = refs[2 + 4 * num_layers]
        hfin_ref = refs[3 + 4 * num_layers]
        scratch = refs[4 + 4 * num_layers:]
        gi_ref = scratch[0]                       # (T_CHUNK*B_PAD, 3*H_LANE)
        h_ref = scratch[1]                        # (L, B_PAD, H_LANE) carried state
        act_ref = scratch[2] if num_layers > 1 else None  # inter-layer activations

        c = pl.program_id(0)

        @pl.when(c == 0)
        def _():
            h_ref[...] = h0_ref[...]

        for l in range(num_layers):
            wih_ref, whh_ref, bi_ref, bhn_ref = layer_refs[4 * l:4 * (l + 1)]

            # Layer input for this chunk: raw x for layer 0, previous layer's
            # in-VMEM outputs otherwise (never touches HBM between layers).
            x_in = x_ref[...] if l == 0 else act_ref[...]

            # Hoisted input projection: one MXU matmul for the whole time
            # chunk.  r/z biases (b_ih + b_hh) are already folded in.
            gi_ref[...] = jnp.dot(x_in, wih_ref[...],
                                  preferred_element_type=jnp.float32) + bi_ref[...]

            whh = whh_ref[...]        # loop-invariant, pre-transposed
            bhn = bhn_ref[...]        # (1, H_LANE), broadcast hoisted out of loop
            dst_ref = out_ref if l == num_layers - 1 else act_ref

            def step(t, h, whh=whh, bhn=bhn, dst_ref=dst_ref):
                row = pl.multiple_of(t * b_pad, b_pad)
                gi = gi_ref[pl.ds(row, b_pad), :]                          # (B_PAD, 3H)
                gh = jnp.dot(h, whh, preferred_element_type=jnp.float32)   # (B_PAD, 3H)
                r = jax.nn.sigmoid(gi[:, :h_lane] + gh[:, :h_lane])
                z = jax.nn.sigmoid(gi[:, h_lane:2 * h_lane] + gh[:, h_lane:2 * h_lane])
                n = jnp.tanh(gi[:, 2 * h_lane:] + r * (gh[:, 2 * h_lane:] + bhn))
                h_new = n + z * (h - n)
                dst_ref[pl.ds(row, b_pad), :] = h_new                      # lane-dense store
                return h_new

            h_last = lax.fori_loop(0, t_chunk, step, h_ref[l],
                                   unroll=t_chunk <= 8)
            h_ref[l] = h_last

        @pl.when(c == pl.num_programs(0) - 1)
        def _():
            hfin_ref[...] = h_ref[...]

    return kernel


def _run_grouped_gru(x2d, h0_all, layer_params, *, t_steps, b_pad, t_chunk, h_lane):
    num_layers = len(layer_params)
    in0 = x2d.shape[1]
    n_chunks = t_steps // t_chunk

    in_specs = [
        pl.BlockSpec((t_chunk * b_pad, in0), lambda c: (c, 0)),             # x chunk
        pl.BlockSpec((num_layers, b_pad, h_lane), lambda c: (0, 0, 0)),     # h0
    ]
    flat_inputs = [x2d, h0_all]
    for (wih, whh, bias_i, bias_hn) in layer_params:
        in_rows = wih.shape[0]
        in_specs += [
            pl.BlockSpec((in_rows, 3 * h_lane), lambda c: (0, 0)),          # w_ih
            pl.BlockSpec((h_lane, 3 * h_lane), lambda c: (0, 0)),           # w_hh
            pl.BlockSpec((1, 3 * h_lane), lambda c: (0, 0)),                # bias_i
            pl.BlockSpec((1, h_lane), lambda c: (0, 0)),                    # bias_hn
        ]
        flat_inputs += [wih, whh, bias_i, bias_hn]

    out_specs = [
        pl.BlockSpec((t_chunk * b_pad, h_lane), lambda c: (c, 0)),          # outputs
        pl.BlockSpec((num_layers, b_pad, h_lane), lambda c: (0, 0, 0)),     # final hidden
    ]
    scratch_shapes = [
        pltpu.VMEM((t_chunk * b_pad, 3 * h_lane), jnp.float32),             # gi chunk
        pltpu.VMEM((num_layers, b_pad, h_lane), jnp.float32),               # carried h
    ]
    if num_layers > 1:
        scratch_shapes.append(pltpu.VMEM((t_chunk * b_pad, h_lane), jnp.float32))

    kernel = _make_fused_kernel(num_layers, t_chunk, b_pad, h_lane)

    return pl.pallas_call(
        kernel,
        out_shape=(
            jax.ShapeDtypeStruct((t_steps * b_pad, h_lane), jnp.float32),
            jax.ShapeDtypeStruct((num_layers, b_pad, h_lane), jnp.float32),
        ),
        grid_spec=pltpu.PrefetchScalarGridSpec(
            num_scalar_prefetch=0,
            grid=(n_chunks,),
            in_specs=in_specs,
            out_specs=out_specs,
            scratch_shapes=scratch_shapes,
        ),
        compiler_params=pltpu.CompilerParams(
            dimension_semantics=("arbitrary",),
            vmem_limit_bytes=32 * 1024 * 1024),
    )(*flat_inputs)


def _prepare_layer_params(w_ih, w_hh, b_ih, b_hh, *, groups, h_lane, in_rows,
                          row_perm=None):
    """Fuse per-group GRU params into block-diagonal weights + folded biases.

    w_ih: (groups, 3*h_g, in_g), w_hh: (groups, 3*h_g, h_g),
    b_ih / b_hh: (groups, 3*h_g).  Columns are gate-major: gate k occupies
    [k*h_lane, k*h_lane + groups*h_g).  `row_perm` folds the inter-layer
    channel shuffle into the input-weight rows.
    """
    h_g = w_hh.shape[-1]
    in_g = w_ih.shape[-1]
    rows = groups * in_g
    hidden = groups * h_g

    wih_bd = jnp.zeros((rows, 3 * h_lane), jnp.float32)
    whh_bd = jnp.zeros((hidden, 3 * h_lane), jnp.float32)
    bias_i = jnp.zeros((1, 3 * h_lane), jnp.float32)
    bias_hn = jnp.zeros((1, h_lane), jnp.float32)

    for g in range(groups):
        for k in range(3):
            col0 = k * h_lane + g * h_g
            wih_bd = wih_bd.at[g * in_g:(g + 1) * in_g, col0:col0 + h_g].set(
                w_ih[g, k * h_g:(k + 1) * h_g, :].T)
            whh_bd = whh_bd.at[g * h_g:(g + 1) * h_g, col0:col0 + h_g].set(
                w_hh[g, k * h_g:(k + 1) * h_g, :].T)
            bi = b_ih[g, k * h_g:(k + 1) * h_g]
            if k < 2:  # fold b_hh into the r / z gates (precomputed with gi)
                bi = bi + b_hh[g, k * h_g:(k + 1) * h_g]
            bias_i = bias_i.at[0, col0:col0 + h_g].set(bi)
        bias_hn = bias_hn.at[0, g * h_g:(g + 1) * h_g].set(
            b_hh[g, 2 * h_g:3 * h_g])

    if row_perm is not None:
        # y_shuffled[..., p] = y[..., perm[p]]  =>  W_raw[perm[p], :] = W_shuf[p, :]
        wih_bd = jnp.zeros_like(wih_bd).at[jnp.asarray(row_perm)].set(wih_bd)
    if in_rows > rows:
        wih_bd = jnp.pad(wih_bd, ((0, in_rows - rows), (0, 0)))
    if h_lane > hidden:
        whh_bd = jnp.pad(whh_bd, ((0, h_lane - hidden), (0, 0)))
    return wih_bd, whh_bd, bias_i, bias_hn


@functools.partial(jax.jit, static_argnames=("groups", "shuffle", "t_chunk"))
def grouped_gru_forward(x, state, params, *, groups, shuffle=True, t_chunk=None):
    """Pallas forward for GroupedGRU (batch_first, unidirectional, add_outputs=False).

    x:      (B, T, input_size)
    state:  (num_layers * groups, B, hidden_size // groups)  -- torch layout
    params: tuple of per-layer (w_ih, w_hh, b_ih, b_hh) with torch-GRU shapes
            w_ih (groups, 3*h_g, in_g), w_hh (groups, 3*h_g, h_g),
            b_ih / b_hh (groups, 3*h_g)          (gate order r, z, n)
    Returns (output (B, T, hidden_size), h (num_layers*groups, B, h_g)).
    """
    B, T, input_size = x.shape
    num_layers = len(params)
    h_g = params[0][1].shape[-1]
    hidden = groups * h_g
    h_lane = _round_up(hidden, 128)
    b_pad = _round_up(B, 8)
    if t_chunk is None:
        t_chunk = _pick_t_chunk(T)
    do_shuffle = shuffle and groups > 1

    # Inter-layer channel shuffle as a static permutation (folded into weights).
    perm = (np.arange(hidden) % h_g) * groups + (np.arange(hidden) // h_g)

    # Time-major, batch padded to 8 sublanes, flattened to aligned 2-D rows.
    x_tm = jnp.transpose(x, (1, 0, 2))                         # (T, B, IN)
    x_tm = jnp.pad(x_tm, ((0, 0), (0, b_pad - B), (0, 0)))
    x2d = x_tm.reshape(T * b_pad, input_size)

    layer_params = []
    h0_layers = []
    for l, (w_ih, w_hh, b_ih, b_hh) in enumerate(params):
        in_rows = input_size if l == 0 else h_lane
        row_perm = perm if (l > 0 and do_shuffle) else None
        layer_params.append(_prepare_layer_params(
            w_ih, w_hh, b_ih, b_hh, groups=groups, h_lane=h_lane,
            in_rows=in_rows, row_perm=row_perm))

        h0 = state[l * groups:(l + 1) * groups]                # (groups, B, h_g)
        h0 = jnp.transpose(h0, (1, 0, 2)).reshape(B, hidden)
        h0 = jnp.pad(h0, ((0, b_pad - B), (0, h_lane - hidden)))
        h0_layers.append(h0)
    h0_all = jnp.stack(h0_layers, axis=0)                      # (L, B_PAD, H_LANE)

    out2d, hfin = _run_grouped_gru(x2d, h0_all, layer_params,
                                   t_steps=T, b_pad=b_pad,
                                   t_chunk=t_chunk, h_lane=h_lane)

    out = out2d.reshape(T, b_pad, h_lane)[:, :B, :hidden]
    output = jnp.transpose(out, (1, 0, 2))                     # (B, T, hidden)

    hfin = hfin[:, :B, :hidden].reshape(num_layers, B, groups, h_g)
    h = jnp.transpose(hfin, (0, 2, 1, 3)).reshape(num_layers * groups, B, h_g)
    return output, h


# -----------------------------------------------------------------------------
# Pure-JAX reference mirroring the torch GroupedGRU semantics.
# -----------------------------------------------------------------------------
def ref_grouped_gru(x, state, params, *, groups, shuffle=True):
    B, T, _ = x.shape
    num_layers = len(params)
    h_g = params[0][1].shape[-1]
    do_shuffle = shuffle and groups > 1
    hp = lax.Precision.HIGHEST

    inp = x
    outstates = []
    for l, (w_ih, w_hh, b_ih, b_hh) in enumerate(params):
        in_g = inp.shape[-1] // groups
        outs, hs = [], []
        for g in range(groups):
            xg = inp[..., g * in_g:(g + 1) * in_g]
            hg = state[l * groups + g]

            def step(h, xt, g=g):
                gi = jnp.dot(xt, w_ih[g].T, precision=hp) + b_ih[g]
                gh = jnp.dot(h, w_hh[g].T, precision=hp) + b_hh[g]
                r = jax.nn.sigmoid(gi[:, :h_g] + gh[:, :h_g])
                z = jax.nn.sigmoid(gi[:, h_g:2 * h_g] + gh[:, h_g:2 * h_g])
                n = jnp.tanh(gi[:, 2 * h_g:] + r * gh[:, 2 * h_g:])
                hn = (1.0 - z) * n + z * h
                return hn, hn

            h_last, ys = lax.scan(step, hg, jnp.swapaxes(xg, 0, 1))
            outs.append(jnp.swapaxes(ys, 0, 1))
            hs.append(h_last[None])
        inp = jnp.concatenate(outs, axis=-1)
        outstates.append(jnp.concatenate(hs, axis=0))
        if do_shuffle and l < num_layers - 1:
            inp = inp.reshape(B, T, -1, groups).swapaxes(2, 3).reshape(B, T, -1)
    return inp, jnp.concatenate(outstates, axis=0)


if __name__ == "__main__":
    # Module config: GroupedGRU(input_size=32, hidden_size=64, num_layers=2,
    # groups=4, shuffle=True, batch_first=True, add_outputs=False).
    input_size = 32
    hidden_size = 64
    groups = 4
    num_layers = 2
    B, T = 2, 8
    in_g0 = input_size // groups
    h_g = hidden_size // groups

    key = jax.random.PRNGKey(0)
    keys = jax.random.split(key, 2 + 4 * num_layers)
    k_x, k_h0 = keys[0], keys[1]

    # torch.nn.GRU-style init: U(-k, k), k = 1/sqrt(hidden_per_group)
    bound = 1.0 / np.sqrt(h_g)
    params = []
    for l in range(num_layers):
        in_g = in_g0 if l == 0 else h_g
        kw1, kw2, kb1, kb2 = keys[2 + 4 * l: 2 + 4 * (l + 1)]
        w_ih = jax.random.uniform(kw1, (groups, 3 * h_g, in_g), jnp.float32, -bound, bound)
        w_hh = jax.random.uniform(kw2, (groups, 3 * h_g, h_g), jnp.float32, -bound, bound)
        b_ih = jax.random.uniform(kb1, (groups, 3 * h_g), jnp.float32, -bound, bound)
        b_hh = jax.random.uniform(kb2, (groups, 3 * h_g), jnp.float32, -bound, bound)
        params.append((w_ih, w_hh, b_ih, b_hh))
    params = tuple(params)

    x = jax.random.normal(k_x, (B, T, input_size), jnp.float32)
    state = 0.5 * jax.random.normal(
        k_h0, (num_layers * groups, B, h_g), jnp.float32)

    out, h = grouped_gru_forward(x, state, params, groups=groups)
    out = jax.block_until_ready(out)
    h = jax.block_until_ready(h)

    out_ref, h_ref = ref_grouped_gru(x, state, params, groups=groups)
    np.testing.assert_allclose(np.asarray(out), np.asarray(out_ref),
                               rtol=1e-4, atol=1e-5)
    np.testing.assert_allclose(np.asarray(h), np.asarray(h_ref),
                               rtol=1e-4, atol=1e-5)

    print("KERNEL_OK")
</pallas_src>

<mosaic_0001>
module attributes {stable_mosaic.version = 11 : i64} {
  func.func @kernel(%arg0: i32, %arg1: memref<64x32xf32, #tpu.memory_space<vmem>>, %arg2: memref<2x8x128xf32, #tpu.memory_space<vmem>>, %arg3: memref<32x384xf32, #tpu.memory_space<vmem>>, %arg4: memref<128x384xf32, #tpu.memory_space<vmem>>, %arg5: memref<1x384xf32, #tpu.memory_space<vmem>>, %arg6: memref<1x128xf32, #tpu.memory_space<vmem>>, %arg7: memref<128x384xf32, #tpu.memory_space<vmem>>, %arg8: memref<128x384xf32, #tpu.memory_space<vmem>>, %arg9: memref<1x384xf32, #tpu.memory_space<vmem>>, %arg10: memref<1x128xf32, #tpu.memory_space<vmem>>, %arg11: memref<64x128xf32, #tpu.memory_space<vmem>>, %arg12: memref<2x8x128xf32, #tpu.memory_space<vmem>>, %arg13: memref<64x384xf32, #tpu.memory_space<vmem>>, %arg14: memref<2x8x128xf32, #tpu.memory_space<vmem>>, %arg15: memref<64x128xf32, #tpu.memory_space<vmem>>) attributes {dimension_semantics = [#tpu.dimension_semantics<arbitrary>], iteration_bounds = array<i64: 1>, scalar_prefetch = 0 : i64, scratch_operands = 3 : i64, tpu.core_type = #tpu.core_type<tc>, window_params = [{transform_indices = @transform_0, window_bounds = array<i64: 64, 32>}, {pipeline_mode = #tpu.pipeline_mode<synchronous>, transform_indices = @transform_1, window_bounds = array<i64: 2, 8, 128>}, {pipeline_mode = #tpu.pipeline_mode<synchronous>, transform_indices = @transform_2, window_bounds = array<i64: 32, 384>}, {pipeline_mode = #tpu.pipeline_mode<synchronous>, transform_indices = @transform_3, window_bounds = array<i64: 128, 384>}, {pipeline_mode = #tpu.pipeline_mode<synchronous>, transform_indices = @transform_4, window_bounds = array<i64: 1, 384>}, {pipeline_mode = #tpu.pipeline_mode<synchronous>, transform_indices = @transform_5, window_bounds = array<i64: 1, 128>}, {pipeline_mode = #tpu.pipeline_mode<synchronous>, transform_indices = @transform_6, window_bounds = array<i64: 128, 384>}, {pipeline_mode = #tpu.pipeline_mode<synchronous>, transform_indices = @transform_7, window_bounds = array<i64: 128, 384>}, {pipeline_mode = #tpu.pipeline_mode<synchronous>, transform_indices = @transform_8, window_bounds = array<i64: 1, 384>}, {pipeline_mode = #tpu.pipeline_mode<synchronous>, transform_indices = @transform_9, window_bounds = array<i64: 1, 128>}, {transform_indices = @transform_10, window_bounds = array<i64: 64, 128>}, {pipeline_mode = #tpu.pipeline_mode<synchronous>, transform_indices = @transform_11, window_bounds = array<i64: 2, 8, 128>}]} {
    %c0_i32 = arith.constant 0 : i32
    %0 = arith.cmpi eq, %arg0, %c0_i32 : i32
    %1 = arith.extui %0 : i1 to i32
    %c0_i32_0 = arith.constant 0 : i32
    %2 = arith.cmpi ne, %1, %c0_i32_0 : i32
    scf.if %2 {
      %c0_144 = arith.constant 0 : index
      %c0_145 = arith.constant 0 : index
      %c0_146 = arith.constant 0 : index
      %562 = vector.load %arg2[%c0_144, %c0_145, %c0_146] : memref<2x8x128xf32, #tpu.memory_space<vmem>>, vector<2x8x128xf32>
      %c0_147 = arith.constant 0 : index
      %c0_148 = arith.constant 0 : index
      %c0_149 = arith.constant 0 : index
      %563 = vector.load %arg14[%c0_147, %c0_148, %c0_149] : memref<2x8x128xf32, #tpu.memory_space<vmem>>, vector<2x8x128xf32>
      tpu.vector_store %arg14[%c0_147, %c0_148, %c0_149], %562 {strides = array<i32>} : memref<2x8x128xf32, #tpu.memory_space<vmem>>, vector<2x8x128xf32>,
    } else {
    }
    %c0 = arith.constant 0 : index
    %c0_1 = arith.constant 0 : index
    %3 = vector.load %arg1[%c0, %c0_1] : memref<64x32xf32, #tpu.memory_space<vmem>>, vector<64x32xf32>
    %c0_2 = arith.constant 0 : index
    %c0_3 = arith.constant 0 : index
    %4 = vector.load %arg3[%c0_2, %c0_3] : memref<32x384xf32, #tpu.memory_space<vmem>>, vector<32x384xf32>
    %cst = arith.constant dense<0.000000e+00> : vector<64x384xf32>
    %5 = tpu.matmul %3, %4, %cst {dimension_numbers = #tpu.dot_dimension_numbers<[1], [0], [0], [1], [0, 0, 1, 1], [], []>} : vector<64x32xf32>, vector<32x384xf32>, vector<64x384xf32> -> vector<64x384xf32>
    %c0_4 = arith.constant 0 : index
    %c0_5 = arith.constant 0 : index
    %6 = vector.load %arg5[%c0_4, %c0_5] : memref<1x384xf32, #tpu.memory_space<vmem>>, vector<1x384xf32>
    %7 = vector.broadcast %6 : vector<1x384xf32> to vector<64x384xf32>
    %8 = arith.addf %5, %7 : vector<64x384xf32>
    %c0_6 = arith.constant 0 : index
    %c0_7 = arith.constant 0 : index
    %9 = vector.load %arg13[%c0_6, %c0_7] : memref<64x384xf32, #tpu.memory_space<vmem>>, vector<64x384xf32>
    tpu.vector_store %arg13[%c0_6, %c0_7], %8 {strides = array<i32>} : memref<64x384xf32, #tpu.memory_space<vmem>>, vector<64x384xf32>,
    %c0_8 = arith.constant 0 : index
    %c0_9 = arith.constant 0 : index
    %10 = vector.load %arg4[%c0_8, %c0_9] : memref<128x384xf32, #tpu.memory_space<vmem>>, vector<128x384xf32>
    %c0_10 = arith.constant 0 : index
    %c0_11 = arith.constant 0 : index
    %11 = vector.load %arg6[%c0_10, %c0_11] : memref<1x128xf32, #tpu.memory_space<vmem>>, vector<1x128xf32>
    %c0_12 = arith.constant 0 : index
    %c0_13 = arith.constant 0 : index
    %c0_14 = arith.constant 0 : index
    %12 = vector.load %arg14[%c0_12, %c0_13, %c0_14] : memref<2x8x128xf32, #tpu.memory_space<vmem>>, vector<1x8x128xf32>
    %13 = vector.shape_cast %12 : vector<1x8x128xf32> to vector<8x128xf32>
    %c0_i32_15 = arith.constant 0 : i32
    %c8_i32 = arith.constant 8 : i32
    %14 = arith.muli %c0_i32_15, %c8_i32 : i32
    %15 = tpu.assume_multiple %14, 8 : i32
    %16 = arith.index_cast %15 : i32 to index
    %c0_16 = arith.constant 0 : index
    %17 = vector.load %arg13[%16, %c0_16] : memref<64x384xf32, #tpu.memory_space<vmem>>, vector<8x384xf32>
    %cst_17 = arith.constant dense<0.000000e+00> : vector<8x384xf32>
    %18 = tpu.matmul %13, %10, %cst_17 {dimension_numbers = #tpu.dot_dimension_numbers<[1], [0], [0], [1], [0, 0, 1, 1], [], []>} : vector<8x128xf32>, vector<128x384xf32>, vector<8x384xf32> -> vector<8x384xf32>
    %19 = vector.extract_strided_slice %17 {offsets = [0, 0], sizes = [8, 128], strides = [1, 1]} : vector<8x384xf32> to vector<8x128xf32>
    %20 = vector.extract_strided_slice %18 {offsets = [0, 0], sizes = [8, 128], strides = [1, 1]} : vector<8x384xf32> to vector<8x128xf32>
    %21 = arith.addf %19, %20 : vector<8x128xf32>
    %22 = arith.negf %21 : vector<8x128xf32>
    %23 = math.exp %22 : vector<8x128xf32>
    %cst_18 = arith.constant 1.000000e+00 : f32
    %24 = vector.broadcast %cst_18 : f32 to vector<8x128xf32>
    %25 = arith.addf %24, %23 : vector<8x128xf32>
    %26 = arith.divf %24, %25 : vector<8x128xf32>
    %27 = vector.extract_strided_slice %17 {offsets = [0, 128], sizes = [8, 128], strides = [1, 1]} : vector<8x384xf32> to vector<8x128xf32>
    %28 = vector.extract_strided_slice %18 {offsets = [0, 128], sizes = [8, 128], strides = [1, 1]} : vector<8x384xf32> to vector<8x128xf32>
    %29 = arith.addf %27, %28 : vector<8x128xf32>
    %30 = arith.negf %29 : vector<8x128xf32>
    %31 = math.exp %30 : vector<8x128xf32>
    %cst_19 = arith.constant 1.000000e+00 : f32
    %32 = vector.broadcast %cst_19 : f32 to vector<8x128xf32>
    %33 = arith.addf %32, %31 : vector<8x128xf32>
    %34 = arith.divf %32, %33 : vector<8x128xf32>
    %35 = vector.extract_strided_slice %17 {offsets = [0, 256], sizes = [8, 128], strides = [1, 1]} : vector<8x384xf32> to vector<8x128xf32>
    %36 = vector.extract_strided_slice %18 {offsets = [0, 256], sizes = [8, 128], strides = [1, 1]} : vector<8x384xf32> to vector<8x128xf32>
    %37 = vector.broadcast %11 : vector<1x128xf32> to vector<8x128xf32>
    %38 = arith.addf %36, %37 : vector<8x128xf32>
    %39 = arith.mulf %26, %38 : vector<8x128xf32>
    %40 = arith.addf %35, %39 : vector<8x128xf32>
    %41 = math.tanh %40 : vector<8x128xf32>
    %42 = arith.subf %13, %41 : vector<8x128xf32>
    %43 = arith.mulf %34, %42 : vector<8x128xf32>
    %44 = arith.addf %41, %43 : vector<8x128xf32>
    %45 = arith.index_cast %15 : i32 to index
    %c0_20 = arith.constant 0 : index
    %46 = vector.load %arg15[%45, %c0_20] : memref<64x128xf32, #tpu.memory_space<vmem>>, vector<8x128xf32>
    tpu.vector_store %arg15[%45, %c0_20], %44 {strides = array<i32>} : memref<64x128xf32, #tpu.memory_space<vmem>>, vector<8x128xf32>,
    %c1_i32 = arith.constant 1 : i32
    %c8_i32_21 = arith.constant 8 : i32
    %47 = arith.muli %c1_i32, %c8_i32_21 : i32
    %48 = tpu.assume_multiple %47, 8 : i32
    %49 = arith.index_cast %48 : i32 to index
    %c0_22 = arith.constant 0 : index
    %50 = vector.load %arg13[%49, %c0_22] : memref<64x384xf32, #tpu.memory_space<vmem>>, vector<8x384xf32>
    %cst_23 = arith.constant dense<0.000000e+00> : vector<8x384xf32>
    %51 = tpu.matmul %44, %10, %cst_23 {dimension_numbers = #tpu.dot_dimension_numbers<[1], [0], [0], [1], [0, 0, 1, 1], [], []>} : vector<8x128xf32>, vector<128x384xf32>, vector<8x384xf32> -> vector<8x384xf32>
    %52 = vector.extract_strided_slice %50 {offsets = [0, 0], sizes = [8, 128], strides = [1, 1]} : vector<8x384xf32> to vector<8x128xf32>
    %53 = vector.extract_strided_slice %51 {offsets = [0, 0], sizes = [8, 128], strides = [1, 1]} : vector<8x384xf32> to vector<8x128xf32>
    %54 = arith.addf %52, %53 : vector<8x128xf32>
    %55 = arith.negf %54 : vector<8x128xf32>
    %56 = math.exp %55 : vector<8x128xf32>
    %cst_24 = arith.constant 1.000000e+00 : f32
    %57 = vector.broadcast %cst_24 : f32 to vector<8x128xf32>
    %58 = arith.addf %57, %56 : vector<8x128xf32>
    %59 = arith.divf %57, %58 : vector<8x128xf32>
    %60 = vector.extract_strided_slice %50 {offsets = [0, 128], sizes = [8, 128], strides = [1, 1]} : vector<8x384xf32> to vector<8x128xf32>
    %61 = vector.extract_strided_slice %51 {offsets = [0, 128], sizes = [8, 128], strides = [1, 1]} : vector<8x384xf32> to vector<8x128xf32>
    %62 = arith.addf %60, %61 : vector<8x128xf32>
    %63 = arith.negf %62 : vector<8x128xf32>
    %64 = math.exp %63 : vector<8x128xf32>
    %cst_25 = arith.constant 1.000000e+00 : f32
    %65 = vector.broadcast %cst_25 : f32 to vector<8x128xf32>
    %66 = arith.addf %65, %64 : vector<8x128xf32>
    %67 = arith.divf %65, %66 : vector<8x128xf32>
    %68 = vector.extract_strided_slice %50 {offsets = [0, 256], sizes = [8, 128], strides = [1, 1]} : vector<8x384xf32> to vector<8x128xf32>
    %69 = vector.extract_strided_slice %51 {offsets = [0, 256], sizes = [8, 128], strides = [1, 1]} : vector<8x384xf32> to vector<8x128xf32>
    %70 = vector.broadcast %11 : vector<1x128xf32> to vector<8x128xf32>
    %71 = arith.addf %69, %70 : vector<8x128xf32>
    %72 = arith.mulf %59, %71 : vector<8x128xf32>
    %73 = arith.addf %68, %72 : vector<8x128xf32>
    %74 = math.tanh %73 : vector<8x128xf32>
    %75 = arith.subf %44, %74 : vector<8x128xf32>
    %76 = arith.mulf %67, %75 : vector<8x128xf32>
    %77 = arith.addf %74, %76 : vector<8x128xf32>
    %78 = arith.index_cast %48 : i32 to index
    %c0_26 = arith.constant 0 : index
    %79 = vector.load %arg15[%78, %c0_26] : memref<64x128xf32, #tpu.memory_space<vmem>>, vector<8x128xf32>
    tpu.vector_store %arg15[%78, %c0_26], %77 {strides = array<i32>} : memref<64x128xf32, #tpu.memory_space<vmem>>, vector<8x128xf32>,
    %c2_i32 = arith.constant 2 : i32
    %c8_i32_27 = arith.constant 8 : i32
    %80 = arith.muli %c2_i32, %c8_i32_27 : i32
    %81 = tpu.assume_multiple %80, 8 : i32
    %82 = arith.index_cast %81 : i32 to index
    %c0_28 = arith.constant 0 : index
    %83 = vector.load %arg13[%82, %c0_28] : memref<64x384xf32, #tpu.memory_space<vmem>>, vector<8x384xf32>
    %cst_29 = arith.constant dense<0.000000e+00> : vector<8x384xf32>
    %84 = tpu.matmul %77, %10, %cst_29 {dimension_numbers = #tpu.dot_dimension_numbers<[1], [0], [0], [1], [0, 0, 1, 1], [], []>} : vector<8x128xf32>, vector<128x384xf32>, vector<8x384xf32> -> vector<8x384xf32>
    %85 = vector.extract_strided_slice %83 {offsets = [0, 0], sizes = [8, 128], strides = [1, 1]} : vector<8x384xf32> to vector<8x128xf32>
    %86 = vector.extract_strided_slice %84 {offsets = [0, 0], sizes = [8, 128], strides = [1, 1]} : vector<8x384xf32> to vector<8x128xf32>
    %87 = arith.addf %85, %86 : vector<8x128xf32>
    %88 = arith.negf %87 : vector<8x128xf32>
    %89 = math.exp %88 : vector<8x128xf32>
    %cst_30 = arith.constant 1.000000e+00 : f32
    %90 = vector.broadcast %cst_30 : f32 to vector<8x128xf32>
    %91 = arith.addf %90, %89 : vector<8x128xf32>
    %92 = arith.divf %90, %91 : vector<8x128xf32>
    %93 = vector.extract_strided_slice %83 {offsets = [0, 128], sizes = [8, 128], strides = [1, 1]} : vector<8x384xf32> to vector<8x128xf32>
    %94 = vector.extract_strided_slice %84 {offsets = [0, 128], sizes = [8, 128], strides = [1, 1]} : vector<8x384xf32> to vector<8x128xf32>
    %95 = arith.addf %93, %94 : vector<8x128xf32>
    %96 = arith.negf %95 : vector<8x128xf32>
    %97 = math.exp %96 : vector<8x128xf32>
    %cst_31 = arith.constant 1.000000e+00 : f32
    %98 = vector.broadcast %cst_31 : f32 to vector<8x128xf32>
    %99 = arith.addf %98, %97 : vector<8x128xf32>
    %100 = arith.divf %98, %99 : vector<8x128xf32>
    %101 = vector.extract_strided_slice %83 {offsets = [0, 256], sizes = [8, 128], strides = [1, 1]} : vector<8x384xf32> to vector<8x128xf32>
    %102 = vector.extract_strided_slice %84 {offsets = [0, 256], sizes = [8, 128], strides = [1, 1]} : vector<8x384xf32> to vector<8x128xf32>
    %103 = vector.broadcast %11 : vector<1x128xf32> to vector<8x128xf32>
    %104 = arith.addf %102, %103 : vector<8x128xf32>
    %105 = arith.mulf %92, %104 : vector<8x128xf32>
    %106 = arith.addf %101, %105 : vector<8x128xf32>
    %107 = math.tanh %106 : vector<8x128xf32>
    %108 = arith.subf %77, %107 : vector<8x128xf32>
    %109 = arith.mulf %100, %108 : vector<8x128xf32>
    %110 = arith.addf %107, %109 : vector<8x128xf32>
    %111 = arith.index_cast %81 : i32 to index
    %c0_32 = arith.constant 0 : index
    %112 = vector.load %arg15[%111, %c0_32] : memref<64x128xf32, #tpu.memory_space<vmem>>, vector<8x128xf32>
    tpu.vector_store %arg15[%111, %c0_32], %110 {strides = array<i32>} : memref<64x128xf32, #tpu.memory_space<vmem>>, vector<8x128xf32>,
    %c3_i32 = arith.constant 3 : i32
    %c8_i32_33 = arith.constant 8 : i32
    %113 = arith.muli %c3_i32, %c8_i32_33 : i32
    %114 = tpu.assume_multiple %113, 8 : i32
    %115 = arith.index_cast %114 : i32 to index
    %c0_34 = arith.constant 0 : index
    %116 = vector.load %arg13[%115, %c0_34] : memref<64x384xf32, #tpu.memory_space<vmem>>, vector<8x384xf32>
    %cst_35 = arith.constant dense<0.000000e+00> : vector<8x384xf32>
    %117 = tpu.matmul %110, %10, %cst_35 {dimension_numbers = #tpu.dot_dimension_numbers<[1], [0], [0], [1], [0, 0, 1, 1], [], []>} : vector<8x128xf32>, vector<128x384xf32>, vector<8x384xf32> -> vector<8x384xf32>
    %118 = vector.extract_strided_slice %116 {offsets = [0, 0], sizes = [8, 128], strides = [1, 1]} : vector<8x384xf32> to vector<8x128xf32>
    %119 = vector.extract_strided_slice %117 {offsets = [0, 0], sizes = [8, 128], strides = [1, 1]} : vector<8x384xf32> to vector<8x128xf32>
    %120 = arith.addf %118, %119 : vector<8x128xf32>
    %121 = arith.negf %120 : vector<8x128xf32>
    %122 = math.exp %121 : vector<8x128xf32>
    %cst_36 = arith.constant 1.000000e+00 : f32
    %123 = vector.broadcast %cst_36 : f32 to vector<8x128xf32>
    %124 = arith.addf %123, %122 : vector<8x128xf32>
    %125 = arith.divf %123, %124 : vector<8x128xf32>
    %126 = vector.extract_strided_slice %116 {offsets = [0, 128], sizes = [8, 128], strides = [1, 1]} : vector<8x384xf32> to vector<8x128xf32>
    %127 = vector.extract_strided_slice %117 {offsets = [0, 128], sizes = [8, 128], strides = [1, 1]} : vector<8x384xf32> to vector<8x128xf32>
    %128 = arith.addf %126, %127 : vector<8x128xf32>
    %129 = arith.negf %128 : vector<8x128xf32>
    %130 = math.exp %129 : vector<8x128xf32>
    %cst_37 = arith.constant 1.000000e+00 : f32
    %131 = vector.broadcast %cst_37 : f32 to vector<8x128xf32>
    %132 = arith.addf %131, %130 : vector<8x128xf32>
    %133 = arith.divf %131, %132 : vector<8x128xf32>
    %134 = vector.extract_strided_slice %116 {offsets = [0, 256], sizes = [8, 128], strides = [1, 1]} : vector<8x384xf32> to vector<8x128xf32>
    %135 = vector.extract_strided_slice %117 {offsets = [0, 256], sizes = [8, 128], strides = [1, 1]} : vector<8x384xf32> to vector<8x128xf32>
    %136 = vector.broadcast %11 : vector<1x128xf32> to vector<8x128xf32>
    %137 = arith.addf %135, %136 : vector<8x128xf32>
    %138 = arith.mulf %125, %137 : vector<8x128xf32>
    %139 = arith.addf %134, %138 : vector<8x128xf32>
    %140 = math.tanh %139 : vector<8x128xf32>
    %141 = arith.subf %110, %140 : vector<8x128xf32>
    %142 = arith.mulf %133, %141 : vector<8x128xf32>
    %143 = arith.addf %140, %142 : vector<8x128xf32>
    %144 = arith.index_cast %114 : i32 to index
    %c0_38 = arith.constant 0 : index
    %145 = vector.load %arg15[%144, %c0_38] : memref<64x128xf32, #tpu.memory_space<vmem>>, vector<8x128xf32>
    tpu.vector_store %arg15[%144, %c0_38], %143 {strides = array<i32>} : memref<64x128xf32, #tpu.memory_space<vmem>>, vector<8x128xf32>,
    %c4_i32 = arith.constant 4 : i32
    %c8_i32_39 = arith.constant 8 : i32
    %146 = arith.muli %c4_i32, %c8_i32_39 : i32
    %147 = tpu.assume_multiple %146, 8 : i32
    %148 = arith.index_cast %147 : i32 to index
    %c0_40 = arith.constant 0 : index
    %149 = vector.load %arg13[%148, %c0_40] : memref<64x384xf32, #tpu.memory_space<vmem>>, vector<8x384xf32>
    %cst_41 = arith.constant dense<0.000000e+00> : vector<8x384xf32>
    %150 = tpu.matmul %143, %10, %cst_41 {dimension_numbers = #tpu.dot_dimension_numbers<[1], [0], [0], [1], [0, 0, 1, 1], [], []>} : vector<8x128xf32>, vector<128x384xf32>, vector<8x384xf32> -> vector<8x384xf32>
    %151 = vector.extract_strided_slice %149 {offsets = [0, 0], sizes = [8, 128], strides = [1, 1]} : vector<8x384xf32> to vector<8x128xf32>
    %152 = vector.extract_strided_slice %150 {offsets = [0, 0], sizes = [8, 128], strides = [1, 1]} : vector<8x384xf32> to vector<8x128xf32>
    %153 = arith.addf %151, %152 : vector<8x128xf32>
    %154 = arith.negf %153 : vector<8x128xf32>
    %155 = math.exp %154 : vector<8x128xf32>
    %cst_42 = arith.constant 1.000000e+00 : f32
    %156 = vector.broadcast %cst_42 : f32 to vector<8x128xf32>
    %157 = arith.addf %156, %155 : vector<8x128xf32>
    %158 = arith.divf %156, %157 : vector<8x128xf32>
    %159 = vector.extract_strided_slice %149 {offsets = [0, 128], sizes = [8, 128], strides = [1, 1]} : vector<8x384xf32> to vector<8x128xf32>
    %160 = vector.extract_strided_slice %150 {offsets = [0, 128], sizes = [8, 128], strides = [1, 1]} : vector<8x384xf32> to vector<8x128xf32>
    %161 = arith.addf %159, %160 : vector<8x128xf32>
    %162 = arith.negf %161 : vector<8x128xf32>
    %163 = math.exp %162 : vector<8x128xf32>
    %cst_43 = arith.constant 1.000000e+00 : f32
    %164 = vector.broadcast %cst_43 : f32 to vector<8x128xf32>
    %165 = arith.addf %164, %163 : vector<8x128xf32>
    %166 = arith.divf %164, %165 : vector<8x128xf32>
    %167 = vector.extract_strided_slice %149 {offsets = [0, 256], sizes = [8, 128], strides = [1, 1]} : vector<8x384xf32> to vector<8x128xf32>
    %168 = vector.extract_strided_slice %150 {offsets = [0, 256], sizes = [8, 128], strides = [1, 1]} : vector<8x384xf32> to vector<8x128xf32>
    %169 = vector.broadcast %11 : vector<1x128xf32> to vector<8x128xf32>
    %170 = arith.addf %168, %169 : vector<8x128xf32>
    %171 = arith.mulf %158, %170 : vector<8x128xf32>
    %172 = arith.addf %167, %171 : vector<8x128xf32>
    %173 = math.tanh %172 : vector<8x128xf32>
    %174 = arith.subf %143, %173 : vector<8x128xf32>
    %175 = arith.mulf %166, %174 : vector<8x128xf32>
    %176 = arith.addf %173, %175 : vector<8x128xf32>
    %177 = arith.index_cast %147 : i32 to index
    %c0_44 = arith.constant 0 : index
    %178 = vector.load %arg15[%177, %c0_44] : memref<64x128xf32, #tpu.memory_space<vmem>>, vector<8x128xf32>
    tpu.vector_store %arg15[%177, %c0_44], %176 {strides = array<i32>} : memref<64x128xf32, #tpu.memory_space<vmem>>, vector<8x128xf32>,
    %c5_i32 = arith.constant 5 : i32
    %c8_i32_45 = arith.constant 8 : i32
    %179 = arith.muli %c5_i32, %c8_i32_45 : i32
    %180 = tpu.assume_multiple %179, 8 : i32
    %181 = arith.index_cast %180 : i32 to index
    %c0_46 = arith.constant 0 : index
    %182 = vector.load %arg13[%181, %c0_46] : memref<64x384xf32, #tpu.memory_space<vmem>>, vector<8x384xf32>
    %cst_47 = arith.constant dense<0.000000e+00> : vector<8x384xf32>
    %183 = tpu.matmul %176, %10, %cst_47 {dimension_numbers = #tpu.dot_dimension_numbers<[1], [0], [0], [1], [0, 0, 1, 1], [], []>} : vector<8x128xf32>, vector<128x384xf32>, vector<8x384xf32> -> vector<8x384xf32>
    %184 = vector.extract_strided_slice %182 {offsets = [0, 0], sizes = [8, 128], strides = [1, 1]} : vector<8x384xf32> to vector<8x128xf32>
    %185 = vector.extract_strided_slice %183 {offsets = [0, 0], sizes = [8, 128], strides = [1, 1]} : vector<8x384xf32> to vector<8x128xf32>
    %186 = arith.addf %184, %185 : vector<8x128xf32>
    %187 = arith.negf %186 : vector<8x128xf32>
    %188 = math.exp %187 : vector<8x128xf32>
    %cst_48 = arith.constant 1.000000e+00 : f32
    %189 = vector.broadcast %cst_48 : f32 to vector<8x128xf32>
    %190 = arith.addf %189, %188 : vector<8x128xf32>
    %191 = arith.divf %189, %190 : vector<8x128xf32>
    %192 = vector.extract_strided_slice %182 {offsets = [0, 128], sizes = [8, 128], strides = [1, 1]} : vector<8x384xf32> to vector<8x128xf32>
    %193 = vector.extract_strided_slice %183 {offsets = [0, 128], sizes = [8, 128], strides = [1, 1]} : vector<8x384xf32> to vector<8x128xf32>
    %194 = arith.addf %192, %193 : vector<8x128xf32>
    %195 = arith.negf %194 : vector<8x128xf32>
    %196 = math.exp %195 : vector<8x128xf32>
    %cst_49 = arith.constant 1.000000e+00 : f32
    %197 = vector.broadcast %cst_49 : f32 to vector<8x128xf32>
    %198 = arith.addf %197, %196 : vector<8x128xf32>
    %199 = arith.divf %197, %198 : vector<8x128xf32>
    %200 = vector.extract_strided_slice %182 {offsets = [0, 256], sizes = [8, 128], strides = [1, 1]} : vector<8x384xf32> to vector<8x128xf32>
    %201 = vector.extract_strided_slice %183 {offsets = [0, 256], sizes = [8, 128], strides = [1, 1]} : vector<8x384xf32> to vector<8x128xf32>
    %202 = vector.broadcast %11 : vector<1x128xf32> to vector<8x128xf32>
    %203 = arith.addf %201, %202 : vector<8x128xf32>
    %204 = arith.mulf %191, %203 : vector<8x128xf32>
    %205 = arith.addf %200, %204 : vector<8x128xf32>
    %206 = math.tanh %205 : vector<8x128xf32>
    %207 = arith.subf %176, %206 : vector<8x128xf32>
    %208 = arith.mulf %199, %207 : vector<8x128xf32>
    %209 = arith.addf %206, %208 : vector<8x128xf32>
    %210 = arith.index_cast %180 : i32 to index
    %c0_50 = arith.constant 0 : index
    %211 = vector.load %arg15[%210, %c0_50] : memref<64x128xf32, #tpu.memory_space<vmem>>, vector<8x128xf32>
    tpu.vector_store %arg15[%210, %c0_50], %209 {strides = array<i32>} : memref<64x128xf32, #tpu.memory_space<vmem>>, vector<8x128xf32>,
    %c6_i32 = arith.constant 6 : i32
    %c8_i32_51 = arith.constant 8 : i32
    %212 = arith.muli %c6_i32, %c8_i32_51 : i32
    %213 = tpu.assume_multiple %212, 8 : i32
    %214 = arith.index_cast %213 : i32 to index
    %c0_52 = arith.constant 0 : index
    %215 = vector.load %arg13[%214, %c0_52] : memref<64x384xf32, #tpu.memory_space<vmem>>, vector<8x384xf32>
    %cst_53 = arith.constant dense<0.000000e+00> : vector<8x384xf32>
    %216 = tpu.matmul %209, %10, %cst_53 {dimension_numbers = #tpu.dot_dimension_numbers<[1], [0], [0], [1], [0, 0, 1, 1], [], []>} : vector<8x128xf32>, vector<128x384xf32>, vector<8x384xf32> -> vector<8x384xf32>
    %217 = vector.extract_strided_slice %215 {offsets = [0, 0], sizes = [8, 128], strides = [1, 1]} : vector<8x384xf32> to vector<8x128xf32>
    %218 = vector.extract_strided_slice %216 {offsets = [0, 0], sizes = [8, 128], strides = [1, 1]} : vector<8x384xf32> to vector<8x128xf32>
    %219 = arith.addf %217, %218 : vector<8x128xf32>
    %220 = arith.negf %219 : vector<8x128xf32>
    %221 = math.exp %220 : vector<8x128xf32>
    %cst_54 = arith.constant 1.000000e+00 : f32
    %222 = vector.broadcast %cst_54 : f32 to vector<8x128xf32>
    %223 = arith.addf %222, %221 : vector<8x128xf32>
    %224 = arith.divf %222, %223 : vector<8x128xf32>
    %225 = vector.extract_strided_slice %215 {offsets = [0, 128], sizes = [8, 128], strides = [1, 1]} : vector<8x384xf32> to vector<8x128xf32>
    %226 = vector.extract_strided_slice %216 {offsets = [0, 128], sizes = [8, 128], strides = [1, 1]} : vector<8x384xf32> to vector<8x128xf32>
    %227 = arith.addf %225, %226 : vector<8x128xf32>
    %228 = arith.negf %227 : vector<8x128xf32>
    %229 = math.exp %228 : vector<8x128xf32>
    %cst_55 = arith.constant 1.000000e+00 : f32
    %230 = vector.broadcast %cst_55 : f32 to vector<8x128xf32>
    %231 = arith.addf %230, %229 : vector<8x128xf32>
    %232 = arith.divf %230, %231 : vector<8x128xf32>
    %233 = vector.extract_strided_slice %215 {offsets = [0, 256], sizes = [8, 128], strides = [1, 1]} : vector<8x384xf32> to vector<8x128xf32>
    %234 = vector.extract_strided_slice %216 {offsets = [0, 256], sizes = [8, 128], strides = [1, 1]} : vector<8x384xf32> to vector<8x128xf32>
    %235 = vector.broadcast %11 : vector<1x128xf32> to vector<8x128xf32>
    %236 = arith.addf %234, %235 : vector<8x128xf32>
    %237 = arith.mulf %224, %236 : vector<8x128xf32>
    %238 = arith.addf %233, %237 : vector<8x128xf32>
    %239 = math.tanh %238 : vector<8x128xf32>
    %240 = arith.subf %209, %239 : vector<8x128xf32>
    %241 = arith.mulf %232, %240 : vector<8x128xf32>
    %242 = arith.addf %239, %241 : vector<8x128xf32>
    %243 = arith.index_cast %213 : i32 to index
    %c0_56 = arith.constant 0 : index
    %244 = vector.load %arg15[%243, %c0_56] : memref<64x128xf32, #tpu.memory_space<vmem>>, vector<8x128xf32>
    tpu.vector_store %arg15[%243, %c0_56], %242 {strides = array<i32>} : memref<64x128xf32, #tpu.memory_space<vmem>>, vector<8x128xf32>,
    %c7_i32 = arith.constant 7 : i32
    %c8_i32_57 = arith.constant 8 : i32
    %245 = arith.muli %c7_i32, %c8_i32_57 : i32
    %246 = tpu.assume_multiple %245, 8 : i32
    %247 = arith.index_cast %246 : i32 to index
    %c0_58 = arith.constant 0 : index
    %248 = vector.load %arg13[%247, %c0_58] : memref<64x384xf32, #tpu.memory_space<vmem>>, vector<8x384xf32>
    %cst_59 = arith.constant dense<0.000000e+00> : vector<8x384xf32>
    %249 = tpu.matmul %242, %10, %cst_59 {dimension_numbers = #tpu.dot_dimension_numbers<[1], [0], [0], [1], [0, 0, 1, 1], [], []>} : vector<8x128xf32>, vector<128x384xf32>, vector<8x384xf32> -> vector<8x384xf32>
    %250 = vector.extract_strided_slice %248 {offsets = [0, 0], sizes = [8, 128], strides = [1, 1]} : vector<8x384xf32> to vector<8x128xf32>
    %251 = vector.extract_strided_slice %249 {offsets = [0, 0], sizes = [8, 128], strides = [1, 1]} : vector<8x384xf32> to vector<8x128xf32>
    %252 = arith.addf %250, %251 : vector<8x128xf32>
    %253 = arith.negf %252 : vector<8x128xf32>
    %254 = math.exp %253 : vector<8x128xf32>
    %cst_60 = arith.constant 1.000000e+00 : f32
    %255 = vector.broadcast %cst_60 : f32 to vector<8x128xf32>
    %256 = arith.addf %255, %254 : vector<8x128xf32>
    %257 = arith.divf %255, %256 : vector<8x128xf32>
    %258 = vector.extract_strided_slice %248 {offsets = [0, 128], sizes = [8, 128], strides = [1, 1]} : vector<8x384xf32> to vector<8x128xf32>
    %259 = vector.extract_strided_slice %249 {offsets = [0, 128], sizes = [8, 128], strides = [1, 1]} : vector<8x384xf32> to vector<8x128xf32>
    %260 = arith.addf %258, %259 : vector<8x128xf32>
    %261 = arith.negf %260 : vector<8x128xf32>
    %262 = math.exp %261 : vector<8x128xf32>
    %cst_61 = arith.constant 1.000000e+00 : f32
    %263 = vector.broadcast %cst_61 : f32 to vector<8x128xf32>
    %264 = arith.addf %263, %262 : vector<8x128xf32>
    %265 = arith.divf %263, %264 : vector<8x128xf32>
    %266 = vector.extract_strided_slice %248 {offsets = [0, 256], sizes = [8, 128], strides = [1, 1]} : vector<8x384xf32> to vector<8x128xf32>
    %267 = vector.extract_strided_slice %249 {offsets = [0, 256], sizes = [8, 128], strides = [1, 1]} : vector<8x384xf32> to vector<8x128xf32>
    %268 = vector.broadcast %11 : vector<1x128xf32> to vector<8x128xf32>
    %269 = arith.addf %267, %268 : vector<8x128xf32>
    %270 = arith.mulf %257, %269 : vector<8x128xf32>
    %271 = arith.addf %266, %270 : vector<8x128xf32>
    %272 = math.tanh %271 : vector<8x128xf32>
    %273 = arith.subf %242, %272 : vector<8x128xf32>
    %274 = arith.mulf %265, %273 : vector<8x128xf32>
    %275 = arith.addf %272, %274 : vector<8x128xf32>
    %276 = arith.index_cast %246 : i32 to index
    %c0_62 = arith.constant 0 : index
    %277 = vector.load %arg15[%276, %c0_62] : memref<64x128xf32, #tpu.memory_space<vmem>>, vector<8x128xf32>
    tpu.vector_store %arg15[%276, %c0_62], %275 {strides = array<i32>} : memref<64x128xf32, #tpu.memory_space<vmem>>, vector<8x128xf32>,
    %c8_i32_63 = arith.constant 8 : i32
    %c0_64 = arith.constant 0 : index
    %c0_65 = arith.constant 0 : index
    %c0_66 = arith.constant 0 : index
    %278 = vector.load %arg14[%c0_64, %c0_65, %c0_66] : memref<2x8x128xf32, #tpu.memory_space<vmem>>, vector<1x8x128xf32>
    %279 = vector.shape_cast %278 : vector<1x8x128xf32> to vector<8x128xf32>
    %280 = vector.shape_cast %275 : vector<8x128xf32> to vector<1x8x128xf32>
    tpu.vector_store %arg14[%c0_64, %c0_65, %c0_66], %280 {strides = array<i32>} : memref<2x8x128xf32, #tpu.memory_space<vmem>>, vector<1x8x128xf32>,
    %c0_67 = arith.constant 0 : index
    %c0_68 = arith.constant 0 : index
    %281 = vector.load %arg15[%c0_67, %c0_68] : memref<64x128xf32, #tpu.memory_space<vmem>>, vector<64x128xf32>
    %c0_69 = arith.constant 0 : index
    %c0_70 = arith.constant 0 : index
    %282 = vector.load %arg7[%c0_69, %c0_70] : memref<128x384xf32, #tpu.memory_space<vmem>>, vector<128x384xf32>
    %cst_71 = arith.constant dense<0.000000e+00> : vector<64x384xf32>
    %283 = tpu.matmul %281, %282, %cst_71 {dimension_numbers = #tpu.dot_dimension_numbers<[1], [0], [0], [1], [0, 0, 1, 1], [], []>} : vector<64x128xf32>, vector<128x384xf32>, vector<64x384xf32> -> vector<64x384xf32>
    %c0_72 = arith.constant 0 : index
    %c0_73 = arith.constant 0 : index
    %284 = vector.load %arg9[%c0_72, %c0_73] : memref<1x384xf32, #tpu.memory_space<vmem>>, vector<1x384xf32>
    %285 = vector.broadcast %284 : vector<1x384xf32> to vector<64x384xf32>
    %286 = arith.addf %283, %285 : vector<64x384xf32>
    %c0_74 = arith.constant 0 : index
    %c0_75 = arith.constant 0 : index
    %287 = vector.load %arg13[%c0_74, %c0_75] : memref<64x384xf32, #tpu.memory_space<vmem>>, vector<64x384xf32>
    tpu.vector_store %arg13[%c0_74, %c0_75], %286 {strides = array<i32>} : memref<64x384xf32, #tpu.memory_space<vmem>>, vector<64x384xf32>,
    %c0_76 = arith.constant 0 : index
    %c0_77 = arith.constant 0 : index
    %288 = vector.load %arg8[%c0_76, %c0_77] : memref<128x384xf32, #tpu.memory_space<vmem>>, vector<128x384xf32>
    %c0_78 = arith.constant 0 : index
    %c0_79 = arith.constant 0 : index
    %289 = vector.load %arg10[%c0_78, %c0_79] : memref<1x128xf32, #tpu.memory_space<vmem>>, vector<1x128xf32>
    %c1 = arith.constant 1 : index
    %c0_80 = arith.constant 0 : index
    %c0_81 = arith.constant 0 : index
    %290 = vector.load %arg14[%c1, %c0_80, %c0_81] : memref<2x8x128xf32, #tpu.memory_space<vmem>>, vector<1x8x128xf32>
    %291 = vector.shape_cast %290 : vector<1x8x128xf32> to vector<8x128xf32>
    %c0_i32_82 = arith.constant 0 : i32
    %c8_i32_83 = arith.constant 8 : i32
    %292 = arith.muli %c0_i32_82, %c8_i32_83 : i32
    %293 = tpu.assume_multiple %292, 8 : i32
    %294 = arith.index_cast %293 : i32 to index
    %c0_84 = arith.constant 0 : index
    %295 = vector.load %arg13[%294, %c0_84] : memref<64x384xf32, #tpu.memory_space<vmem>>, vector<8x384xf32>
    %cst_85 = arith.constant dense<0.000000e+00> : vector<8x384xf32>
    %296 = tpu.matmul %291, %288, %cst_85 {dimension_numbers = #tpu.dot_dimension_numbers<[1], [0], [0], [1], [0, 0, 1, 1], [], []>} : vector<8x128xf32>, vector<128x384xf32>, vector<8x384xf32> -> vector<8x384xf32>
    %297 = vector.extract_strided_slice %295 {offsets = [0, 0], sizes = [8, 128], strides = [1, 1]} : vector<8x384xf32> to vector<8x128xf32>
    %298 = vector.extract_strided_slice %296 {offsets = [0, 0], sizes = [8, 128], strides = [1, 1]} : vector<8x384xf32> to vector<8x128xf32>
    %299 = arith.addf %297, %298 : vector<8x128xf32>
    %300 = arith.negf %299 : vector<8x128xf32>
    %301 = math.exp %300 : vector<8x128xf32>
    %cst_86 = arith.constant 1.000000e+00 : f32
    %302 = vector.broadcast %cst_86 : f32 to vector<8x128xf32>
    %303 = arith.addf %302, %301 : vector<8x128xf32>
    %304 = arith.divf %302, %303 : vector<8x128xf32>
    %305 = vector.extract_strided_slice %295 {offsets = [0, 128], sizes = [8, 128], strides = [1, 1]} : vector<8x384xf32> to vector<8x128xf32>
    %306 = vector.extract_strided_slice %296 {offsets = [0, 128], sizes = [8, 128], strides = [1, 1]} : vector<8x384xf32> to vector<8x128xf32>
    %307 = arith.addf %305, %306 : vector<8x128xf32>
    %308 = arith.negf %307 : vector<8x128xf32>
    %309 = math.exp %308 : vector<8x128xf32>
    %cst_87 = arith.constant 1.000000e+00 : f32
    %310 = vector.broadcast %cst_87 : f32 to vector<8x128xf32>
    %311 = arith.addf %310, %309 : vector<8x128xf32>
    %312 = arith.divf %310, %311 : vector<8x128xf32>
    %313 = vector.extract_strided_slice %295 {offsets = [0, 256], sizes = [8, 128], strides = [1, 1]} : vector<8x384xf32> to vector<8x128xf32>
    %314 = vector.extract_strided_slice %296 {offsets = [0, 256], sizes = [8, 128], strides = [1, 1]} : vector<8x384xf32> to vector<8x128xf32>
    %315 = vector.broadcast %289 : vector<1x128xf32> to vector<8x128xf32>
    %316 = arith.addf %314, %315 : vector<8x128xf32>
    %317 = arith.mulf %304, %316 : vector<8x128xf32>
    %318 = arith.addf %313, %317 : vector<8x128xf32>
    %319 = math.tanh %318 : vector<8x128xf32>
    %320 = arith.subf %291, %319 : vector<8x128xf32>
    %321 = arith.mulf %312, %320 : vector<8x128xf32>
    %322 = arith.addf %319, %321 : vector<8x128xf32>
    %323 = arith.index_cast %293 : i32 to index
    %c0_88 = arith.constant 0 : index
    %324 = vector.load %arg11[%323, %c0_88] : memref<64x128xf32, #tpu.memory_space<vmem>>, vector<8x128xf32>
    tpu.vector_store %arg11[%323, %c0_88], %322 {strides = array<i32>} : memref<64x128xf32, #tpu.memory_space<vmem>>, vector<8x128xf32>,
    %c1_i32_89 = arith.constant 1 : i32
    %c8_i32_90 = arith.constant 8 : i32
    %325 = arith.muli %c1_i32_89, %c8_i32_90 : i32
    %326 = tpu.assume_multiple %325, 8 : i32
    %327 = arith.index_cast %326 : i32 to index
    %c0_91 = arith.constant 0 : index
    %328 = vector.load %arg13[%327, %c0_91] : memref<64x384xf32, #tpu.memory_space<vmem>>, vector<8x384xf32>
    %cst_92 = arith.constant dense<0.000000e+00> : vector<8x384xf32>
    %329 = tpu.matmul %322, %288, %cst_92 {dimension_numbers = #tpu.dot_dimension_numbers<[1], [0], [0], [1], [0, 0, 1, 1], [], []>} : vector<8x128xf32>, vector<128x384xf32>, vector<8x384xf32> -> vector<8x384xf32>
    %330 = vector.extract_strided_slice %328 {offsets = [0, 0], sizes = [8, 128], strides = [1, 1]} : vector<8x384xf32> to vector<8x128xf32>
    %331 = vector.extract_strided_slice %329 {offsets = [0, 0], sizes = [8, 128], strides = [1, 1]} : vector<8x384xf32> to vector<8x128xf32>
    %332 = arith.addf %330, %331 : vector<8x128xf32>
    %333 = arith.negf %332 : vector<8x128xf32>
    %334 = math.exp %333 : vector<8x128xf32>
    %cst_93 = arith.constant 1.000000e+00 : f32
    %335 = vector.broadcast %cst_93 : f32 to vector<8x128xf32>
    %336 = arith.addf %335, %334 : vector<8x128xf32>
    %337 = arith.divf %335, %336 : vector<8x128xf32>
    %338 = vector.extract_strided_slice %328 {offsets = [0, 128], sizes = [8, 128], strides = [1, 1]} : vector<8x384xf32> to vector<8x128xf32>
    %339 = vector.extract_strided_slice %329 {offsets = [0, 128], sizes = [8, 128], strides = [1, 1]} : vector<8x384xf32> to vector<8x128xf32>
    %340 = arith.addf %338, %339 : vector<8x128xf32>
    %341 = arith.negf %340 : vector<8x128xf32>
    %342 = math.exp %341 : vector<8x128xf32>
    %cst_94 = arith.constant 1.000000e+00 : f32
    %343 = vector.broadcast %cst_94 : f32 to vector<8x128xf32>
    %344 = arith.addf %343, %342 : vector<8x128xf32>
    %345 = arith.divf %343, %344 : vector<8x128xf32>
    %346 = vector.extract_strided_slice %328 {offsets = [0, 256], sizes = [8, 128], strides = [1, 1]} : vector<8x384xf32> to vector<8x128xf32>
    %347 = vector.extract_strided_slice %329 {offsets = [0, 256], sizes = [8, 128], strides = [1, 1]} : vector<8x384xf32> to vector<8x128xf32>
    %348 = vector.broadcast %289 : vector<1x128xf32> to vector<8x128xf32>
    %349 = arith.addf %347, %348 : vector<8x128xf32>
    %350 = arith.mulf %337, %349 : vector<8x128xf32>
    %351 = arith.addf %346, %350 : vector<8x128xf32>
    %352 = math.tanh %351 : vector<8x128xf32>
    %353 = arith.subf %322, %352 : vector<8x128xf32>
    %354 = arith.mulf %345, %353 : vector<8x128xf32>
    %355 = arith.addf %352, %354 : vector<8x128xf32>
    %356 = arith.index_cast %326 : i32 to index
    %c0_95 = arith.constant 0 : index
    %357 = vector.load %arg11[%356, %c0_95] : memref<64x128xf32, #tpu.memory_space<vmem>>, vector<8x128xf32>
    tpu.vector_store %arg11[%356, %c0_95], %355 {strides = array<i32>} : memref<64x128xf32, #tpu.memory_space<vmem>>, vector<8x128xf32>,
    %c2_i32_96 = arith.constant 2 : i32
    %c8_i32_97 = arith.constant 8 : i32
    %358 = arith.muli %c2_i32_96, %c8_i32_97 : i32
    %359 = tpu.assume_multiple %358, 8 : i32
    %360 = arith.index_cast %359 : i32 to index
    %c0_98 = arith.constant 0 : index
    %361 = vector.load %arg13[%360, %c0_98] : memref<64x384xf32, #tpu.memory_space<vmem>>, vector<8x384xf32>
    %cst_99 = arith.constant dense<0.000000e+00> : vector<8x384xf32>
    %362 = tpu.matmul %355, %288, %cst_99 {dimension_numbers = #tpu.dot_dimension_numbers<[1], [0], [0], [1], [0, 0, 1, 1], [], []>} : vector<8x128xf32>, vector<128x384xf32>, vector<8x384xf32> -> vector<8x384xf32>
    %363 = vector.extract_strided_slice %361 {offsets = [0, 0], sizes = [8, 128], strides = [1, 1]} : vector<8x384xf32> to vector<8x128xf32>
    %364 = vector.extract_strided_slice %362 {offsets = [0, 0], sizes = [8, 128], strides = [1, 1]} : vector<8x384xf32> to vector<8x128xf32>
    %365 = arith.addf %363, %364 : vector<8x128xf32>
    %366 = arith.negf %365 : vector<8x128xf32>
    %367 = math.exp %366 : vector<8x128xf32>
    %cst_100 = arith.constant 1.000000e+00 : f32
    %368 = vector.broadcast %cst_100 : f32 to vector<8x128xf32>
    %369 = arith.addf %368, %367 : vector<8x128xf32>
    %370 = arith.divf %368, %369 : vector<8x128xf32>
    %371 = vector.extract_strided_slice %361 {offsets = [0, 128], sizes = [8, 128], strides = [1, 1]} : vector<8x384xf32> to vector<8x128xf32>
    %372 = vector.extract_strided_slice %362 {offsets = [0, 128], sizes = [8, 128], strides = [1, 1]} : vector<8x384xf32> to vector<8x128xf32>
    %373 = arith.addf %371, %372 : vector<8x128xf32>
    %374 = arith.negf %373 : vector<8x128xf32>
    %375 = math.exp %374 : vector<8x128xf32>
    %cst_101 = arith.constant 1.000000e+00 : f32
    %376 = vector.broadcast %cst_101 : f32 to vector<8x128xf32>
    %377 = arith.addf %376, %375 : vector<8x128xf32>
    %378 = arith.divf %376, %377 : vector<8x128xf32>
    %379 = vector.extract_strided_slice %361 {offsets = [0, 256], sizes = [8, 128], strides = [1, 1]} : vector<8x384xf32> to vector<8x128xf32>
    %380 = vector.extract_strided_slice %362 {offsets = [0, 256], sizes = [8, 128], strides = [1, 1]} : vector<8x384xf32> to vector<8x128xf32>
    %381 = vector.broadcast %289 : vector<1x128xf32> to vector<8x128xf32>
    %382 = arith.addf %380, %381 : vector<8x128xf32>
    %383 = arith.mulf %370, %382 : vector<8x128xf32>
    %384 = arith.addf %379, %383 : vector<8x128xf32>
    %385 = math.tanh %384 : vector<8x128xf32>
    %386 = arith.subf %355, %385 : vector<8x128xf32>
    %387 = arith.mulf %378, %386 : vector<8x128xf32>
    %388 = arith.addf %385, %387 : vector<8x128xf32>
    %389 = arith.index_cast %359 : i32 to index
    %c0_102 = arith.constant 0 : index
    %390 = vector.load %arg11[%389, %c0_102] : memref<64x128xf32, #tpu.memory_space<vmem>>, vector<8x128xf32>
    tpu.vector_store %arg11[%389, %c0_102], %388 {strides = array<i32>} : memref<64x128xf32, #tpu.memory_space<vmem>>, vector<8x128xf32>,
    %c3_i32_103 = arith.constant 3 : i32
    %c8_i32_104 = arith.constant 8 : i32
    %391 = arith.muli %c3_i32_103, %c8_i32_104 : i32
    %392 = tpu.assume_multiple %391, 8 : i32
    %393 = arith.index_cast %392 : i32 to index
    %c0_105 = arith.constant 0 : index
    %394 = vector.load %arg13[%393, %c0_105] : memref<64x384xf32, #tpu.memory_space<vmem>>, vector<8x384xf32>
    %cst_106 = arith.constant dense<0.000000e+00> : vector<8x384xf32>
    %395 = tpu.matmul %388, %288, %cst_106 {dimension_numbers = #tpu.dot_dimension_numbers<[1], [0], [0], [1], [0, 0, 1, 1], [], []>} : vector<8x128xf32>, vector<128x384xf32>, vector<8x384xf32> -> vector<8x384xf32>
    %396 = vector.extract_strided_slice %394 {offsets = [0, 0], sizes = [8, 128], strides = [1, 1]} : vector<8x384xf32> to vector<8x128xf32>
    %397 = vector.extract_strided_slice %395 {offsets = [0, 0], sizes = [8, 128], strides = [1, 1]} : vector<8x384xf32> to vector<8x128xf32>
    %398 = arith.addf %396, %397 : vector<8x128xf32>
    %399 = arith.negf %398 : vector<8x128xf32>
    %400 = math.exp %399 : vector<8x128xf32>
    %cst_107 = arith.constant 1.000000e+00 : f32
    %401 = vector.broadcast %cst_107 : f32 to vector<8x128xf32>
    %402 = arith.addf %401, %400 : vector<8x128xf32>
    %403 = arith.divf %401, %402 : vector<8x128xf32>
    %404 = vector.extract_strided_slice %394 {offsets = [0, 128], sizes = [8, 128], strides = [1, 1]} : vector<8x384xf32> to vector<8x128xf32>
    %405 = vector.extract_strided_slice %395 {offsets = [0, 128], sizes = [8, 128], strides = [1, 1]} : vector<8x384xf32> to vector<8x128xf32>
    %406 = arith.addf %404, %405 : vector<8x128xf32>
    %407 = arith.negf %406 : vector<8x128xf32>
    %408 = math.exp %407 : vector<8x128xf32>
    %cst_108 = arith.constant 1.000000e+00 : f32
    %409 = vector.broadcast %cst_108 : f32 to vector<8x128xf32>
    %410 = arith.addf %409, %408 : vector<8x128xf32>
    %411 = arith.divf %409, %410 : vector<8x128xf32>
    %412 = vector.extract_strided_slice %394 {offsets = [0, 256], sizes = [8, 128], strides = [1, 1]} : vector<8x384xf32> to vector<8x128xf32>
    %413 = vector.extract_strided_slice %395 {offsets = [0, 256], sizes = [8, 128], strides = [1, 1]} : vector<8x384xf32> to vector<8x128xf32>
    %414 = vector.broadcast %289 : vector<1x128xf32> to vector<8x128xf32>
    %415 = arith.addf %413, %414 : vector<8x128xf32>
    %416 = arith.mulf %403, %415 : vector<8x128xf32>
    %417 = arith.addf %412, %416 : vector<8x128xf32>
    %418 = math.tanh %417 : vector<8x128xf32>
    %419 = arith.subf %388, %418 : vector<8x128xf32>
    %420 = arith.mulf %411, %419 : vector<8x128xf32>
    %421 = arith.addf %418, %420 : vector<8x128xf32>
    %422 = arith.index_cast %392 : i32 to index
    %c0_109 = arith.constant 0 : index
    %423 = vector.load %arg11[%422, %c0_109] : memref<64x128xf32, #tpu.memory_space<vmem>>, vector<8x128xf32>
    tpu.vector_store %arg11[%422, %c0_109], %421 {strides = array<i32>} : memref<64x128xf32, #tpu.memory_space<vmem>>, vector<8x128xf32>,
    %c4_i32_110 = arith.constant 4 : i32
    %c8_i32_111 = arith.constant 8 : i32
    %424 = arith.muli %c4_i32_110, %c8_i32_111 : i32
    %425 = tpu.assume_multiple %424, 8 : i32
    %426 = arith.index_cast %425 : i32 to index
    %c0_112 = arith.constant 0 : index
    %427 = vector.load %arg13[%426, %c0_112] : memref<64x384xf32, #tpu.memory_space<vmem>>, vector<8x384xf32>
    %cst_113 = arith.constant dense<0.000000e+00> : vector<8x384xf32>
    %428 = tpu.matmul %421, %288, %cst_113 {dimension_numbers = #tpu.dot_dimension_numbers<[1], [0], [0], [1], [0, 0, 1, 1], [], []>} : vector<8x128xf32>, vector<128x384xf32>, vector<8x384xf32> -> vector<8x384xf32>
    %429 = vector.extract_strided_slice %427 {offsets = [0, 0], sizes = [8, 128], strides = [1, 1]} : vector<8x384xf32> to vector<8x128xf32>
    %430 = vector.extract_strided_slice %428 {offsets = [0, 0], sizes = [8, 128], strides = [1, 1]} : vector<8x384xf32> to vector<8x128xf32>
    %431 = arith.addf %429, %430 : vector<8x128xf32>
    %432 = arith.negf %431 : vector<8x128xf32>
    %433 = math.exp %432 : vector<8x128xf32>
    %cst_114 = arith.constant 1.000000e+00 : f32
    %434 = vector.broadcast %cst_114 : f32 to vector<8x128xf32>
    %435 = arith.addf %434, %433 : vector<8x128xf32>
    %436 = arith.divf %434, %435 : vector<8x128xf32>
    %437 = vector.extract_strided_slice %427 {offsets = [0, 128], sizes = [8, 128], strides = [1, 1]} : vector<8x384xf32> to vector<8x128xf32>
    %438 = vector.extract_strided_slice %428 {offsets = [0, 128], sizes = [8, 128], strides = [1, 1]} : vector<8x384xf32> to vector<8x128xf32>
    %439 = arith.addf %437, %438 : vector<8x128xf32>
    %440 = arith.negf %439 : vector<8x128xf32>
    %441 = math.exp %440 : vector<8x128xf32>
    %cst_115 = arith.constant 1.000000e+00 : f32
    %442 = vector.broadcast %cst_115 : f32 to vector<8x128xf32>
    %443 = arith.addf %442, %441 : vector<8x128xf32>
    %444 = arith.divf %442, %443 : vector<8x128xf32>
    %445 = vector.extract_strided_slice %427 {offsets = [0, 256], sizes = [8, 128], strides = [1, 1]} : vector<8x384xf32> to vector<8x128xf32>
    %446 = vector.extract_strided_slice %428 {offsets = [0, 256], sizes = [8, 128], strides = [1, 1]} : vector<8x384xf32> to vector<8x128xf32>
    %447 = vector.broadcast %289 : vector<1x128xf32> to vector<8x128xf32>
    %448 = arith.addf %446, %447 : vector<8x128xf32>
    %449 = arith.mulf %436, %448 : vector<8x128xf32>
    %450 = arith.addf %445, %449 : vector<8x128xf32>
    %451 = math.tanh %450 : vector<8x128xf32>
    %452 = arith.subf %421, %451 : vector<8x128xf32>
    %453 = arith.mulf %444, %452 : vector<8x128xf32>
    %454 = arith.addf %451, %453 : vector<8x128xf32>
    %455 = arith.index_cast %425 : i32 to index
    %c0_116 = arith.constant 0 : index
    %456 = vector.load %arg11[%455, %c0_116] : memref<64x128xf32, #tpu.memory_space<vmem>>, vector<8x128xf32>
    tpu.vector_store %arg11[%455, %c0_116], %454 {strides = array<i32>} : memref<64x128xf32, #tpu.memory_space<vmem>>, vector<8x128xf32>,
    %c5_i32_117 = arith.constant 5 : i32
    %c8_i32_118 = arith.constant 8 : i32
    %457 = arith.muli %c5_i32_117, %c8_i32_118 : i32
    %458 = tpu.assume_multiple %457, 8 : i32
    %459 = arith.index_cast %458 : i32 to index
    %c0_119 = arith.constant 0 : index
    %460 = vector.load %arg13[%459, %c0_119] : memref<64x384xf32, #tpu.memory_space<vmem>>, vector<8x384xf32>
    %cst_120 = arith.constant dense<0.000000e+00> : vector<8x384xf32>
    %461 = tpu.matmul %454, %288, %cst_120 {dimension_numbers = #tpu.dot_dimension_numbers<[1], [0], [0], [1], [0, 0, 1, 1], [], []>} : vector<8x128xf32>, vector<128x384xf32>, vector<8x384xf32> -> vector<8x384xf32>
    %462 = vector.extract_strided_slice %460 {offsets = [0, 0], sizes = [8, 128], strides = [1, 1]} : vector<8x384xf32> to vector<8x128xf32>
    %463 = vector.extract_strided_slice %461 {offsets = [0, 0], sizes = [8, 128], strides = [1, 1]} : vector<8x384xf32> to vector<8x128xf32>
    %464 = arith.addf %462, %463 : vector<8x128xf32>
    %465 = arith.negf %464 : vector<8x128xf32>
    %466 = math.exp %465 : vector<8x128xf32>
    %cst_121 = arith.constant 1.000000e+00 : f32
    %467 = vector.broadcast %cst_121 : f32 to vector<8x128xf32>
    %468 = arith.addf %467, %466 : vector<8x128xf32>
    %469 = arith.divf %467, %468 : vector<8x128xf32>
    %470 = vector.extract_strided_slice %460 {offsets = [0, 128], sizes = [8, 128], strides = [1, 1]} : vector<8x384xf32> to vector<8x128xf32>
    %471 = vector.extract_strided_slice %461 {offsets = [0, 128], sizes = [8, 128], strides = [1, 1]} : vector<8x384xf32> to vector<8x128xf32>
    %472 = arith.addf %470, %471 : vector<8x128xf32>
    %473 = arith.negf %472 : vector<8x128xf32>
    %474 = math.exp %473 : vector<8x128xf32>
    %cst_122 = arith.constant 1.000000e+00 : f32
    %475 = vector.broadcast %cst_122 : f32 to vector<8x128xf32>
    %476 = arith.addf %475, %474 : vector<8x128xf32>
    %477 = arith.divf %475, %476 : vector<8x128xf32>
    %478 = vector.extract_strided_slice %460 {offsets = [0, 256], sizes = [8, 128], strides = [1, 1]} : vector<8x384xf32> to vector<8x128xf32>
    %479 = vector.extract_strided_slice %461 {offsets = [0, 256], sizes = [8, 128], strides = [1, 1]} : vector<8x384xf32> to vector<8x128xf32>
    %480 = vector.broadcast %289 : vector<1x128xf32> to vector<8x128xf32>
    %481 = arith.addf %479, %480 : vector<8x128xf32>
    %482 = arith.mulf %469, %481 : vector<8x128xf32>
    %483 = arith.addf %478, %482 : vector<8x128xf32>
    %484 = math.tanh %483 : vector<8x128xf32>
    %485 = arith.subf %454, %484 : vector<8x128xf32>
    %486 = arith.mulf %477, %485 : vector<8x128xf32>
    %487 = arith.addf %484, %486 : vector<8x128xf32>
    %488 = arith.index_cast %458 : i32 to index
    %c0_123 = arith.constant 0 : index
    %489 = vector.load %arg11[%488, %c0_123] : memref<64x128xf32, #tpu.memory_space<vmem>>, vector<8x128xf32>
    tpu.vector_store %arg11[%488, %c0_123], %487 {strides = array<i32>} : memref<64x128xf32, #tpu.memory_space<vmem>>, vector<8x128xf32>,
    %c6_i32_124 = arith.constant 6 : i32
    %c8_i32_125 = arith.constant 8 : i32
    %490 = arith.muli %c6_i32_124, %c8_i32_125 : i32
    %491 = tpu.assume_multiple %490, 8 : i32
    %492 = arith.index_cast %491 : i32 to index
    %c0_126 = arith.constant 0 : index
    %493 = vector.load %arg13[%492, %c0_126] : memref<64x384xf32, #tpu.memory_space<vmem>>, vector<8x384xf32>
    %cst_127 = arith.constant dense<0.000000e+00> : vector<8x384xf32>
    %494 = tpu.matmul %487, %288, %cst_127 {dimension_numbers = #tpu.dot_dimension_numbers<[1], [0], [0], [1], [0, 0, 1, 1], [], []>} : vector<8x128xf32>, vector<128x384xf32>, vector<8x384xf32> -> vector<8x384xf32>
    %495 = vector.extract_strided_slice %493 {offsets = [0, 0], sizes = [8, 128], strides = [1, 1]} : vector<8x384xf32> to vector<8x128xf32>
    %496 = vector.extract_strided_slice %494 {offsets = [0, 0], sizes = [8, 128], strides = [1, 1]} : vector<8x384xf32> to vector<8x128xf32>
    %497 = arith.addf %495, %496 : vector<8x128xf32>
    %498 = arith.negf %497 : vector<8x128xf32>
    %499 = math.exp %498 : vector<8x128xf32>
    %cst_128 = arith.constant 1.000000e+00 : f32
    %500 = vector.broadcast %cst_128 : f32 to vector<8x128xf32>
    %501 = arith.addf %500, %499 : vector<8x128xf32>
    %502 = arith.divf %500, %501 : vector<8x128xf32>
    %503 = vector.extract_strided_slice %493 {offsets = [0, 128], sizes = [8, 128], strides = [1, 1]} : vector<8x384xf32> to vector<8x128xf32>
    %504 = vector.extract_strided_slice %494 {offsets = [0, 128], sizes = [8, 128], strides = [1, 1]} : vector<8x384xf32> to vector<8x128xf32>
    %505 = arith.addf %503, %504 : vector<8x128xf32>
    %506 = arith.negf %505 : vector<8x128xf32>
    %507 = math.exp %506 : vector<8x128xf32>
    %cst_129 = arith.constant 1.000000e+00 : f32
    %508 = vector.broadcast %cst_129 : f32 to vector<8x128xf32>
    %509 = arith.addf %508, %507 : vector<8x128xf32>
    %510 = arith.divf %508, %509 : vector<8x128xf32>
    %511 = vector.extract_strided_slice %493 {offsets = [0, 256], sizes = [8, 128], strides = [1, 1]} : vector<8x384xf32> to vector<8x128xf32>
    %512 = vector.extract_strided_slice %494 {offsets = [0, 256], sizes = [8, 128], strides = [1, 1]} : vector<8x384xf32> to vector<8x128xf32>
    %513 = vector.broadcast %289 : vector<1x128xf32> to vector<8x128xf32>
    %514 = arith.addf %512, %513 : vector<8x128xf32>
    %515 = arith.mulf %502, %514 : vector<8x128xf32>
    %516 = arith.addf %511, %515 : vector<8x128xf32>
    %517 = math.tanh %516 : vector<8x128xf32>
    %518 = arith.subf %487, %517 : vector<8x128xf32>
    %519 = arith.mulf %510, %518 : vector<8x128xf32>
    %520 = arith.addf %517, %519 : vector<8x128xf32>
    %521 = arith.index_cast %491 : i32 to index
    %c0_130 = arith.constant 0 : index
    %522 = vector.load %arg11[%521, %c0_130] : memref<64x128xf32, #tpu.memory_space<vmem>>, vector<8x128xf32>
    tpu.vector_store %arg11[%521, %c0_130], %520 {strides = array<i32>} : memref<64x128xf32, #tpu.memory_space<vmem>>, vector<8x128xf32>,
    %c7_i32_131 = arith.constant 7 : i32
    %c8_i32_132 = arith.constant 8 : i32
    %523 = arith.muli %c7_i32_131, %c8_i32_132 : i32
    %524 = tpu.assume_multiple %523, 8 : i32
    %525 = arith.index_cast %524 : i32 to index
    %c0_133 = arith.constant 0 : index
    %526 = vector.load %arg13[%525, %c0_133] : memref<64x384xf32, #tpu.memory_space<vmem>>, vector<8x384xf32>
    %cst_134 = arith.constant dense<0.000000e+00> : vector<8x384xf32>
    %527 = tpu.matmul %520, %288, %cst_134 {dimension_numbers = #tpu.dot_dimension_numbers<[1], [0], [0], [1], [0, 0, 1, 1], [], []>} : vector<8x128xf32>, vector<128x384xf32>, vector<8x384xf32> -> vector<8x384xf32>
    %528 = vector.extract_strided_slice %526 {offsets = [0, 0], sizes = [8, 128], strides = [1, 1]} : vector<8x384xf32> to vector<8x128xf32>
    %529 = vector.extract_strided_slice %527 {offsets = [0, 0], sizes = [8, 128], strides = [1, 1]} : vector<8x384xf32> to vector<8x128xf32>
    %530 = arith.addf %528, %529 : vector<8x128xf32>
    %531 = arith.negf %530 : vector<8x128xf32>
    %532 = math.exp %531 : vector<8x128xf32>
    %cst_135 = arith.constant 1.000000e+00 : f32
    %533 = vector.broadcast %cst_135 : f32 to vector<8x128xf32>
    %534 = arith.addf %533, %532 : vector<8x128xf32>
    %535 = arith.divf %533, %534 : vector<8x128xf32>
    %536 = vector.extract_strided_slice %526 {offsets = [0, 128], sizes = [8, 128], strides = [1, 1]} : vector<8x384xf32> to vector<8x128xf32>
    %537 = vector.extract_strided_slice %527 {offsets = [0, 128], sizes = [8, 128], strides = [1, 1]} : vector<8x384xf32> to vector<8x128xf32>
    %538 = arith.addf %536, %537 : vector<8x128xf32>
    %539 = arith.negf %538 : vector<8x128xf32>
    %540 = math.exp %539 : vector<8x128xf32>
    %cst_136 = arith.constant 1.000000e+00 : f32
    %541 = vector.broadcast %cst_136 : f32 to vector<8x128xf32>
    %542 = arith.addf %541, %540 : vector<8x128xf32>
    %543 = arith.divf %541, %542 : vector<8x128xf32>
    %544 = vector.extract_strided_slice %526 {offsets = [0, 256], sizes = [8, 128], strides = [1, 1]} : vector<8x384xf32> to vector<8x128xf32>
    %545 = vector.extract_strided_slice %527 {offsets = [0, 256], sizes = [8, 128], strides = [1, 1]} : vector<8x384xf32> to vector<8x128xf32>
    %546 = vector.broadcast %289 : vector<1x128xf32> to vector<8x128xf32>
    %547 = arith.addf %545, %546 : vector<8x128xf32>
    %548 = arith.mulf %535, %547 : vector<8x128xf32>
    %549 = arith.addf %544, %548 : vector<8x128xf32>
    %550 = math.tanh %549 : vector<8x128xf32>
    %551 = arith.subf %520, %550 : vector<8x128xf32>
    %552 = arith.mulf %543, %551 : vector<8x128xf32>
    %553 = arith.addf %550, %552 : vector<8x128xf32>
    %554 = arith.index_cast %524 : i32 to index
    %c0_137 = arith.constant 0 : index
    %555 = vector.load %arg11[%554, %c0_137] : memref<64x128xf32, #tpu.memory_space<vmem>>, vector<8x128xf32>
    tpu.vector_store %arg11[%554, %c0_137], %553 {strides = array<i32>} : memref<64x128xf32, #tpu.memory_space<vmem>>, vector<8x128xf32>,
    %c8_i32_138 = arith.constant 8 : i32
    %c1_139 = arith.constant 1 : index
    %c0_140 = arith.constant 0 : index
    %c0_141 = arith.constant 0 : index
    %556 = vector.load %arg14[%c1_139, %c0_140, %c0_141] : memref<2x8x128xf32, #tpu.memory_space<vmem>>, vector<1x8x128xf32>
    %557 = vector.shape_cast %556 : vector<1x8x128xf32> to vector<8x128xf32>
    %558 = vector.shape_cast %553 : vector<8x128xf32> to vector<1x8x128xf32>
    tpu.vector_store %arg14[%c1_139, %c0_140, %c0_141], %558 {strides = array<i32>} : memref<2x8x128xf32, #tpu.memory_space<vmem>>, vector<1x8x128xf32>,
    %c0_i32_142 = arith.constant 0 : i32
    %559 = arith.cmpi eq, %arg0, %c0_i32_142 : i32
    %560 = arith.extui %559 : i1 to i32
    %c0_i32_143 = arith.constant 0 : i32
    %561 = arith.cmpi ne, %560, %c0_i32_143 : i32
    scf.if %561 {
      %c0_144 = arith.constant 0 : index
      %c0_145 = arith.constant 0 : index
      %c0_146 = arith.constant 0 : index
      %562 = vector.load %arg14[%c0_144, %c0_145, %c0_146] : memref<2x8x128xf32, #tpu.memory_space<vmem>>, vector<2x8x128xf32>
      %c0_147 = arith.constant 0 : index
      %c0_148 = arith.constant 0 : index
      %c0_149 = arith.constant 0 : index
      %563 = vector.load %arg12[%c0_147, %c0_148, %c0_149] : memref<2x8x128xf32, #tpu.memory_space<vmem>>, vector<2x8x128xf32>
      tpu.vector_store %arg12[%c0_147, %c0_148, %c0_149], %562 {strides = array<i32>} : memref<2x8x128xf32, #tpu.memory_space<vmem>>, vector<2x8x128xf32>,
    } else {
    }
    return
  }
  func.func @transform_0(%arg0: i32) -> (i32, i32) {
    %c0_i32 = arith.constant 0 : i32
    %c0_i32_0 = arith.constant 0 : i32
    return %arg0, %c0_i32 : i32, i32
  }
  func.func @transform_1(%arg0: i32) -> (i32, i32, i32) {
    %c0_i32 = arith.constant 0 : i32
    %c0_i32_0 = arith.constant 0 : i32
    %c0_i32_1 = arith.constant 0 : i32
    %c0_i32_2 = arith.constant 0 : i32
    return %c0_i32, %c0_i32_0, %c0_i32_1 : i32, i32, i32
  }
  func.func @transform_2(%arg0: i32) -> (i32, i32) {
    %c0_i32 = arith.constant 0 : i32
    %c0_i32_0 = arith.constant 0 : i32
    %c0_i32_1 = arith.constant 0 : i32
    return %c0_i32, %c0_i32_0 : i32, i32
  }
  func.func @transform_3(%arg0: i32) -> (i32, i32) {
    %c0_i32 = arith.constant 0 : i32
    %c0_i32_0 = arith.constant 0 : i32
    %c0_i32_1 = arith.constant 0 : i32
    return %c0_i32, %c0_i32_0 : i32, i32
  }
  func.func @transform_4(%arg0: i32) -> (i32, i32) {
    %c0_i32 = arith.constant 0 : i32
    %c0_i32_0 = arith.constant 0 : i32
    %c0_i32_1 = arith.constant 0 : i32
    return %c0_i32, %c0_i32_0 : i32, i32
  }
  func.func @transform_5(%arg0: i32) -> (i32, i32) {
    %c0_i32 = arith.constant 0 : i32
    %c0_i32_0 = arith.constant 0 : i32
    %c0_i32_1 = arith.constant 0 : i32
    return %c0_i32, %c0_i32_0 : i32, i32
  }
  func.func @transform_6(%arg0: i32) -> (i32, i32) {
    %c0_i32 = arith.constant 0 : i32
    %c0_i32_0 = arith.constant 0 : i32
    %c0_i32_1 = arith.constant 0 : i32
    return %c0_i32, %c0_i32_0 : i32, i32
  }
  func.func @transform_7(%arg0: i32) -> (i32, i32) {
    %c0_i32 = arith.constant 0 : i32
    %c0_i32_0 = arith.constant 0 : i32
    %c0_i32_1 = arith.constant 0 : i32
    return %c0_i32, %c0_i32_0 : i32, i32
  }
  func.func @transform_8(%arg0: i32) -> (i32, i32) {
    %c0_i32 = arith.constant 0 : i32
    %c0_i32_0 = arith.constant 0 : i32
    %c0_i32_1 = arith.constant 0 : i32
    return %c0_i32, %c0_i32_0 : i32, i32
  }
  func.func @transform_9(%arg0: i32) -> (i32, i32) {
    %c0_i32 = arith.constant 0 : i32
    %c0_i32_0 = arith.constant 0 : i32
    %c0_i32_1 = arith.constant 0 : i32
    return %c0_i32, %c0_i32_0 : i32, i32
  }
  func.func @transform_10(%arg0: i32) -> (i32, i32) {
    %c0_i32 = arith.constant 0 : i32
    %c0_i32_0 = arith.constant 0 : i32
    return %arg0, %c0_i32 : i32, i32
  }
  func.func @transform_11(%arg0: i32) -> (i32, i32, i32) {
    %c0_i32 = arith.constant 0 : i32
    %c0_i32_0 = arith.constant 0 : i32
    %c0_i32_1 = arith.constant 0 : i32
    %c0_i32_2 = arith.constant 0 : i32
    return %c0_i32, %c0_i32_0, %c0_i32_1 : i32, i32, i32
  }
}

</mosaic_0001>

<llo_original>
// kernel: grouped_gru_forward.1
$region0: #{grouped_gru_forward.1}
  #allocation0 [shape = 'u32[]', space=smem, size = 0x4, offset = 0x4, fixed_abs, tag = 'smem constant byte address 0x4 - core index']
  #allocation1 [shape = 'u32[144,128]{1,0:T(1,128)}', space=vmem, size = 0x12000, scoped, tag = 'internal scratch']
  #allocation2 [shape = 'f32[64,384]{1,0:T(8,128)}', space=vmem, size = 0x18000, scoped, tag = 'scratch operand']
  #allocation3 [shape = 'f32[2,8,128]{2,1,0:T(8,128)}', space=vmem, size = 0x2000, scoped, tag = 'scratch operand']
  #allocation4 [shape = 'f32[64,128]{1,0:T(8,128)}', space=vmem, size = 0x8000, scoped, tag = 'scratch operand']
  %s0 = inlined_call_operand.vmem [shape: f32[64,32], index: 0, kind: input, shape index: {}]
  %s1 = inlined_call_operand.vmem [shape: f32[2,8,128], index: 1, kind: input, shape index: {}]
  %s2 = inlined_call_operand.vmem [shape: f32[32,384], index: 2, kind: input, shape index: {}]
  %s3 = inlined_call_operand.vmem [shape: f32[128,384], index: 3, kind: input, shape index: {}]
  %s4 = inlined_call_operand.vmem [shape: f32[1,384], index: 4, kind: input, shape index: {}]
  %s5 = inlined_call_operand.vmem [shape: f32[1,128], index: 5, kind: input, shape index: {}]
  %s6 = inlined_call_operand.vmem [shape: f32[128,384], index: 6, kind: input, shape index: {}]
  %s7 = inlined_call_operand.vmem [shape: f32[128,384], index: 7, kind: input, shape index: {}]
  %s8 = inlined_call_operand.vmem [shape: f32[1,384], index: 8, kind: input, shape index: {}]
  %s9 = inlined_call_operand.vmem [shape: f32[1,128], index: 9, kind: input, shape index: {}]
  %s10 = inlined_call_operand.vmem [shape: f32[64,128], index: 10, kind: output, shape index: {0}]
  %s11 = inlined_call_operand.vmem [shape: f32[2,8,128], index: 11, kind: output, shape index: {1}]
  %12 = xla_tuple %s10, %s11
  %s13 = sld [smem:[#allocation0]]
  $region66: #{grouped_gru_forward.1} parent=0
    _
  %s15 = ssub.s32 1, %s13
  %s16 = scalar_select 0, %s15, %s13
  // Predicated region
  $region2: #{grouped_gru_forward.1} parent=0 // pred_check
    _
  $region3: #{grouped_gru_forward.1} parent=0 // pred_check_branch
    %18 = sbr.rel (0) target = $region5
  $region4: #{grouped_gru_forward.1} parent=0 // pred_region
    _
  $region5: #{grouped_gru_forward.1} parent=0 // pred_fallthru
    _
  // Predicated region
  $region6: #{grouped_gru_forward.1} parent=0 // pred_check
    _
  $region7: #{grouped_gru_forward.1} parent=0 // pred_check_branch
    %20 = sbr.rel (0) target = $region9
  $region8: #{grouped_gru_forward.1} parent=0 // pred_region
    _
  $region9: #{grouped_gru_forward.1} parent=0 // pred_fallthru
    _
  // Predicated region
  $region10: #{grouped_gru_forward.1} parent=0 // pred_check
    _
  $region11: #{grouped_gru_forward.1} parent=0 // pred_check_branch
    %22 = sbr.rel (0) target = $region13
  $region12: #{grouped_gru_forward.1} parent=0 // pred_region
    _
  $region13: #{grouped_gru_forward.1} parent=0 // pred_fallthru
    _
  // Predicated region
  $region14: #{grouped_gru_forward.1} parent=0 // pred_check
    _
  $region15: #{grouped_gru_forward.1} parent=0 // pred_check_branch
    %24 = sbr.rel (0) target = $region17
  $region16: #{grouped_gru_forward.1} parent=0 // pred_region
    _
  $region17: #{grouped_gru_forward.1} parent=0 // pred_fallthru
    _
  // Predicated region
  $region18: #{grouped_gru_forward.1} parent=0 // pred_check
    _
  $region19: #{grouped_gru_forward.1} parent=0 // pred_check_branch
    %26 = sbr.rel (0) target = $region21
  $region20: #{grouped_gru_forward.1} parent=0 // pred_region
    _
  $region21: #{grouped_gru_forward.1} parent=0 // pred_fallthru
    _
  // Predicated region
  $region22: #{grouped_gru_forward.1} parent=0 // pred_check
    _
  $region23: #{grouped_gru_forward.1} parent=0 // pred_check_branch
    %28 = sbr.rel (0) target = $region25
  $region24: #{grouped_gru_forward.1} parent=0 // pred_region
    _
  $region25: #{grouped_gru_forward.1} parent=0 // pred_fallthru
    _
  // Predicated region
  $region26: #{grouped_gru_forward.1} parent=0 // pred_check
    _
  $region27: #{grouped_gru_forward.1} parent=0 // pred_check_branch
    %30 = sbr.rel (0) target = $region29
  $region28: #{grouped_gru_forward.1} parent=0 // pred_region
    _
  $region29: #{grouped_gru_forward.1} parent=0 // pred_fallthru
    _
  // Predicated region
  $region30: #{grouped_gru_forward.1} parent=0 // pred_check
    _
  $region31: #{grouped_gru_forward.1} parent=0 // pred_check_branch
    %32 = sbr.rel (0) target = $region33
  $region32: #{grouped_gru_forward.1} parent=0 // pred_region
    _
  $region33: #{grouped_gru_forward.1} parent=0 // pred_fallthru
    _
  // Predicated region
  $region34: #{grouped_gru_forward.1} parent=0 // pred_check
    _
  $region35: #{grouped_gru_forward.1} parent=0 // pred_check_branch
    %34 = sbr.rel (0) target = $region37
  $region36: #{grouped_gru_forward.1} parent=0 // pred_region
    _
  $region37: #{grouped_gru_forward.1} parent=0 // pred_fallthru
    _
  // Predicated region
  $region38: #{grouped_gru_forward.1} parent=0 // pred_check
    _
  $region39: #{grouped_gru_forward.1} parent=0 // pred_check_branch
    %36 = sbr.rel (0) target = $region41
  $region40: #{grouped_gru_forward.1} parent=0 // pred_region
    _
  $region41: #{grouped_gru_forward.1} parent=0 // pred_fallthru
    _
  %p37 = scmp.eq.s32.totalorder 0, 0
  // Predicated region
  $region42: #{grouped_gru_forward.1} parent=0 // pred_check
    %p38 = pneg %p37
  $region43: #{grouped_gru_forward.1} parent=0 // pred_check_branch
    %40 = sbr.rel (%p38) target = $region45
  $region44: #{grouped_gru_forward.1} parent=0 // pred_region
    %v41 = vld [vmem:[%s1] sm:$0xff]
    %v42 = vld [vmem:[%s1 + $0x8] sm:$0xff]
    %43 = vst [vmem:[#allocation3] sm:$0xff] %v41
    %44 = vst [vmem:[#allocation3 + $0x8] sm:$0xff] %v42
  $region45: #{grouped_gru_forward.1} parent=0 // pred_fallthru
    _
  %v45 = vld [vmem:[%s0] sm:$0xff]
  %v46 = vld [vmem:[%s0 + $0x8] sm:$0xff]
  %v47 = vld [vmem:[%s0 + $0x10] sm:$0xff]
  %v48 = vld [vmem:[%s0 + $0x18] sm:$0xff]
  %v49 = vld [vmem:[%s0 + $0x20] sm:$0xff]
  %v50 = vld [vmem:[%s0 + $0x28] sm:$0xff]
  %v51 = vld [vmem:[%s0 + $0x30] sm:$0xff]
  %v52 = vld [vmem:[%s0 + $0x38] sm:$0xff]
  %v53 = vld [vmem:[%s2] sm:$0xff]
  %v54 = vld [vmem:[%s2 + $0x8] sm:$0xff]
  %v55 = vld [vmem:[%s2 + $0x10] sm:$0xff]
  %v56 = vld [vmem:[%s2 + $0x18] sm:$0xff]
  %v57 = vld [vmem:[%s2 + $0x20] sm:$0xff]
  %v58 = vld [vmem:[%s2 + $0x28] sm:$0xff]
  %v59 = vld [vmem:[%s2 + $0x30] sm:$0xff]
  %v60 = vld [vmem:[%s2 + $0x38] sm:$0xff]
  %v61 = vld [vmem:[%s2 + $0x40] sm:$0xff]
  %v62 = vld [vmem:[%s2 + $0x48] sm:$0xff]
  %v63 = vld [vmem:[%s2 + $0x50] sm:$0xff]
  %v64 = vld [vmem:[%s2 + $0x58] sm:$0xff]
  %v65 = vld [vmem:[%s4] sm:$0x7]
  %v67 = vlaneseq
  %v68 = vshrl.u32 %v67, 7
  %v69 = vsub.s32 0, %v68
  %v70 = vrot.slane %v65, %v69
  %v71 = vlaneseq
  %v72 = vshrl.u32 %v71, 7
  %v73 = vsub.s32 1, %v72
  %v74 = vrot.slane %v65, %v73
  %v75 = vlaneseq
  %v76 = vshrl.u32 %v75, 7
  %v77 = vsub.s32 2, %v76
  %v78 = vrot.slane %v65, %v77
  %vm82 = vcmask 261120
  %v84 = vsel %vm82, %v45, 0
  %v87 = vsel %vm82, %v46, 0
  %v90 = vsel %vm82, %v47, 0
  %v93 = vsel %vm82, %v48, 0
  %v96 = vsel %vm82, %v49, 0
  %v99 = vsel %vm82, %v50, 0
  %v102 = vsel %vm82, %v51, 0
  %v105 = vsel %vm82, %v52, 0
  %107 = vmatprep.subr.mxu0 %v54
  %108 = vmatpush1.msra.mxu0 %v53
  %109 = vmatprep.subr.mxu0 %v57
  %110 = vmatpush1.msra.mxu0 %v56
  %111 = vmatprep.subr.mxu0 %v60
  %112 = vmatpush1.msra.mxu0 %v59
  %113 = vmatprep.subr.mxu0 %v63
  %114 = vmatpush1.msra.mxu0 %v62
  %115 = vmatprep.subr.mxu0 0.0
  %116 = vmatpush1.msra.mxu0 0.0
  %117 = vmatprep.subr.mxu0 0.0
  %118 = vmatpush1.msra.mxu0 0.0
  %119 = vmatprep.subr.mxu0 0.0
  %120 = vmatpush1.msra.mxu0 0.0
  %121 = vmatprep.subr.mxu0 0.0
  %122 = vmatpush1.msra.mxu0 0.0
  %123 = vmatprep.subr.mxu0 0.0
  %124 = vmatpush1.msra.mxu0 0.0
  %125 = vmatprep.subr.mxu0 0.0
  %126 = vmatpush1.msra.mxu0 0.0
  %127 = vmatprep.subr.mxu0 0.0
  %128 = vmatpush1.msra.mxu0 0.0
  %129 = vmatprep.subr.mxu0 0.0
  %130 = vmatpush1.msra.mxu0 0.0
  %131 = vmatprep.subr.mxu0 0.0
  %132 = vmatpush1.msra.mxu0 0.0
  %133 = vmatprep.subr.mxu0 0.0
  %134 = vmatpush1.msra.mxu0 0.0
  %135 = vmatprep.subr.mxu0 0.0
  %136 = vmatpush1.msra.mxu0 0.0
  %137 = vmatprep.subr.mxu0 0.0
  %138 = vmatpush1.msra.mxu0 0.0
  %139 = vmatprep.subr.mxu0 0.0
  %140 = vmatpush1.msra.mxu0 0.0
  %141 = vmatprep.subr.mxu0 0.0
  %142 = vmatpush1.msra.mxu0 0.0
  %143 = vmatprep.subr.mxu0 0.0
  %144 = vmatpush1.msra.mxu0 0.0
  %145 = vmatprep.subr.mxu0 0.0
  %146 = vmatpush1.msra.mxu0 0.0
  %147 = vmatprep.subr.mxu0 0.0
  %148 = vmatpush1.msra.mxu0 0.0
  %149 = vmatprep.subr.mxu0 0.0
  %150 = vmatpush1.msra.mxu0 0.0
  %151 = vmatprep.subr.mxu0 0.0
  %152 = vmatpush1.msra.mxu0 0.0
  %153 = vmatprep.subr.mxu0 0.0
  %154 = vmatpush1.msra.mxu0 0.0
  %155 = vmatprep.subr.mxu0 0.0
  %156 = vmatpush1.msra.mxu0 0.0
  %157 = vmatprep.subr.mxu0 0.0
  %158 = vmatpush1.msra.mxu0 0.0
  %159 = vmatprep.subr.mxu0 0.0
  %160 = vmatpush1.msra.mxu0 0.0
  %161 = vmatprep.subr.mxu0 0.0
  %162 = vmatpush1.msra.mxu0 0.0
  %163 = vmatprep.subr.mxu0 0.0
  %164 = vmatpush1.msra.mxu0 0.0
  %165 = vmatprep.subr.mxu0 0.0
  %166 = vmatpush1.msra.mxu0 0.0
  %167 = vmatprep.subr.mxu0 0.0
  %168 = vmatpush1.msra.mxu0 0.0
  %169 = vmatprep.subr.mxu0 0.0
  %170 = vmatpush1.msra.mxu0 0.0
  %171 = vmatprep.mubr.f32.mxu0 0.0
  %172 = vmatmul.mubr.f32.gmra.mrb[0].mxu0 %v84
  %v173 = vpop.f32.mrb[0].mxu0
  %v174 = vadd.f32 %v70, %v173
  %v175 = vpop.f32.mrb[0].mxu0
  %v176 = vadd.f32 %v74, %v175
  %177 = vmatprep.mubr.f32.mxu0 0.0
  %178 = vmatmul.mubr.f32.gmra.mrb[0].mxu0 %v87
  %v179 = vpop.f32.mrb[0].mxu0
  %v180 = vadd.f32 %v70, %v179
  %v181 = vpop.f32.mrb[0].mxu0
  %v182 = vadd.f32 %v74, %v181
  %183 = vmatprep.mubr.f32.mxu0 0.0
  %184 = vmatmul.mubr.f32.gmra.mrb[0].mxu0 %v90
  %v185 = vpop.f32.mrb[0].mxu0
  %v186 = vadd.f32 %v70, %v185
  %v187 = vpop.f32.mrb[0].mxu0
  %v188 = vadd.f32 %v74, %v187
  %189 = vmatprep.mubr.f32.mxu0 0.0
  %190 = vmatmul.mubr.f32.gmra.mrb[0].mxu0 %v93
  %v191 = vpop.f32.mrb[0].mxu0
  %v192 = vadd.f32 %v70, %v191
  %v193 = vpop.f32.mrb[0].mxu0
  %v194 = vadd.f32 %v74, %v193
  %195 = vmatprep.mubr.f32.mxu0 0.0
  %196 = vmatmul.mubr.f32.gmra.mrb[0].mxu0 %v96
  %v197 = vpop.f32.mrb[0].mxu0
  %v198 = vadd.f32 %v70, %v197
  %v199 = vpop.f32.mrb[0].mxu0
  %v200 = vadd.f32 %v74, %v199
  %201 = vmatprep.mubr.f32.mxu0 0.0
  %202 = vmatmul.mubr.f32.gmra.mrb[0].mxu0 %v99
  %v203 = vpop.f32.mrb[0].mxu0
  %v204 = vadd.f32 %v70, %v203
  %v205 = vpop.f32.mrb[0].mxu0
  %v206 = vadd.f32 %v74, %v205
  %207 = vmatprep.mubr.f32.mxu0 0.0
  %208 = vmatmul.mubr.f32.gmra.mrb[0].mxu0 %v102
  %v209 = vpop.f32.mrb[0].mxu0
  %v210 = vadd.f32 %v70, %v209
  %v211 = vpop.f32.mrb[0].mxu0
  %v212 = vadd.f32 %v74, %v211
  %213 = vmatprep.mubr.f32.mxu0 0.0
  %214 = vmatmul.mubr.f32.gmra.mrb[0].mxu0 %v105
  %v215 = vpop.f32.mrb[0].mxu0
  %v216 = vadd.f32 %v70, %v215
  %v217 = vpop.f32.mrb[0].mxu0
  %v218 = vadd.f32 %v74, %v217
  %219 = vdwg.mxu0
  %220 = vmatprep.subr.mxu0 0.0
  %221 = vmatpush1.msra.mxu0 %v55
  %222 = vmatprep.subr.mxu0 0.0
  %223 = vmatpush1.msra.mxu0 %v58
  %224 = vmatprep.subr.mxu0 0.0
  %225 = vmatpush1.msra.mxu0 %v61
  %226 = vmatprep.subr.mxu0 0.0
  %227 = vmatpush1.msra.mxu0 %v64
  %228 = vmatprep.subr.mxu0 0.0
  %229 = vmatpush1.msra.mxu0 0.0
  %230 = vmatprep.subr.mxu0 0.0
  %231 = vmatpush1.msra.mxu0 0.0
  %232 = vmatprep.subr.mxu0 0.0
  %233 = vmatpush1.msra.mxu0 0.0
  %234 = vmatprep.subr.mxu0 0.0
  %235 = vmatpush1.msra.mxu0 0.0
  %236 = vmatprep.subr.mxu0 0.0
  %237 = vmatpush1.msra.mxu0 0.0
  %238 = vmatprep.subr.mxu0 0.0
  %239 = vmatpush1.msra.mxu0 0.0
  %240 = vmatprep.subr.mxu0 0.0
  %241 = vmatpush1.msra.mxu0 0.0
  %242 = vmatprep.subr.mxu0 0.0
  %243 = vmatpush1.msra.mxu0 0.0
  %244 = vmatprep.subr.mxu0 0.0
  %245 = vmatpush1.msra.mxu0 0.0
  %246 = vmatprep.subr.mxu0 0.0
  %247 = vmatpush1.msra.mxu0 0.0
  %248 = vmatprep.subr.mxu0 0.0
  %249 = vmatpush1.msra.mxu0 0.0
  %250 = vmatprep.subr.mxu0 0.0
  %251 = vmatpush1.msra.mxu0 0.0
  %252 = vmatprep.subr.mxu0 0.0
  %253 = vmatpush1.msra.mxu0 0.0
  %254 = vmatprep.subr.mxu0 0.0
  %255 = vmatpush1.msra.mxu0 0.0
  %256 = vmatprep.subr.mxu0 0.0
  %257 = vmatpush1.msra.mxu0 0.0
  %258 = vmatprep.subr.mxu0 0.0
  %259 = vmatpush1.msra.mxu0 0.0
  %260 = vmatprep.subr.mxu0 0.0
  %261 = vmatpush1.msra.mxu0 0.0
  %262 = vmatprep.subr.mxu0 0.0
  %263 = vmatpush1.msra.mxu0 0.0
  %264 = vmatprep.subr.mxu0 0.0
  %265 = vmatpush1.msra.mxu0 0.0
  %266 = vmatprep.subr.mxu0 0.0
  %267 = vmatpush1.msra.mxu0 0.0
  %268 = vmatprep.subr.mxu0 0.0
  %269 = vmatpush1.msra.mxu0 0.0
  %270 = vmatprep.subr.mxu0 0.0
  %271 = vmatpush1.msra.mxu0 0.0
  %272 = vmatprep.subr.mxu0 0.0
  %273 = vmatpush1.msra.mxu0 0.0
  %274 = vmatprep.subr.mxu0 0.0
  %275 = vmatpush1.msra.mxu0 0.0
  %276 = vmatprep.subr.mxu0 0.0
  %277 = vmatpush1.msra.mxu0 0.0
  %278 = vmatprep.subr.mxu0 0.0
  %279 = vmatpush1.msra.mxu0 0.0
  %280 = vmatprep.subr.mxu0 0.0
  %281 = vmatpush1.msra.mxu0 0.0
  %282 = vmatprep.subr.mxu0 0.0
  %283 = vmatpush1.msra.mxu0 0.0
  %284 = vmatprep.mubr.f32.mxu0 0.0
  %285 = vmatmul.mubr.f32.gmra.mrb[0].mxu0 %v84
  %v286 = vpop.f32.mrb[0].mxu0
  %v287 = vadd.f32 %v78, %v286
  %v288 = vpop.f32.mrb[0].mxu0
  %289 = vmatprep.mubr.f32.mxu0 0.0
  %290 = vmatmul.mubr.f32.gmra.mrb[0].mxu0 %v87
  %v291 = vpop.f32.mrb[0].mxu0
  %v292 = vadd.f32 %v78, %v291
  %v293 = vpop.f32.mrb[0].mxu0
  %294 = vmatprep.mubr.f32.mxu0 0.0
  %295 = vmatmul.mubr.f32.gmra.mrb[0].mxu0 %v90
  %v296 = vpop.f32.mrb[0].mxu0
  %v297 = vadd.f32 %v78, %v296
  %v298 = vpop.f32.mrb[0].mxu0
  %299 = vmatprep.mubr.f32.mxu0 0.0
  %300 = vmatmul.mubr.f32.gmra.mrb[0].mxu0 %v93
  %v301 = vpop.f32.mrb[0].mxu0
  %v302 = vadd.f32 %v78, %v301
  %v303 = vpop.f32.mrb[0].mxu0
  %304 = vmatprep.mubr.f32.mxu0 0.0
  %305 = vmatmul.mubr.f32.gmra.mrb[0].mxu0 %v96
  %v306 = vpop.f32.mrb[0].mxu0
  %v307 = vadd.f32 %v78, %v306
  %v308 = vpop.f32.mrb[0].mxu0
  %309 = vmatprep.mubr.f32.mxu0 0.0
  %310 = vmatmul.mubr.f32.gmra.mrb[0].mxu0 %v99
  %v311 = vpop.f32.mrb[0].mxu0
  %v312 = vadd.f32 %v78, %v311
  %v313 = vpop.f32.mrb[0].mxu0
  %314 = vmatprep.mubr.f32.mxu0 0.0
  %315 = vmatmul.mubr.f32.gmra.mrb[0].mxu0 %v102
  %v316 = vpop.f32.mrb[0].mxu0
  %v317 = vadd.f32 %v78, %v316
  %v318 = vpop.f32.mrb[0].mxu0
  %319 = vmatprep.mubr.f32.mxu0 0.0
  %320 = vmatmul.mubr.f32.gmra.mrb[0].mxu0 %v105
  %v321 = vpop.f32.mrb[0].mxu0
  %v322 = vadd.f32 %v78, %v321
  %v323 = vpop.f32.mrb[0].mxu0
  %324 = vdwg.mxu0
  %325 = vst [vmem:[#allocation2] sm:$0xff] %v174
  %326 = vst [vmem:[#allocation2 + $0x8] sm:$0xff] %v176
  %327 = vst [vmem:[#allocation2 + $0x10] sm:$0xff] %v287
  %328 = vst [vmem:[#allocation2 + $0x18] sm:$0xff] %v180
  %329 = vst [vmem:[#allocation2 + $0x20] sm:$0xff] %v182
  %330 = vst [vmem:[#allocation2 + $0x28] sm:$0xff] %v292
  %331 = vst [vmem:[#allocation2 + $0x30] sm:$0xff] %v186
  %332 = vst [vmem:[#allocation2 + $0x38] sm:$0xff] %v188
  %333 = vst [vmem:[#allocation2 + $0x40] sm:$0xff] %v297
  %334 = vst [vmem:[#allocation2 + $0x48] sm:$0xff] %v192
  %335 = vst [vmem:[#allocation2 + $0x50] sm:$0xff] %v194
  %336 = vst [vmem:[#allocation2 + $0x58] sm:$0xff] %v302
  %337 = vst [vmem:[#allocation2 + $0x60] sm:$0xff] %v198
  %338 = vst [vmem:[#allocation2 + $0x68] sm:$0xff] %v200
  %339 = vst [vmem:[#allocation2 + $0x70] sm:$0xff] %v307
  %340 = vst [vmem:[#allocation2 + $0x78] sm:$0xff] %v204
  %341 = vst [vmem:[#allocation2 + $0x80] sm:$0xff] %v206
  %342 = vst [vmem:[#allocation2 + $0x88] sm:$0xff] %v312
  %343 = vst [vmem:[#allocation2 + $0x90] sm:$0xff] %v210
  %344 = vst [vmem:[#allocation2 + $0x98] sm:$0xff] %v212
  %345 = vst [vmem:[#allocation2 + $0xa0] sm:$0xff] %v317
  %346 = vst [vmem:[#allocation2 + $0xa8] sm:$0xff] %v216
  %347 = vst [vmem:[#allocation2 + $0xb0] sm:$0xff] %v218
  %348 = vst [vmem:[#allocation2 + $0xb8] sm:$0xff] %v322
  %v349 = vld [vmem:[%s3] sm:$0xff]
  %v350 = vld [vmem:[%s3 + $0x8] sm:$0xff]
  %v351 = vld [vmem:[%s3 + $0x10] sm:$0xff]
  %v352 = vld [vmem:[%s3 + $0x18] sm:$0xff]
  %v353 = vld [vmem:[%s3 + $0x20] sm:$0xff]
  %v354 = vld [vmem:[%s3 + $0x28] sm:$0xff]
  %v355 = vld [vmem:[%s3 + $0x30] sm:$0xff]
  %v356 = vld [vmem:[%s3 + $0x38] sm:$0xff]
  %v357 = vld [vmem:[%s3 + $0x40] sm:$0xff]
  %v358 = vld [vmem:[%s3 + $0x48] sm:$0xff]
  %v359 = vld [vmem:[%s3 + $0x50] sm:$0xff]
  %v360 = vld [vmem:[%s3 + $0x58] sm:$0xff]
  %v361 = vld [vmem:[%s3 + $0x60] sm:$0xff]
  %v362 = vld [vmem:[%s3 + $0x68] sm:$0xff]
  %v363 = vld [vmem:[%s3 + $0x70] sm:$0xff]
  %v364 = vld [vmem:[%s3 + $0x78] sm:$0xff]
  %v365 = vld [vmem:[%s3 + $0x80] sm:$0xff]
  %v366 = vld [vmem:[%s3 + $0x88] sm:$0xff]
  %v367 = vld [vmem:[%s3 + $0x90] sm:$0xff]
  %v368 = vld [vmem:[%s3 + $0x98] sm:$0xff]
  %v369 = vld [vmem:[%s3 + $0xa0] sm:$0xff]
  %v370 = vld [vmem:[%s3 + $0xa8] sm:$0xff]
  %v371 = vld [vmem:[%s3 + $0xb0] sm:$0xff]
  %v372 = vld [vmem:[%s3 + $0xb8] sm:$0xff]
  %v373 = vld [vmem:[%s3 + $0xc0] sm:$0xff]
  %v374 = vld [vmem:[%s3 + $0xc8] sm:$0xff]
  %v375 = vld [vmem:[%s3 + $0xd0] sm:$0xff]
  %v376 = vld [vmem:[%s3 + $0xd8] sm:$0xff]
  %v377 = vld [vmem:[%s3 + $0xe0] sm:$0xff]
  %v378 = vld [vmem:[%s3 + $0xe8] sm:$0xff]
  %v379 = vld [vmem:[%s3 + $0xf0] sm:$0xff]
  %v380 = vld [vmem:[%s3 + $0xf8] sm:$0xff]
  %v381 = vld [vmem:[%s3 + $0x100] sm:$0xff]
  %v382 = vld [vmem:[%s3 + $0x108] sm:$0xff]
  %v383 = vld [vmem:[%s3 + $0x110] sm:$0xff]
  %v384 = vld [vmem:[%s3 + $0x118] sm:$0xff]
  %v385 = vld [vmem:[%s3 + $0x120] sm:$0xff]
  %v386 = vld [vmem:[%s3 + $0x128] sm:$0xff]
  %v387 = vld [vmem:[%s3 + $0x130] sm:$0xff]
  %v388 = vld [vmem:[%s3 + $0x138] sm:$0xff]
  %v389 = vld [vmem:[%s3 + $0x140] sm:$0xff]
  %v390 = vld [vmem:[%s3 + $0x148] sm:$0xff]
  %v391 = vld [vmem:[%s3 + $0x150] sm:$0xff]
  %v392 = vld [vmem:[%s3 + $0x158] sm:$0xff]
  %v393 = vld [vmem:[%s3 + $0x160] sm:$0xff]
  %v394 = vld [vmem:[%s3 + $0x168] sm:$0xff]
  %v395 = vld [vmem:[%s3 + $0x170] sm:$0xff]
  %v396 = vld [vmem:[%s3 + $0x178] sm:$0xff]
  %v397 = vld [vmem:[%s5] sm:$0x1]
  %v398 = vld [vmem:[#allocation3] sm:$0xff]
  %s399 = smul.u32 0, 3
  %s400 = smul.addr %s399, 8
  %s401 = scalar_lea.vmem [#allocation2], %s400
  %v402 = vld [vmem:[%s401] sm:$0xff]
  %v403 = vld [vmem:[%s401 + $0x8] sm:$0xff]
  %v404 = vld [vmem:[%s401 + $0x10] sm:$0xff]
  %405 = vmatprep.subr.mxu0 %v350
  %406 = vmatpush1.msra.mxu0 %v349
  %407 = vmatprep.subr.mxu0 %v353
  %408 = vmatpush1.msra.mxu0 %v352
  %409 = vmatprep.subr.mxu0 %v356
  %410 = vmatpush1.msra.mxu0 %v355
  %411 = vmatprep.subr.mxu0 %v359
  %412 = vmatpush1.msra.mxu0 %v358
  %413 = vmatprep.subr.mxu0 %v362
  %414 = vmatpush1.msra.mxu0 %v361
  %415 = vmatprep.subr.mxu0 %v365
  %416 = vmatpush1.msra.mxu0 %v364
  %417 = vmatprep.subr.mxu0 %v368
  %418 = vmatpush1.msra.mxu0 %v367
  %419 = vmatprep.subr.mxu0 %v371
  %420 = vmatpush1.msra.mxu0 %v370
  %421 = vmatprep.subr.mxu0 %v374
  %422 = vmatpush1.msra.mxu0 %v373
  %423 = vmatprep.subr.mxu0 %v377
  %424 = vmatpush1.msra.mxu0 %v376
  %425 = vmatprep.subr.mxu0 %v380
  %426 = vmatpush1.msra.mxu0 %v379
  %427 = vmatprep.subr.mxu0 %v383
  %428 = vmatpush1.msra.mxu0 %v382
  %429 = vmatprep.subr.mxu0 %v386
  %430 = vmatpush1.msra.mxu0 %v385
  %431 = vmatprep.subr.mxu0 %v389
  %432 = vmatpush1.msra.mxu0 %v388
  %433 = vmatprep.subr.mxu0 %v392
  %434 = vmatpush1.msra.mxu0 %v391
  %435 = vmatprep.subr.mxu0 %v395
  %436 = vmatpush1.msra.mxu0 %v394
  %437 = vmatprep.subr.mxu0 0.0
  %438 = vmatpush1.msra.mxu0 0.0
  %439 = vmatprep.subr.mxu0 0.0
  %440 = vmatpush1.msra.mxu0 0.0
  %441 = vmatprep.subr.mxu0 0.0
  %442 = vmatpush1.msra.mxu0 0.0
  %443 = vmatprep.subr.mxu0 0.0
  %444 = vmatpush1.msra.mxu0 0.0
  %445 = vmatprep.subr.mxu0 0.0
  %446 = vmatpush1.msra.mxu0 0.0
  %447 = vmatprep.subr.mxu0 0.0
  %448 = vmatpush1.msra.mxu0 0.0
  %449 = vmatprep.subr.mxu0 0.0
  %450 = vmatpush1.msra.mxu0 0.0
  %451 = vmatprep.subr.mxu0 0.0
  %452 = vmatpush1.msra.mxu0 0.0
  %453 = vmatprep.subr.mxu0 0.0
  %454 = vmatpush1.msra.mxu0 0.0
  %455 = vmatprep.subr.mxu0 0.0
  %456 = vmatpush1.msra.mxu0 0.0
  %457 = vmatprep.subr.mxu0 0.0
  %458 = vmatpush1.msra.mxu0 0.0
  %459 = vmatprep.subr.mxu0 0.0
  %460 = vmatpush1.msra.mxu0 0.0
  %461 = vmatprep.subr.mxu0 0.0
  %462 = vmatpush1.msra.mxu0 0.0
  %463 = vmatprep.subr.mxu0 0.0
  %464 = vmatpush1.msra.mxu0 0.0
  %465 = vmatprep.subr.mxu0 0.0
  %466 = vmatpush1.msra.mxu0 0.0
  %467 = vmatprep.subr.mxu0 0.0
  %468 = vmatpush1.msra.mxu0 0.0
  %469 = vmatprep.mubr.f32.mxu0 0.0
  %470 = vmatmul.mubr.f32.gmra.mrb[0].mxu0 %v398
  %v471 = vpop.f32.mrb[0].mxu0
  %v472 = vadd.f32 0.0, %v471
  %v473 = vpop.f32.mrb[0].mxu0
  %v474 = vadd.f32 0.0, %v473
  %475 = vdwg.mxu0
  %476 = vmatprep.subr.mxu0 0.0
  %477 = vmatpush1.msra.mxu0 %v351
  %478 = vmatprep.subr.mxu0 0.0
  %479 = vmatpush1.msra.mxu0 %v354
  %480 = vmatprep.subr.mxu0 0.0
  %481 = vmatpush1.msra.mxu0 %v357
  %482 = vmatprep.subr.mxu0 0.0
  %483 = vmatpush1.msra.mxu0 %v360
  %484 = vmatprep.subr.mxu0 0.0
  %485 = vmatpush1.msra.mxu0 %v363
  %486 = vmatprep.subr.mxu0 0.0
  %487 = vmatpush1.msra.mxu0 %v366
  %488 = vmatprep.subr.mxu0 0.0
  %489 = vmatpush1.msra.mxu0 %v369
  %490 = vmatprep.subr.mxu0 0.0
  %491 = vmatpush1.msra.mxu0 %v372
  %492 = vmatprep.subr.mxu0 0.0
  %493 = vmatpush1.msra.mxu0 %v375
  %494 = vmatprep.subr.mxu0 0.0
  %495 = vmatpush1.msra.mxu0 %v378
  %496 = vmatprep.subr.mxu0 0.0
  %497 = vmatpush1.msra.mxu0 %v381
  %498 = vmatprep.subr.mxu0 0.0
  %499 = vmatpush1.msra.mxu0 %v384
  %500 = vmatprep.subr.mxu0 0.0
  %501 = vmatpush1.msra.mxu0 %v387
  %502 = vmatprep.subr.mxu0 0.0
  %503 = vmatpush1.msra.mxu0 %v390
  %504 = vmatprep.subr.mxu0 0.0
  %505 = vmatpush1.msra.mxu0 %v393
  %506 = vmatprep.subr.mxu0 0.0
  %507 = vmatpush1.msra.mxu0 %v396
  %508 = vmatprep.subr.mxu0 0.0
  %509 = vmatpush1.msra.mxu0 0.0
  %510 = vmatprep.subr.mxu0 0.0
  %511 = vmatpush1.msra.mxu0 0.0
  %512 = vmatprep.subr.mxu0 0.0
  %513 = vmatpush1.msra.mxu0 0.0
  %514 = vmatprep.subr.mxu0 0.0
  %515 = vmatpush1.msra.mxu0 0.0
  %516 = vmatprep.subr.mxu0 0.0
  %517 = vmatpush1.msra.mxu0 0.0
  %518 = vmatprep.subr.mxu0 0.0
  %519 = vmatpush1.msra.mxu0 0.0
  %520 = vmatprep.subr.mxu0 0.0
  %521 = vmatpush1.msra.mxu0 0.0
  %522 = vmatprep.subr.mxu0 0.0
  %523 = vmatpush1.msra.mxu0 0.0
  %524 = vmatprep.subr.mxu0 0.0
  %525 = vmatpush1.msra.mxu0 0.0
  %526 = vmatprep.subr.mxu0 0.0
  %527 = vmatpush1.msra.mxu0 0.0
  %528 = vmatprep.subr.mxu0 0.0
  %529 = vmatpush1.msra.mxu0 0.0
  %530 = vmatprep.subr.mxu0 0.0
  %531 = vmatpush1.msra.mxu0 0.0
  %532 = vmatprep.subr.mxu0 0.0
  %533 = vmatpush1.msra.mxu0 0.0
  %534 = vmatprep.subr.mxu0 0.0
  %535 = vmatpush1.msra.mxu0 0.0
  %536 = vmatprep.subr.mxu0 0.0
  %537 = vmatpush1.msra.mxu0 0.0
  %538 = vmatprep.subr.mxu0 0.0
  %539 = vmatpush1.msra.mxu0 0.0
  %540 = vmatprep.mubr.f32.mxu0 0.0
  %541 = vmatmul.mubr.f32.gmra.mrb[0].mxu0 %v398
  %v542 = vpop.f32.mrb[0].mxu0
  %v543 = vadd.f32 0.0, %v542
  %v544 = vpop.f32.mrb[0].mxu0
  %545 = vdwg.mxu0
  %v546 = vadd.f32 %v402, %v472
  %v547 = vxor.u32 %v546, 2147483648
  %v548 = vmul.f32 %v547, 1.442695
  %v549 = vpow.pop %v548
  %v550 = vadd.f32 %v549, 1.0
  %v551 = vrcp.pop %v550
  %v552 = vmul.f32 1.0, %v551
  %v553 = vadd.f32 %v403, %v474
  %v554 = vxor.u32 %v553, 2147483648
  %v555 = vmul.f32 %v554, 1.442695
  %v556 = vpow.pop %v555
  %v557 = vadd.f32 %v556, 1.0
  %v558 = vrcp.pop %v557
  %v559 = vmul.f32 1.0, %v558
  %v561 = vlaneseq
  %v562 = vshrl.u32 %v561, 7
  %v563 = vsub.s32 0, %v562
  %v564 = vrot.slane %v397, %v563
  %v566 = vadd.f32 %v543, %v564
  %v567 = vmul.f32 %v552, %v566
  %v568 = vadd.f32 %v404, %v567
  %v569 = vtanh.pop %v568
  %v570 = vsub.f32 %v398, %v569
  %v571 = vmul.f32 %v559, %v570
  %v572 = vadd.f32 %v569, %v571
  %573 = vst [vmem:[#allocation4] sm:$0xff] %v572
  %s574 = smul.u32 1, 3
  %s575 = smul.addr %s574, 8
  %s576 = scalar_lea.vmem [#allocation2], %s575
  %v577 = vld [vmem:[%s576] sm:$0xff]
  %v578 = vld [vmem:[%s576 + $0x8] sm:$0xff]
  %v579 = vld [vmem:[%s576 + $0x10] sm:$0xff]
  %580 = vmatprep.subr.mxu0 %v350
  %581 = vmatpush1.msra.mxu0 %v349
  %582 = vmatprep.subr.mxu0 %v353
  %583 = vmatpush1.msra.mxu0 %v352
  %584 = vmatprep.subr.mxu0 %v356
  %585 = vmatpush1.msra.mxu0 %v355
  %586 = vmatprep.subr.mxu0 %v359
  %587 = vmatpush1.msra.mxu0 %v358
  %588 = vmatprep.subr.mxu0 %v362
  %589 = vmatpush1.msra.mxu0 %v361
  %590 = vmatprep.subr.mxu0 %v365
  %591 = vmatpush1.msra.mxu0 %v364
  %592 = vmatprep.subr.mxu0 %v368
  %593 = vmatpush1.msra.mxu0 %v367
  %594 = vmatprep.subr.mxu0 %v371
  %595 = vmatpush1.msra.mxu0 %v370
  %596 = vmatprep.subr.mxu0 %v374
  %597 = vmatpush1.msra.mxu0 %v373
  %598 = vmatprep.subr.mxu0 %v377
  %599 = vmatpush1.msra.mxu0 %v376
  %600 = vmatprep.subr.mxu0 %v380
  %601 = vmatpush1.msra.mxu0 %v379
  %602 = vmatprep.subr.mxu0 %v383
  %603 = vmatpush1.msra.mxu0 %v382
  %604 = vmatprep.subr.mxu0 %v386
  %605 = vmatpush1.msra.mxu0 %v385
  %606 = vmatprep.subr.mxu0 %v389
  %607 = vmatpush1.msra.mxu0 %v388
  %608 = vmatprep.subr.mxu0 %v392
  %609 = vmatpush1.msra.mxu0 %v391
  %610 = vmatprep.subr.mxu0 %v395
  %611 = vmatpush1.msra.mxu0 %v394
  %612 = vmatprep.subr.mxu0 0.0
  %613 = vmatpush1.msra.mxu0 0.0
  %614 = vmatprep.subr.mxu0 0.0
  %615 = vmatpush1.msra.mxu0 0.0
  %616 = vmatprep.subr.mxu0 0.0
  %617 = vmatpush1.msra.mxu0 0.0
  %618 = vmatprep.subr.mxu0 0.0
  %619 = vmatpush1.msra.mxu0 0.0
  %620 = vmatprep.subr.mxu0 0.0
  %621 = vmatpush1.msra.mxu0 0.0
  %622 = vmatprep.subr.mxu0 0.0
  %623 = vmatpush1.msra.mxu0 0.0
  %624 = vmatprep.subr.mxu0 0.0
  %625 = vmatpush1.msra.mxu0 0.0
  %626 = vmatprep.subr.mxu0 0.0
  %627 = vmatpush1.msra.mxu0 0.0
  %628 = vmatprep.subr.mxu0 0.0
  %629 = vmatpush1.msra.mxu0 0.0
  %630 = vmatprep.subr.mxu0 0.0
  %631 = vmatpush1.msra.mxu0 0.0
  %632 = vmatprep.subr.mxu0 0.0
  %633 = vmatpush1.msra.mxu0 0.0
  %634 = vmatprep.subr.mxu0 0.0
  %635 = vmatpush1.msra.mxu0 0.0
  %636 = vmatprep.subr.mxu0 0.0
  %637 = vmatpush1.msra.mxu0 0.0
  %638 = vmatprep.subr.mxu0 0.0
  %639 = vmatpush1.msra.mxu0 0.0
  %640 = vmatprep.subr.mxu0 0.0
  %641 = vmatpush1.msra.mxu0 0.0
  %642 = vmatprep.subr.mxu0 0.0
  %643 = vmatpush1.msra.mxu0 0.0
  %644 = vmatprep.mubr.f32.mxu0 0.0
  %645 = vmatmul.mubr.f32.gmra.mrb[0].mxu0 %v572
  %v646 = vpop.f32.mrb[0].mxu0
  %v647 = vadd.f32 0.0, %v646
  %v648 = vpop.f32.mrb[0].mxu0
  %v649 = vadd.f32 0.0, %v648
  %650 = vdwg.mxu0
  %651 = vmatprep.subr.mxu0 0.0
  %652 = vmatpush1.msra.mxu0 %v351
  %653 = vmatprep.subr.mxu0 0.0
  %654 = vmatpush1.msra.mxu0 %v354
  %655 = vmatprep.subr.mxu0 0.0
  %656 = vmatpush1.msra.mxu0 %v357
  %657 = vmatprep.subr.mxu0 0.0
  %658 = vmatpush1.msra.mxu0 %v360
  %659 = vmatprep.subr.mxu0 0.0
  %660 = vmatpush1.msra.mxu0 %v363
  %661 = vmatprep.subr.mxu0 0.0
  %662 = vmatpush1.msra.mxu0 %v366
  %663 = vmatprep.subr.mxu0 0.0
  %664 = vmatpush1.msra.mxu0 %v369
  %665 = vmatprep.subr.mxu0 0.0
  %666 = vmatpush1.msra.mxu0 %v372
  %667 = vmatprep.subr.mxu0 0.0
  %668 = vmatpush1.msra.mxu0 %v375
  %669 = vmatprep.subr.mxu0 0.0
  %670 = vmatpush1.msra.mxu0 %v378
  %671 = vmatprep.subr.mxu0 0.0
  %672 = vmatpush1.msra.mxu0 %v381
  %673 = vmatprep.subr.mxu0 0.0
  %674 = vmatpush1.msra.mxu0 %v384
  %675 = vmatprep.subr.mxu0 0.0
  %676 = vmatpush1.msra.mxu0 %v387
  %677 = vmatprep.subr.mxu0 0.0
  %678 = vmatpush1.msra.mxu0 %v390
  %679 = vmatprep.subr.mxu0 0.0
  %680 = vmatpush1.msra.mxu0 %v393
  %681 = vmatprep.subr.mxu0 0.0
  %682 = vmatpush1.msra.mxu0 %v396
  %683 = vmatprep.subr.mxu0 0.0
  %684 = vmatpush1.msra.mxu0 0.0
  %685 = vmatprep.subr.mxu0 0.0
  %686 = vmatpush1.msra.mxu0 0.0
  %687 = vmatprep.subr.mxu0 0.0
  %688 = vmatpush1.msra.mxu0 0.0
  %689 = vmatprep.subr.mxu0 0.0
  %690 = vmatpush1.msra.mxu0 0.0
  %691 = vmatprep.subr.mxu0 0.0
  %692 = vmatpush1.msra.mxu0 0.0
  %693 = vmatprep.subr.mxu0 0.0
  %694 = vmatpush1.msra.mxu0 0.0
  %695 = vmatprep.subr.mxu0 0.0
  %696 = vmatpush1.msra.mxu0 0.0
  %697 = vmatprep.subr.mxu0 0.0
  %698 = vmatpush1.msra.mxu0 0.0
  %699 = vmatprep.subr.mxu0 0.0
  %700 = vmatpush1.msra.mxu0 0.0
  %701 = vmatprep.subr.mxu0 0.0
  %702 = vmatpush1.msra.mxu0 0.0
  %703 = vmatprep.subr.mxu0 0.0
  %704 = vmatpush1.msra.mxu0 0.0
  %705 = vmatprep.subr.mxu0 0.0
  %706 = vmatpush1.msra.mxu0 0.0
  %707 = vmatprep.subr.mxu0 0.0
  %708 = vmatpush1.msra.mxu0 0.0
  %709 = vmatprep.subr.mxu0 0.0
  %710 = vmatpush1.msra.mxu0 0.0
  %711 = vmatprep.subr.mxu0 0.0
  %712 = vmatpush1.msra.mxu0 0.0
  %713 = vmatprep.subr.mxu0 0.0
  %714 = vmatpush1.msra.mxu0 0.0
  %715 = vmatprep.mubr.f32.mxu0 0.0
  %716 = vmatmul.mubr.f32.gmra.mrb[0].mxu0 %v572
  %v717 = vpop.f32.mrb[0].mxu0
  %v718 = vadd.f32 0.0, %v717
  %v719 = vpop.f32.mrb[0].mxu0
  %720 = vdwg.mxu0
  %v721 = vadd.f32 %v577, %v647
  %v722 = vxor.u32 %v721, 2147483648
  %v723 = vmul.f32 %v722, 1.442695
  %v724 = vpow.pop %v723
  %v725 = vadd.f32 %v724, 1.0
  %v726 = vrcp.pop %v725
  %v727 = vmul.f32 1.0, %v726
  %v728 = vadd.f32 %v578, %v649
  %v729 = vxor.u32 %v728, 2147483648
  %v730 = vmul.f32 %v729, 1.442695
  %v731 = vpow.pop %v730
  %v732 = vadd.f32 %v731, 1.0
  %v733 = vrcp.pop %v732
  %v734 = vmul.f32 1.0, %v733
  %v735 = vadd.f32 %v718, %v564
  %v736 = vmul.f32 %v727, %v735
  %v737 = vadd.f32 %v579, %v736
  %v738 = vtanh.pop %v737
  %v739 = vsub.f32 %v572, %v738
  %v740 = vmul.f32 %v734, %v739
  %v741 = vadd.f32 %v738, %v740
  %s742 = scalar_lea.vmem [#allocation4], 8
  %743 = vst [vmem:[%s742] sm:$0xff] %v741
  %s744 = smul.u32 2, 3
  %s745 = smul.addr %s744, 8
  %s746 = scalar_lea.vmem [#allocation2], %s745
  %v747 = vld [vmem:[%s746] sm:$0xff]
  %v748 = vld [vmem:[%s746 + $0x8] sm:$0xff]
  %v749 = vld [vmem:[%s746 + $0x10] sm:$0xff]
  %750 = vmatprep.subr.mxu0 %v350
  %751 = vmatpush1.msra.mxu0 %v349
  %752 = vmatprep.subr.mxu0 %v353
  %753 = vmatpush1.msra.mxu0 %v352
  %754 = vmatprep.subr.mxu0 %v356
  %755 = vmatpush1.msra.mxu0 %v355
  %756 = vmatprep.subr.mxu0 %v359
  %757 = vmatpush1.msra.mxu0 %v358
  %758 = vmatprep.subr.mxu0 %v362
  %759 = vmatpush1.msra.mxu0 %v361
  %760 = vmatprep.subr.mxu0 %v365
  %761 = vmatpush1.msra.mxu0 %v364
  %762 = vmatprep.subr.mxu0 %v368
  %763 = vmatpush1.msra.mxu0 %v367
  %764 = vmatprep.subr.mxu0 %v371
  %765 = vmatpush1.msra.mxu0 %v370
  %766 = vmatprep.subr.mxu0 %v374
  %767 = vmatpush1.msra.mxu0 %v373
  %768 = vmatprep.subr.mxu0 %v377
  %769 = vmatpush1.msra.mxu0 %v376
  %770 = vmatprep.subr.mxu0 %v380
  %771 = vmatpush1.msra.mxu0 %v379
  %772 = vmatprep.subr.mxu0 %v383
  %773 = vmatpush1.msra.mxu0 %v382
  %774 = vmatprep.subr.mxu0 %v386
  %775 = vmatpush1.msra.mxu0 %v385
  %776 = vmatprep.subr.mxu0 %v389
  %777 = vmatpush1.msra.mxu0 %v388
  %778 = vmatprep.subr.mxu0 %v392
  %779 = vmatpush1.msra.mxu0 %v391
  %780 = vmatprep.subr.mxu0 %v395
  %781 = vmatpush1.msra.mxu0 %v394
  %782 = vmatprep.subr.mxu0 0.0
  %783 = vmatpush1.msra.mxu0 0.0
  %784 = vmatprep.subr.mxu0 0.0
  %785 = vmatpush1.msra.mxu0 0.0
  %786 = vmatprep.subr.mxu0 0.0
  %787 = vmatpush1.msra.mxu0 0.0
  %788 = vmatprep.subr.mxu0 0.0
  %789 = vmatpush1.msra.mxu0 0.0
  %790 = vmatprep.subr.mxu0 0.0
  %791 = vmatpush1.msra.mxu0 0.0
  %792 = vmatprep.subr.mxu0 0.0
  %793 = vmatpush1.msra.mxu0 0.0
  %794 = vmatprep.subr.mxu0 0.0
  %795 = vmatpush1.msra.mxu0 0.0
  %796 = vmatprep.subr.mxu0 0.0
  %797 = vmatpush1.msra.mxu0 0.0
  %798 = vmatprep.subr.mxu0 0.0
  %799 = vmatpush1.msra.mxu0 0.0
  %800 = vmatprep.subr.mxu0 0.0
  %801 = vmatpush1.msra.mxu0 0.0
  %802 = vmatprep.subr.mxu0 0.0
  %803 = vmatpush1.msra.mxu0 0.0
  %804 = vmatprep.subr.mxu0 0.0
  %805 = vmatpush1.msra.mxu0 0.0
  %806 = vmatprep.subr.mxu0 0.0
  %807 = vmatpush1.msra.mxu0 0.0
  %808 = vmatprep.subr.mxu0 0.0
  %809 = vmatpush1.msra.mxu0 0.0
  %810 = vmatprep.subr.mxu0 0.0
  %811 = vmatpush1.msra.mxu0 0.0
  %812 = vmatprep.subr.mxu0 0.0
  %813 = vmatpush1.msra.mxu0 0.0
  %814 = vmatprep.mubr.f32.mxu0 0.0
  %815 = vmatmul.mubr.f32.gmra.mrb[0].mxu0 %v741
  %v816 = vpop.f32.mrb[0].mxu0
  %v817 = vadd.f32 0.0, %v816
  %v818 = vpop.f32.mrb[0].mxu0
  %v819 = vadd.f32 0.0, %v818
  %820 = vdwg.mxu0
  %821 = vmatprep.subr.mxu0 0.0
  %822 = vmatpush1.msra.mxu0 %v351
  %823 = vmatprep.subr.mxu0 0.0
  %824 = vmatpush1.msra.mxu0 %v354
  %825 = vmatprep.subr.mxu0 0.0
  %826 = vmatpush1.msra.mxu0 %v357
  %827 = vmatprep.subr.mxu0 0.0
  %828 = vmatpush1.msra.mxu0 %v360
  %829 = vmatprep.subr.mxu0 0.0
  %830 = vmatpush1.msra.mxu0 %v363
  %831 = vmatprep.subr.mxu0 0.0
  %832 = vmatpush1.msra.mxu0 %v366
  %833 = vmatprep.subr.mxu0 0.0
  %834 = vmatpush1.msra.mxu0 %v369
  %835 = vmatprep.subr.mxu0 0.0
  %836 = vmatpush1.msra.mxu0 %v372
  %837 = vmatprep.subr.mxu0 0.0
  %838 = vmatpush1.msra.mxu0 %v375
  %839 = vmatprep.subr.mxu0 0.0
  %840 = vmatpush1.msra.mxu0 %v378
  %841 = vmatprep.subr.mxu0 0.0
  %842 = vmatpush1.msra.mxu0 %v381
  %843 = vmatprep.subr.mxu0 0.0
  %844 = vmatpush1.msra.mxu0 %v384
  %845 = vmatprep.subr.mxu0 0.0
  %846 = vmatpush1.msra.mxu0 %v387
  %847 = vmatprep.subr.mxu0 0.0
  %848 = vmatpush1.msra.mxu0 %v390
  %849 = vmatprep.subr.mxu0 0.0
  %850 = vmatpush1.msra.mxu0 %v393
  %851 = vmatprep.subr.mxu0 0.0
  %852 = vmatpush1.msra.mxu0 %v396
  %853 = vmatprep.subr.mxu0 0.0
  %854 = vmatpush1.msra.mxu0 0.0
  %855 = vmatprep.subr.mxu0 0.0
  %856 = vmatpush1.msra.mxu0 0.0
  %857 = vmatprep.subr.mxu0 0.0
  %858 = vmatpush1.msra.mxu0 0.0
  %859 = vmatprep.subr.mxu0 0.0
  %860 = vmatpush1.msra.mxu0 0.0
  %861 = vmatprep.subr.mxu0 0.0
  %862 = vmatpush1.msra.mxu0 0.0
  %863 = vmatprep.subr.mxu0 0.0
  %864 = vmatpush1.msra.mxu0 0.0
  %865 = vmatprep.subr.mxu0 0.0
  %866 = vmatpush1.msra.mxu0 0.0
  %867 = vmatprep.subr.mxu0 0.0
  %868 = vmatpush1.msra.mxu0 0.0
  %869 = vmatprep.subr.mxu0 0.0
  %870 = vmatpush1.msra.mxu0 0.0
  %871 = vmatprep.subr.mxu0 0.0
  %872 = vmatpush1.msra.mxu0 0.0
  %873 = vmatprep.subr.mxu0 0.0
  %874 = vmatpush1.msra.mxu0 0.0
  %875 = vmatprep.subr.mxu0 0.0
  %876 = vmatpush1.msra.mxu0 0.0
  %877 = vmatprep.subr.mxu0 0.0
  %878 = vmatpush1.msra.mxu0 0.0
  %879 = vmatprep.subr.mxu0 0.0
  %880 = vmatpush1.msra.mxu0 0.0
  %881 = vmatprep.subr.mxu0 0.0
  %882 = vmatpush1.msra.mxu0 0.0
  %883 = vmatprep.subr.mxu0 0.0
  %884 = vmatpush1.msra.mxu0 0.0
  %885 = vmatprep.mubr.f32.mxu0 0.0
  %886 = vmatmul.mubr.f32.gmra.mrb[0].mxu0 %v741
  %v887 = vpop.f32.mrb[0].mxu0
  %v888 = vadd.f32 0.0, %v887
  %v889 = vpop.f32.mrb[0].mxu0
  %890 = vdwg.mxu0
  %v891 = vadd.f32 %v747, %v817
  %v892 = vxor.u32 %v891, 2147483648
  %v893 = vmul.f32 %v892, 1.442695
  %v894 = vpow.pop %v893
  %v895 = vadd.f32 %v894, 1.0
  %v896 = vrcp.pop %v895
  %v897 = vmul.f32 1.0, %v896
  %v898 = vadd.f32 %v748, %v819
  %v899 = vxor.u32 %v898, 2147483648
  %v900 = vmul.f32 %v899, 1.442695
  %v901 = vpow.pop %v900
  %v902 = vadd.f32 %v901, 1.0
  %v903 = vrcp.pop %v902
  %v904 = vmul.f32 1.0, %v903
  %v905 = vadd.f32 %v888, %v564
  %v906 = vmul.f32 %v897, %v905
  %v907 = vadd.f32 %v749, %v906
  %v908 = vtanh.pop %v907
  %v909 = vsub.f32 %v741, %v908
  %v910 = vmul.f32 %v904, %v909
  %v911 = vadd.f32 %v908, %v910
  %s912 = scalar_lea.vmem [#allocation4], 16
  %913 = vst [vmem:[%s912] sm:$0xff] %v911
  %s914 = smul.u32 3, 3
  %s915 = smul.addr %s914, 8
  %s916 = scalar_lea.vmem [#allocation2], %s915
  %v917 = vld [vmem:[%s916] sm:$0xff]
  %v918 = vld [vmem:[%s916 + $0x8] sm:$0xff]
  %v919 = vld [vmem:[%s916 + $0x10] sm:$0xff]
  %920 = vmatprep.subr.mxu0 %v350
  %921 = vmatpush1.msra.mxu0 %v349
  %922 = vmatprep.subr.mxu0 %v353
  %923 = vmatpush1.msra.mxu0 %v352
  %924 = vmatprep.subr.mxu0 %v356
  %925 = vmatpush1.msra.mxu0 %v355
  %926 = vmatprep.subr.mxu0 %v359
  %927 = vmatpush1.msra.mxu0 %v358
  %928 = vmatprep.subr.mxu0 %v362
  %929 = vmatpush1.msra.mxu0 %v361
  %930 = vmatprep.subr.mxu0 %v365
  %931 = vmatpush1.msra.mxu0 %v364
  %932 = vmatprep.subr.mxu0 %v368
  %933 = vmatpush1.msra.mxu0 %v367
  %934 = vmatprep.subr.mxu0 %v371
  %935 = vmatpush1.msra.mxu0 %v370
  %936 = vmatprep.subr.mxu0 %v374
  %937 = vmatpush1.msra.mxu0 %v373
  %938 = vmatprep.subr.mxu0 %v377
  %939 = vmatpush1.msra.mxu0 %v376
  %940 = vmatprep.subr.mxu0 %v380
  %941 = vmatpush1.msra.mxu0 %v379
  %942 = vmatprep.subr.mxu0 %v383
  %943 = vmatpush1.msra.mxu0 %v382
  %944 = vmatprep.subr.mxu0 %v386
  %945 = vmatpush1.msra.mxu0 %v385
  %946 = vmatprep.subr.mxu0 %v389
  %947 = vmatpush1.msra.mxu0 %v388
  %948 = vmatprep.subr.mxu0 %v392
  %949 = vmatpush1.msra.mxu0 %v391
  %950 = vmatprep.subr.mxu0 %v395
  %951 = vmatpush1.msra.mxu0 %v394
  %952 = vmatprep.subr.mxu0 0.0
  %953 = vmatpush1.msra.mxu0 0.0
  %954 = vmatprep.subr.mxu0 0.0
  %955 = vmatpush1.msra.mxu0 0.0
  %956 = vmatprep.subr.mxu0 0.0
  %957 = vmatpush1.msra.mxu0 0.0
  %958 = vmatprep.subr.mxu0 0.0
  %959 = vmatpush1.msra.mxu0 0.0
  %960 = vmatprep.subr.mxu0 0.0
  %961 = vmatpush1.msra.mxu0 0.0
  %962 = vmatprep.subr.mxu0 0.0
  %963 = vmatpush1.msra.mxu0 0.0
  %964 = vmatprep.subr.mxu0 0.0
  %965 = vmatpush1.msra.mxu0 0.0
  %966 = vmatprep.subr.mxu0 0.0
  %967 = vmatpush1.msra.mxu0 0.0
  %968 = vmatprep.subr.mxu0 0.0
  %969 = vmatpush1.msra.mxu0 0.0
  %970 = vmatprep.subr.mxu0 0.0
  %971 = vmatpush1.msra.mxu0 0.0
  %972 = vmatprep.subr.mxu0 0.0
  %973 = vmatpush1.msra.mxu0 0.0
  %974 = vmatprep.subr.mxu0 0.0
  %975 = vmatpush1.msra.mxu0 0.0
  %976 = vmatprep.subr.mxu0 0.0
  %977 = vmatpush1.msra.mxu0 0.0
  %978 = vmatprep.subr.mxu0 0.0
  %979 = vmatpush1.msra.mxu0 0.0
  %980 = vmatprep.subr.mxu0 0.0
  %981 = vmatpush1.msra.mxu0 0.0
  %982 = vmatprep.subr.mxu0 0.0
  %983 = vmatpush1.msra.mxu0 0.0
  %984 = vmatprep.mubr.f32.mxu0 0.0
  %985 = vmatmul.mubr.f32.gmra.mrb[0].mxu0 %v911
  %v986 = vpop.f32.mrb[0].mxu0
  %v987 = vadd.f32 0.0, %v986
  %v988 = vpop.f32.mrb[0].mxu0
  %v989 = vadd.f32 0.0, %v988
  %990 = vdwg.mxu0
  %991 = vmatprep.subr.mxu0 0.0
  %992 = vmatpush1.msra.mxu0 %v351
  %993 = vmatprep.subr.mxu0 0.0
  %994 = vmatpush1.msra.mxu0 %v354
  %995 = vmatprep.subr.mxu0 0.0
  %996 = vmatpush1.msra.mxu0 %v357
  %997 = vmatprep.subr.mxu0 0.0
  %998 = vmatpush1.msra.mxu0 %v360
  %999 = vmatprep.subr.mxu0 0.0
  %1000 = vmatpush1.msra.mxu0 %v363
  %1001 = vmatprep.subr.mxu0 0.0
  %1002 = vmatpush1.msra.mxu0 %v366
  %1003 = vmatprep.subr.mxu0 0.0
  %1004 = vmatpush1.msra.mxu0 %v369
  %1005 = vmatprep.subr.mxu0 0.0
  %1006 = vmatpush1.msra.mxu0 %v372
  %1007 = vmatprep.subr.mxu0 0.0
  %1008 = vmatpush1.msra.mxu0 %v375
  %1009 = vmatprep.subr.mxu0 0.0
  %1010 = vmatpush1.msra.mxu0 %v378
  %1011 = vmatprep.subr.mxu0 0.0
  %1012 = vmatpush1.msra.mxu0 %v381
  %1013 = vmatprep.subr.mxu0 0.0
  %1014 = vmatpush1.msra.mxu0 %v384
  %1015 = vmatprep.subr.mxu0 0.0
  %1016 = vmatpush1.msra.mxu0 %v387
  %1017 = vmatprep.subr.mxu0 0.0
  %1018 = vmatpush1.msra.mxu0 %v390
  %1019 = vmatprep.subr.mxu0 0.0
  %1020 = vmatpush1.msra.mxu0 %v393
  %1021 = vmatprep.subr.mxu0 0.0
  %1022 = vmatpush1.msra.mxu0 %v396
  %1023 = vmatprep.subr.mxu0 0.0
  %1024 = vmatpush1.msra.mxu0 0.0
  %1025 = vmatprep.subr.mxu0 0.0
  %1026 = vmatpush1.msra.mxu0 0.0
  %1027 = vmatprep.subr.mxu0 0.0
  %1028 = vmatpush1.msra.mxu0 0.0
  %1029 = vmatprep.subr.mxu0 0.0
  %1030 = vmatpush1.msra.mxu0 0.0
  %1031 = vmatprep.subr.mxu0 0.0
  %1032 = vmatpush1.msra.mxu0 0.0
  %1033 = vmatprep.subr.mxu0 0.0
  %1034 = vmatpush1.msra.mxu0 0.0
  %1035 = vmatprep.subr.mxu0 0.0
  %1036 = vmatpush1.msra.mxu0 0.0
  %1037 = vmatprep.subr.mxu0 0.0
  %1038 = vmatpush1.msra.mxu0 0.0
  %1039 = vmatprep.subr.mxu0 0.0
  %1040 = vmatpush1.msra.mxu0 0.0
  %1041 = vmatprep.subr.mxu0 0.0
  %1042 = vmatpush1.msra.mxu0 0.0
  %1043 = vmatprep.subr.mxu0 0.0
  %1044 = vmatpush1.msra.mxu0 0.0
  %1045 = vmatprep.subr.mxu0 0.0
  %1046 = vmatpush1.msra.mxu0 0.0
  %1047 = vmatprep.subr.mxu0 0.0
  %1048 = vmatpush1.msra.mxu0 0.0
  %1049 = vmatprep.subr.mxu0 0.0
  %1050 = vmatpush1.msra.mxu0 0.0
  %1051 = vmatprep.subr.mxu0 0.0
  %1052 = vmatpush1.msra.mxu0 0.0
  %1053 = vmatprep.subr.mxu0 0.0
  %1054 = vmatpush1.msra.mxu0 0.0
  %1055 = vmatprep.mubr.f32.mxu0 0.0
  %1056 = vmatmul.mubr.f32.gmra.mrb[0].mxu0 %v911
  %v1057 = vpop.f32.mrb[0].mxu0
  %v1058 = vadd.f32 0.0, %v1057
  %v1059 = vpop.f32.mrb[0].mxu0
  %1060 = vdwg.mxu0
  %v1061 = vadd.f32 %v917, %v987
  %v1062 = vxor.u32 %v1061, 2147483648
  %v1063 = vmul.f32 %v1062, 1.442695
  %v1064 = vpow.pop %v1063
  %v1065 = vadd.f32 %v1064, 1.0
  %v1066 = vrcp.pop %v1065
  %v1067 = vmul.f32 1.0, %v1066
  %v1068 = vadd.f32 %v918, %v989
  %v1069 = vxor.u32 %v1068, 2147483648
  %v1070 = vmul.f32 %v1069, 1.442695
  %v1071 = vpow.pop %v1070
  %v1072 = vadd.f32 %v1071, 1.0
  %v1073 = vrcp.pop %v1072
  %v1074 = vmul.f32 1.0, %v1073
  %v1075 = vadd.f32 %v1058, %v564
  %v1076 = vmul.f32 %v1067, %v1075
  %v1077 = vadd.f32 %v919, %v1076
  %v1078 = vtanh.pop %v1077
  %v1079 = vsub.f32 %v911, %v1078
  %v1080 = vmul.f32 %v1074, %v1079
  %v1081 = vadd.f32 %v1078, %v1080
  %s1082 = scalar_lea.vmem [#allocation4], 24
  %1083 = vst [vmem:[%s1082] sm:$0xff] %v1081
  %s1084 = smul.u32 4, 3
  %s1085 = smul.addr %s1084, 8
  %s1086 = scalar_lea.vmem [#allocation2], %s1085
  %v1087 = vld [vmem:[%s1086] sm:$0xff]
  %v1088 = vld [vmem:[%s1086 + $0x8] sm:$0xff]
  %v1089 = vld [vmem:[%s1086 + $0x10] sm:$0xff]
  %1090 = vmatprep.subr.mxu0 %v350
  %1091 = vmatpush1.msra.mxu0 %v349
  %1092 = vmatprep.subr.mxu0 %v353
  %1093 = vmatpush1.msra.mxu0 %v352
  %1094 = vmatprep.subr.mxu0 %v356
  %1095 = vmatpush1.msra.mxu0 %v355
  %1096 = vmatprep.subr.mxu0 %v359
  %1097 = vmatpush1.msra.mxu0 %v358
  %1098 = vmatprep.subr.mxu0 %v362
  %1099 = vmatpush1.msra.mxu0 %v361
  %1100 = vmatprep.subr.mxu0 %v365
  %1101 = vmatpush1.msra.mxu0 %v364
  %1102 = vmatprep.subr.mxu0 %v368
  %1103 = vmatpush1.msra.mxu0 %v367
  %1104 = vmatprep.subr.mxu0 %v371
  %1105 = vmatpush1.msra.mxu0 %v370
  %1106 = vmatprep.subr.mxu0 %v374
  %1107 = vmatpush1.msra.mxu0 %v373
  %1108 = vmatprep.subr.mxu0 %v377
  %1109 = vmatpush1.msra.mxu0 %v376
  %1110 = vmatprep.subr.mxu0 %v380
  %1111 = vmatpush1.msra.mxu0 %v379
  %1112 = vmatprep.subr.mxu0 %v383
  %1113 = vmatpush1.msra.mxu0 %v382
  %1114 = vmatprep.subr.mxu0 %v386
  %1115 = vmatpush1.msra.mxu0 %v385
  %1116 = vmatprep.subr.mxu0 %v389
  %1117 = vmatpush1.msra.mxu0 %v388
  %1118 = vmatprep.subr.mxu0 %v392
  %1119 = vmatpush1.msra.mxu0 %v391
  %1120 = vmatprep.subr.mxu0 %v395
  %1121 = vmatpush1.msra.mxu0 %v394
  %1122 = vmatprep.subr.mxu0 0.0
  %1123 = vmatpush1.msra.mxu0 0.0
  %1124 = vmatprep.subr.mxu0 0.0
  %1125 = vmatpush1.msra.mxu0 0.0
  %1126 = vmatprep.subr.mxu0 0.0
  %1127 = vmatpush1.msra.mxu0 0.0
  %1128 = vmatprep.subr.mxu0 0.0
  %1129 = vmatpush1.msra.mxu0 0.0
  %1130 = vmatprep.subr.mxu0 0.0
  %1131 = vmatpush1.msra.mxu0 0.0
  %1132 = vmatprep.subr.mxu0 0.0
  %1133 = vmatpush1.msra.mxu0 0.0
  %1134 = vmatprep.subr.mxu0 0.0
  %1135 = vmatpush1.msra.mxu0 0.0
  %1136 = vmatprep.subr.mxu0 0.0
  %1137 = vmatpush1.msra.mxu0 0.0
  %1138 = vmatprep.subr.mxu0 0.0
  %1139 = vmatpush1.msra.mxu0 0.0
  %1140 = vmatprep.subr.mxu0 0.0
  %1141 = vmatpush1.msra.mxu0 0.0
  %1142 = vmatprep.subr.mxu0 0.0
  %1143 = vmatpush1.msra.mxu0 0.0
  %1144 = vmatprep.subr.mxu0 0.0
  %1145 = vmatpush1.msra.mxu0 0.0
  %1146 = vmatprep.subr.mxu0 0.0
  %1147 = vmatpush1.msra.mxu0 0.0
  %1148 = vmatprep.subr.mxu0 0.0
  %1149 = vmatpush1.msra.mxu0 0.0
  %1150 = vmatprep.subr.mxu0 0.0
  %1151 = vmatpush1.msra.mxu0 0.0
  %1152 = vmatprep.subr.mxu0 0.0
  %1153 = vmatpush1.msra.mxu0 0.0
  %1154 = vmatprep.mubr.f32.mxu0 0.0
  %1155 = vmatmul.mubr.f32.gmra.mrb[0].mxu0 %v1081
  %v1156 = vpop.f32.mrb[0].mxu0
  %v1157 = vadd.f32 0.0, %v1156
  %v1158 = vpop.f32.mrb[0].mxu0
  %v1159 = vadd.f32 0.0, %v1158
  %1160 = vdwg.mxu0
  %1161 = vmatprep.subr.mxu0 0.0
  %1162 = vmatpush1.msra.mxu0 %v351
  %1163 = vmatprep.subr.mxu0 0.0
  %1164 = vmatpush1.msra.mxu0 %v354
  %1165 = vmatprep.subr.mxu0 0.0
  %1166 = vmatpush1.msra.mxu0 %v357
  %1167 = vmatprep.subr.mxu0 0.0
  %1168 = vmatpush1.msra.mxu0 %v360
  %1169 = vmatprep.subr.mxu0 0.0
  %1170 = vmatpush1.msra.mxu0 %v363
  %1171 = vmatprep.subr.mxu0 0.0
  %1172 = vmatpush1.msra.mxu0 %v366
  %1173 = vmatprep.subr.mxu0 0.0
  %1174 = vmatpush1.msra.mxu0 %v369
  %1175 = vmatprep.subr.mxu0 0.0
  %1176 = vmatpush1.msra.mxu0 %v372
  %1177 = vmatprep.subr.mxu0 0.0
  %1178 = vmatpush1.msra.mxu0 %v375
  %1179 = vmatprep.subr.mxu0 0.0
  %1180 = vmatpush1.msra.mxu0 %v378
  %1181 = vmatprep.subr.mxu0 0.0
  %1182 = vmatpush1.msra.mxu0 %v381
  %1183 = vmatprep.subr.mxu0 0.0
  %1184 = vmatpush1.msra.mxu0 %v384
  %1185 = vmatprep.subr.mxu0 0.0
  %1186 = vmatpush1.msra.mxu0 %v387
  %1187 = vmatprep.subr.mxu0 0.0
  %1188 = vmatpush1.msra.mxu0 %v390
  %1189 = vmatprep.subr.mxu0 0.0
  %1190 = vmatpush1.msra.mxu0 %v393
  %1191 = vmatprep.subr.mxu0 0.0
  %1192 = vmatpush1.msra.mxu0 %v396
  %1193 = vmatprep.subr.mxu0 0.0
  %1194 = vmatpush1.msra.mxu0 0.0
  %1195 = vmatprep.subr.mxu0 0.0
  %1196 = vmatpush1.msra.mxu0 0.0
  %1197 = vmatprep.subr.mxu0 0.0
  %1198 = vmatpush1.msra.mxu0 0.0
  %1199 = vmatprep.subr.mxu0 0.0
  %1200 = vmatpush1.msra.mxu0 0.0
  %1201 = vmatprep.subr.mxu0 0.0
  %1202 = vmatpush1.msra.mxu0 0.0
  %1203 = vmatprep.subr.mxu0 0.0
  %1204 = vmatpush1.msra.mxu0 0.0
  %1205 = vmatprep.subr.mxu0 0.0
  %1206 = vmatpush1.msra.mxu0 0.0
  %1207 = vmatprep.subr.mxu0 0.0
  %1208 = vmatpush1.msra.mxu0 0.0
  %1209 = vmatprep.subr.mxu0 0.0
  %1210 = vmatpush1.msra.mxu0 0.0
  %1211 = vmatprep.subr.mxu0 0.0
  %1212 = vmatpush1.msra.mxu0 0.0
  %1213 = vmatprep.subr.mxu0 0.0
  %1214 = vmatpush1.msra.mxu0 0.0
  %1215 = vmatprep.subr.mxu0 0.0
  %1216 = vmatpush1.msra.mxu0 0.0
  %1217 = vmatprep.subr.mxu0 0.0
  %1218 = vmatpush1.msra.mxu0 0.0
  %1219 = vmatprep.subr.mxu0 0.0
  %1220 = vmatpush1.msra.mxu0 0.0
  %1221 = vmatprep.subr.mxu0 0.0
  %1222 = vmatpush1.msra.mxu0 0.0
  %1223 = vmatprep.subr.mxu0 0.0
  %1224 = vmatpush1.msra.mxu0 0.0
  %1225 = vmatprep.mubr.f32.mxu0 0.0
  %1226 = vmatmul.mubr.f32.gmra.mrb[0].mxu0 %v1081
  %v1227 = vpop.f32.mrb[0].mxu0
  %v1228 = vadd.f32 0.0, %v1227
  %v1229 = vpop.f32.mrb[0].mxu0
  %1230 = vdwg.mxu0
  %v1231 = vadd.f32 %v1087, %v1157
  %v1232 = vxor.u32 %v1231, 2147483648
  %v1233 = vmul.f32 %v1232, 1.442695
  %v1234 = vpow.pop %v1233
  %v1235 = vadd.f32 %v1234, 1.0
  %v1236 = vrcp.pop %v1235
  %v1237 = vmul.f32 1.0, %v1236
  %v1238 = vadd.f32 %v1088, %v1159
  %v1239 = vxor.u32 %v1238, 2147483648
  %v1240 = vmul.f32 %v1239, 1.442695
  %v1241 = vpow.pop %v1240
  %v1242 = vadd.f32 %v1241, 1.0
  %v1243 = vrcp.pop %v1242
  %v1244 = vmul.f32 1.0, %v1243
  %v1245 = vadd.f32 %v1228, %v564
  %v1246 = vmul.f32 %v1237, %v1245
  %v1247 = vadd.f32 %v1089, %v1246
  %v1248 = vtanh.pop %v1247
  %v1249 = vsub.f32 %v1081, %v1248
  %v1250 = vmul.f32 %v1244, %v1249
  %v1251 = vadd.f32 %v1248, %v1250
  %s1252 = scalar_lea.vmem [#allocation4], 32
  %1253 = vst [vmem:[%s1252] sm:$0xff] %v1251
  %s1254 = smul.u32 5, 3
  %s1255 = smul.addr %s1254, 8
  %s1256 = scalar_lea.vmem [#allocation2], %s1255
  %v1257 = vld [vmem:[%s1256] sm:$0xff]
  %v1258 = vld [vmem:[%s1256 + $0x8] sm:$0xff]
  %v1259 = vld [vmem:[%s1256 + $0x10] sm:$0xff]
  %1260 = vmatprep.subr.mxu0 %v350
  %1261 = vmatpush1.msra.mxu0 %v349
  %1262 = vmatprep.subr.mxu0 %v353
  %1263 = vmatpush1.msra.mxu0 %v352
  %1264 = vmatprep.subr.mxu0 %v356
  %1265 = vmatpush1.msra.mxu0 %v355
  %1266 = vmatprep.subr.mxu0 %v359
  %1267 = vmatpush1.msra.mxu0 %v358
  %1268 = vmatprep.subr.mxu0 %v362
  %1269 = vmatpush1.msra.mxu0 %v361
  %1270 = vmatprep.subr.mxu0 %v365
  %1271 = vmatpush1.msra.mxu0 %v364
  %1272 = vmatprep.subr.mxu0 %v368
  %1273 = vmatpush1.msra.mxu0 %v367
  %1274 = vmatprep.subr.mxu0 %v371
  %1275 = vmatpush1.msra.mxu0 %v370
  %1276 = vmatprep.subr.mxu0 %v374
  %1277 = vmatpush1.msra.mxu0 %v373
  %1278 = vmatprep.subr.mxu0 %v377
  %1279 = vmatpush1.msra.mxu0 %v376
  %1280 = vmatprep.subr.mxu0 %v380
  %1281 = vmatpush1.msra.mxu0 %v379
  %1282 = vmatprep.subr.mxu0 %v383
  %1283 = vmatpush1.msra.mxu0 %v382
  %1284 = vmatprep.subr.mxu0 %v386
  %1285 = vmatpush1.msra.mxu0 %v385
  %1286 = vmatprep.subr.mxu0 %v389
  %1287 = vmatpush1.msra.mxu0 %v388
  %1288 = vmatprep.subr.mxu0 %v392
  %1289 = vmatpush1.msra.mxu0 %v391
  %1290 = vmatprep.subr.mxu0 %v395
  %1291 = vmatpush1.msra.mxu0 %v394
  %1292 = vmatprep.subr.mxu0 0.0
  %1293 = vmatpush1.msra.mxu0 0.0
  %1294 = vmatprep.subr.mxu0 0.0
  %1295 = vmatpush1.msra.mxu0 0.0
  %1296 = vmatprep.subr.mxu0 0.0
  %1297 = vmatpush1.msra.mxu0 0.0
  %1298 = vmatprep.subr.mxu0 0.0
  %1299 = vmatpush1.msra.mxu0 0.0
  %1300 = vmatprep.subr.mxu0 0.0
  %1301 = vmatpush1.msra.mxu0 0.0
  %1302 = vmatprep.subr.mxu0 0.0
  %1303 = vmatpush1.msra.mxu0 0.0
  %1304 = vmatprep.subr.mxu0 0.0
  %1305 = vmatpush1.msra.mxu0 0.0
  %1306 = vmatprep.subr.mxu0 0.0
  %1307 = vmatpush1.msra.mxu0 0.0
  %1308 = vmatprep.subr.mxu0 0.0
  %1309 = vmatpush1.msra.mxu0 0.0
  %1310 = vmatprep.subr.mxu0 0.0
  %1311 = vmatpush1.msra.mxu0 0.0
  %1312 = vmatprep.subr.mxu0 0.0
  %1313 = vmatpush1.msra.mxu0 0.0
  %1314 = vmatprep.subr.mxu0 0.0
  %1315 = vmatpush1.msra.mxu0 0.0
  %1316 = vmatprep.subr.mxu0 0.0
  %1317 = vmatpush1.msra.mxu0 0.0
  %1318 = vmatprep.subr.mxu0 0.0
  %1319 = vmatpush1.msra.mxu0 0.0
  %1320 = vmatprep.subr.mxu0 0.0
  %1321 = vmatpush1.msra.mxu0 0.0
  %1322 = vmatprep.subr.mxu0 0.0
  %1323 = vmatpush1.msra.mxu0 0.0
  %1324 = vmatprep.mubr.f32.mxu0 0.0
  %1325 = vmatmul.mubr.f32.gmra.mrb[0].mxu0 %v1251
  %v1326 = vpop.f32.mrb[0].mxu0
  %v1327 = vadd.f32 0.0, %v1326
  %v1328 = vpop.f32.mrb[0].mxu0
  %v1329 = vadd.f32 0.0, %v1328
  %1330 = vdwg.mxu0
  %1331 = vmatprep.subr.mxu0 0.0
  %1332 = vmatpush1.msra.mxu0 %v351
  %1333 = vmatprep.subr.mxu0 0.0
  %1334 = vmatpush1.msra.mxu0 %v354
  %1335 = vmatprep.subr.mxu0 0.0
  %1336 = vmatpush1.msra.mxu0 %v357
  %1337 = vmatprep.subr.mxu0 0.0
  %1338 = vmatpush1.msra.mxu0 %v360
  %1339 = vmatprep.subr.mxu0 0.0
  %1340 = vmatpush1.msra.mxu0 %v363
  %1341 = vmatprep.subr.mxu0 0.0
  %1342 = vmatpush1.msra.mxu0 %v366
  %1343 = vmatprep.subr.mxu0 0.0
  %1344 = vmatpush1.msra.mxu0 %v369
  %1345 = vmatprep.subr.mxu0 0.0
  %1346 = vmatpush1.msra.mxu0 %v372
  %1347 = vmatprep.subr.mxu0 0.0
  %1348 = vmatpush1.msra.mxu0 %v375
  %1349 = vmatprep.subr.mxu0 0.0
  %1350 = vmatpush1.msra.mxu0 %v378
  %1351 = vmatprep.subr.mxu0 0.0
  %1352 = vmatpush1.msra.mxu0 %v381
  %1353 = vmatprep.subr.mxu0 0.0
  %1354 = vmatpush1.msra.mxu0 %v384
  %1355 = vmatprep.subr.mxu0 0.0
  %1356 = vmatpush1.msra.mxu0 %v387
  %1357 = vmatprep.subr.mxu0 0.0
  %1358 = vmatpush1.msra.mxu0 %v390
  %1359 = vmatprep.subr.mxu0 0.0
  %1360 = vmatpush1.msra.mxu0 %v393
  %1361 = vmatprep.subr.mxu0 0.0
  %1362 = vmatpush1.msra.mxu0 %v396
  %1363 = vmatprep.subr.mxu0 0.0
  %1364 = vmatpush1.msra.mxu0 0.0
  %1365 = vmatprep.subr.mxu0 0.0
  %1366 = vmatpush1.msra.mxu0 0.0
  %1367 = vmatprep.subr.mxu0 0.0
  %1368 = vmatpush1.msra.mxu0 0.0
  %1369 = vmatprep.subr.mxu0 0.0
  %1370 = vmatpush1.msra.mxu0 0.0
  %1371 = vmatprep.subr.mxu0 0.0
  %1372 = vmatpush1.msra.mxu0 0.0
  %1373 = vmatprep.subr.mxu0 0.0
  %1374 = vmatpush1.msra.mxu0 0.0
  %1375 = vmatprep.subr.mxu0 0.0
  %1376 = vmatpush1.msra.mxu0 0.0
  %1377 = vmatprep.subr.mxu0 0.0
  %1378 = vmatpush1.msra.mxu0 0.0
  %1379 = vmatprep.subr.mxu0 0.0
  %1380 = vmatpush1.msra.mxu0 0.0
  %1381 = vmatprep.subr.mxu0 0.0
  %1382 = vmatpush1.msra.mxu0 0.0
  %1383 = vmatprep.subr.mxu0 0.0
  %1384 = vmatpush1.msra.mxu0 0.0
  %1385 = vmatprep.subr.mxu0 0.0
  %1386 = vmatpush1.msra.mxu0 0.0
  %1387 = vmatprep.subr.mxu0 0.0
  %1388 = vmatpush1.msra.mxu0 0.0
  %1389 = vmatprep.subr.mxu0 0.0
  %1390 = vmatpush1.msra.mxu0 0.0
  %1391 = vmatprep.subr.mxu0 0.0
  %1392 = vmatpush1.msra.mxu0 0.0
  %1393 = vmatprep.subr.mxu0 0.0
  %1394 = vmatpush1.msra.mxu0 0.0
  %1395 = vmatprep.mubr.f32.mxu0 0.0
  %1396 = vmatmul.mubr.f32.gmra.mrb[0].mxu0 %v1251
  %v1397 = vpop.f32.mrb[0].mxu0
  %v1398 = vadd.f32 0.0, %v1397
  %v1399 = vpop.f32.mrb[0].mxu0
  %1400 = vdwg.mxu0
  %v1401 = vadd.f32 %v1257, %v1327
  %v1402 = vxor.u32 %v1401, 2147483648
  %v1403 = vmul.f32 %v1402, 1.442695
  %v1404 = vpow.pop %v1403
  %v1405 = vadd.f32 %v1404, 1.0
  %v1406 = vrcp.pop %v1405
  %v1407 = vmul.f32 1.0, %v1406
  %v1408 = vadd.f32 %v1258, %v1329
  %v1409 = vxor.u32 %v1408, 2147483648
  %v1410 = vmul.f32 %v1409, 1.442695
  %v1411 = vpow.pop %v1410
  %v1412 = vadd.f32 %v1411, 1.0
  %v1413 = vrcp.pop %v1412
  %v1414 = vmul.f32 1.0, %v1413
  %v1415 = vadd.f32 %v1398, %v564
  %v1416 = vmul.f32 %v1407, %v1415
  %v1417 = vadd.f32 %v1259, %v1416
  %v1418 = vtanh.pop %v1417
  %v1419 = vsub.f32 %v1251, %v1418
  %v1420 = vmul.f32 %v1414, %v1419
  %v1421 = vadd.f32 %v1418, %v1420
  %s1422 = scalar_lea.vmem [#allocation4], 40
  %1423 = vst [vmem:[%s1422] sm:$0xff] %v1421
  %s1424 = smul.u32 6, 3
  %s1425 = smul.addr %s1424, 8
  %s1426 = scalar_lea.vmem [#allocation2], %s1425
  %v1427 = vld [vmem:[%s1426] sm:$0xff]
  %v1428 = vld [vmem:[%s1426 + $0x8] sm:$0xff]
  %v1429 = vld [vmem:[%s1426 + $0x10] sm:$0xff]
  %1430 = vmatprep.subr.mxu0 %v350
  %1431 = vmatpush1.msra.mxu0 %v349
  %1432 = vmatprep.subr.mxu0 %v353
  %1433 = vmatpush1.msra.mxu0 %v352
  %1434 = vmatprep.subr.mxu0 %v356
  %1435 = vmatpush1.msra.mxu0 %v355
  %1436 = vmatprep.subr.mxu0 %v359
  %1437 = vmatpush1.msra.mxu0 %v358
  %1438 = vmatprep.subr.mxu0 %v362
  %1439 = vmatpush1.msra.mxu0 %v361
  %1440 = vmatprep.subr.mxu0 %v365
  %1441 = vmatpush1.msra.mxu0 %v364
  %1442 = vmatprep.subr.mxu0 %v368
  %1443 = vmatpush1.msra.mxu0 %v367
  %1444 = vmatprep.subr.mxu0 %v371
  %1445 = vmatpush1.msra.mxu0 %v370
  %1446 = vmatprep.subr.mxu0 %v374
  %1447 = vmatpush1.msra.mxu0 %v373
  %1448 = vmatprep.subr.mxu0 %v377
  %1449 = vmatpush1.msra.mxu0 %v376
  %1450 = vmatprep.subr.mxu0 %v380
  %1451 = vmatpush1.msra.mxu0 %v379
  %1452 = vmatprep.subr.mxu0 %v383
  %1453 = vmatpush1.msra.mxu0 %v382
  %1454 = vmatprep.subr.mxu0 %v386
  %1455 = vmatpush1.msra.mxu0 %v385
  %1456 = vmatprep.subr.mxu0 %v389
  %1457 = vmatpush1.msra.mxu0 %v388
  %1458 = vmatprep.subr.mxu0 %v392
  %1459 = vmatpush1.msra.mxu0 %v391
  %1460 = vmatprep.subr.mxu0 %v395
  %1461 = vmatpush1.msra.mxu0 %v394
  %1462 = vmatprep.subr.mxu0 0.0
  %1463 = vmatpush1.msra.mxu0 0.0
  %1464 = vmatprep.subr.mxu0 0.0
  %1465 = vmatpush1.msra.mxu0 0.0
  %1466 = vmatprep.subr.mxu0 0.0
  %1467 = vmatpush1.msra.mxu0 0.0
  %1468 = vmatprep.subr.mxu0 0.0
  %1469 = vmatpush1.msra.mxu0 0.0
  %1470 = vmatprep.subr.mxu0 0.0
  %1471 = vmatpush1.msra.mxu0 0.0
  %1472 = vmatprep.subr.mxu0 0.0
  %1473 = vmatpush1.msra.mxu0 0.0
  %1474 = vmatprep.subr.mxu0 0.0
  %1475 = vmatpush1.msra.mxu0 0.0
  %1476 = vmatprep.subr.mxu0 0.0
  %1477 = vmatpush1.msra.mxu0 0.0
  %1478 = vmatprep.subr.mxu0 0.0
  %1479 = vmatpush1.msra.mxu0 0.0
  %1480 = vmatprep.subr.mxu0 0.0
  %1481 = vmatpush1.msra.mxu0 0.0
  %1482 = vmatprep.subr.mxu0 0.0
  %1483 = vmatpush1.msra.mxu0 0.0
  %1484 = vmatprep.subr.mxu0 0.0
  %1485 = vmatpush1.msra.mxu0 0.0
  %1486 = vmatprep.subr.mxu0 0.0
  %1487 = vmatpush1.msra.mxu0 0.0
  %1488 = vmatprep.subr.mxu0 0.0
  %1489 = vmatpush1.msra.mxu0 0.0
  %1490 = vmatprep.subr.mxu0 0.0
  %1491 = vmatpush1.msra.mxu0 0.0
  %1492 = vmatprep.subr.mxu0 0.0
  %1493 = vmatpush1.msra.mxu0 0.0
  %1494 = vmatprep.mubr.f32.mxu0 0.0
  %1495 = vmatmul.mubr.f32.gmra.mrb[0].mxu0 %v1421
  %v1496 = vpop.f32.mrb[0].mxu0
  %v1497 = vadd.f32 0.0, %v1496
  %v1498 = vpop.f32.mrb[0].mxu0
  %v1499 = vadd.f32 0.0, %v1498
  %1500 = vdwg.mxu0
  %1501 = vmatprep.subr.mxu0 0.0
  %1502 = vmatpush1.msra.mxu0 %v351
  %1503 = vmatprep.subr.mxu0 0.0
  %1504 = vmatpush1.msra.mxu0 %v354
  %1505 = vmatprep.subr.mxu0 0.0
  %1506 = vmatpush1.msra.mxu0 %v357
  %1507 = vmatprep.subr.mxu0 0.0
  %1508 = vmatpush1.msra.mxu0 %v360
  %1509 = vmatprep.subr.mxu0 0.0
  %1510 = vmatpush1.msra.mxu0 %v363
  %1511 = vmatprep.subr.mxu0 0.0
  %1512 = vmatpush1.msra.mxu0 %v366
  %1513 = vmatprep.subr.mxu0 0.0
  %1514 = vmatpush1.msra.mxu0 %v369
  %1515 = vmatprep.subr.mxu0 0.0
  %1516 = vmatpush1.msra.mxu0 %v372
  %1517 = vmatprep.subr.mxu0 0.0
  %1518 = vmatpush1.msra.mxu0 %v375
  %1519 = vmatprep.subr.mxu0 0.0
  %1520 = vmatpush1.msra.mxu0 %v378
  %1521 = vmatprep.subr.mxu0 0.0
  %1522 = vmatpush1.msra.mxu0 %v381
  %1523 = vmatprep.subr.mxu0 0.0
  %1524 = vmatpush1.msra.mxu0 %v384
  %1525 = vmatprep.subr.mxu0 0.0
  %1526 = vmatpush1.msra.mxu0 %v387
  %1527 = vmatprep.subr.mxu0 0.0
  %1528 = vmatpush1.msra.mxu0 %v390
  %1529 = vmatprep.subr.mxu0 0.0
  %1530 = vmatpush1.msra.mxu0 %v393
  %1531 = vmatprep.subr.mxu0 0.0
  %1532 = vmatpush1.msra.mxu0 %v396
  %1533 = vmatprep.subr.mxu0 0.0
  %1534 = vmatpush1.msra.mxu0 0.0
  %1535 = vmatprep.subr.mxu0 0.0
  %1536 = vmatpush1.msra.mxu0 0.0
  %1537 = vmatprep.subr.mxu0 0.0
  %1538 = vmatpush1.msra.mxu0 0.0
  %1539 = vmatprep.subr.mxu0 0.0
  %1540 = vmatpush1.msra.mxu0 0.0
  %1541 = vmatprep.subr.mxu0 0.0
  %1542 = vmatpush1.msra.mxu0 0.0
  %1543 = vmatprep.subr.mxu0 0.0
  %1544 = vmatpush1.msra.mxu0 0.0
  %1545 = vmatprep.subr.mxu0 0.0
  %1546 = vmatpush1.msra.mxu0 0.0
  %1547 = vmatprep.subr.mxu0 0.0
  %1548 = vmatpush1.msra.mxu0 0.0
  %1549 = vmatprep.subr.mxu0 0.0
  %1550 = vmatpush1.msra.mxu0 0.0
  %1551 = vmatprep.subr.mxu0 0.0
  %1552 = vmatpush1.msra.mxu0 0.0
  %1553 = vmatprep.subr.mxu0 0.0
  %1554 = vmatpush1.msra.mxu0 0.0
  %1555 = vmatprep.subr.mxu0 0.0
  %1556 = vmatpush1.msra.mxu0 0.0
  %1557 = vmatprep.subr.mxu0 0.0
  %1558 = vmatpush1.msra.mxu0 0.0
  %1559 = vmatprep.subr.mxu0 0.0
  %1560 = vmatpush1.msra.mxu0 0.0
  %1561 = vmatprep.subr.mxu0 0.0
  %1562 = vmatpush1.msra.mxu0 0.0
  %1563 = vmatprep.subr.mxu0 0.0
  %1564 = vmatpush1.msra.mxu0 0.0
  %1565 = vmatprep.mubr.f32.mxu0 0.0
  %1566 = vmatmul.mubr.f32.gmra.mrb[0].mxu0 %v1421
  %v1567 = vpop.f32.mrb[0].mxu0
  %v1568 = vadd.f32 0.0, %v1567
  %v1569 = vpop.f32.mrb[0].mxu0
  %1570 = vdwg.mxu0
  %v1571 = vadd.f32 %v1427, %v1497
  %v1572 = vxor.u32 %v1571, 2147483648
  %v1573 = vmul.f32 %v1572, 1.442695
  %v1574 = vpow.pop %v1573
  %v1575 = vadd.f32 %v1574, 1.0
  %v1576 = vrcp.pop %v1575
  %v1577 = vmul.f32 1.0, %v1576
  %v1578 = vadd.f32 %v1428, %v1499
  %v1579 = vxor.u32 %v1578, 2147483648
  %v1580 = vmul.f32 %v1579, 1.442695
  %v1581 = vpow.pop %v1580
  %v1582 = vadd.f32 %v1581, 1.0
  %v1583 = vrcp.pop %v1582
  %v1584 = vmul.f32 1.0, %v1583
  %v1585 = vadd.f32 %v1568, %v564
  %v1586 = vmul.f32 %v1577, %v1585
  %v1587 = vadd.f32 %v1429, %v1586
  %v1588 = vtanh.pop %v1587
  %v1589 = vsub.f32 %v1421, %v1588
  %v1590 = vmul.f32 %v1584, %v1589
  %v1591 = vadd.f32 %v1588, %v1590
  %s1592 = scalar_lea.vmem [#allocation4], 48
  %1593 = vst [vmem:[%s1592] sm:$0xff] %v1591
  %s1594 = smul.u32 7, 3
  %s1595 = smul.addr %s1594, 8
  %s1596 = scalar_lea.vmem [#allocation2], %s1595
  %v1597 = vld [vmem:[%s1596] sm:$0xff]
  %v1598 = vld [vmem:[%s1596 + $0x8] sm:$0xff]
  %v1599 = vld [vmem:[%s1596 + $0x10] sm:$0xff]
  %1600 = vmatprep.subr.mxu0 %v350
  %1601 = vmatpush1.msra.mxu0 %v349
  %1602 = vmatprep.subr.mxu0 %v353
  %1603 = vmatpush1.msra.mxu0 %v352
  %1604 = vmatprep.subr.mxu0 %v356
  %1605 = vmatpush1.msra.mxu0 %v355
  %1606 = vmatprep.subr.mxu0 %v359
  %1607 = vmatpush1.msra.mxu0 %v358
  %1608 = vmatprep.subr.mxu0 %v362
  %1609 = vmatpush1.msra.mxu0 %v361
  %1610 = vmatprep.subr.mxu0 %v365
  %1611 = vmatpush1.msra.mxu0 %v364
  %1612 = vmatprep.subr.mxu0 %v368
  %1613 = vmatpush1.msra.mxu0 %v367
  %1614 = vmatprep.subr.mxu0 %v371
  %1615 = vmatpush1.msra.mxu0 %v370
  %1616 = vmatprep.subr.mxu0 %v374
  %1617 = vmatpush1.msra.mxu0 %v373
  %1618 = vmatprep.subr.mxu0 %v377
  %1619 = vmatpush1.msra.mxu0 %v376
  %1620 = vmatprep.subr.mxu0 %v380
  %1621 = vmatpush1.msra.mxu0 %v379
  %1622 = vmatprep.subr.mxu0 %v383
  %1623 = vmatpush1.msra.mxu0 %v382
  %1624 = vmatprep.subr.mxu0 %v386
  %1625 = vmatpush1.msra.mxu0 %v385
  %1626 = vmatprep.subr.mxu0 %v389
  %1627 = vmatpush1.msra.mxu0 %v388
  %1628 = vmatprep.subr.mxu0 %v392
  %1629 = vmatpush1.msra.mxu0 %v391
  %1630 = vmatprep.subr.mxu0 %v395
  %1631 = vmatpush1.msra.mxu0 %v394
  %1632 = vmatprep.subr.mxu0 0.0
  %1633 = vmatpush1.msra.mxu0 0.0
  %1634 = vmatprep.subr.mxu0 0.0
  %1635 = vmatpush1.msra.mxu0 0.0
  %1636 = vmatprep.subr.mxu0 0.0
  %1637 = vmatpush1.msra.mxu0 0.0
  %1638 = vmatprep.subr.mxu0 0.0
  %1639 = vmatpush1.msra.mxu0 0.0
  %1640 = vmatprep.subr.mxu0 0.0
  %1641 = vmatpush1.msra.mxu0 0.0
  %1642 = vmatprep.subr.mxu0 0.0
  %1643 = vmatpush1.msra.mxu0 0.0
  %1644 = vmatprep.subr.mxu0 0.0
  %1645 = vmatpush1.msra.mxu0 0.0
  %1646 = vmatprep.subr.mxu0 0.0
  %1647 = vmatpush1.msra.mxu0 0.0
  %1648 = vmatprep.subr.mxu0 0.0
  %1649 = vmatpush1.msra.mxu0 0.0
  %1650 = vmatprep.subr.mxu0 0.0
  %1651 = vmatpush1.msra.mxu0 0.0
  %1652 = vmatprep.subr.mxu0 0.0
  %1653 = vmatpush1.msra.mxu0 0.0
  %1654 = vmatprep.subr.mxu0 0.0
  %1655 = vmatpush1.msra.mxu0 0.0
  %1656 = vmatprep.subr.mxu0 0.0
  %1657 = vmatpush1.msra.mxu0 0.0
  %1658 = vmatprep.subr.mxu0 0.0
  %1659 = vmatpush1.msra.mxu0 0.0
  %1660 = vmatprep.subr.mxu0 0.0
  %1661 = vmatpush1.msra.mxu0 0.0
  %1662 = vmatprep.subr.mxu0 0.0
  %1663 = vmatpush1.msra.mxu0 0.0
  %1664 = vmatprep.mubr.f32.mxu0 0.0
  %1665 = vmatmul.mubr.f32.gmra.mrb[0].mxu0 %v1591
  %v1666 = vpop.f32.mrb[0].mxu0
  %v1667 = vadd.f32 0.0, %v1666
  %v1668 = vpop.f32.mrb[0].mxu0
  %v1669 = vadd.f32 0.0, %v1668
  %1670 = vdwg.mxu0
  %1671 = vmatprep.subr.mxu0 0.0
  %1672 = vmatpush1.msra.mxu0 %v351
  %1673 = vmatprep.subr.mxu0 0.0
  %1674 = vmatpush1.msra.mxu0 %v354
  %1675 = vmatprep.subr.mxu0 0.0
  %1676 = vmatpush1.msra.mxu0 %v357
  %1677 = vmatprep.subr.mxu0 0.0
  %1678 = vmatpush1.msra.mxu0 %v360
  %1679 = vmatprep.subr.mxu0 0.0
  %1680 = vmatpush1.msra.mxu0 %v363
  %1681 = vmatprep.subr.mxu0 0.0
  %1682 = vmatpush1.msra.mxu0 %v366
  %1683 = vmatprep.subr.mxu0 0.0
  %1684 = vmatpush1.msra.mxu0 %v369
  %1685 = vmatprep.subr.mxu0 0.0
  %1686 = vmatpush1.msra.mxu0 %v372
  %1687 = vmatprep.subr.mxu0 0.0
  %1688 = vmatpush1.msra.mxu0 %v375
  %1689 = vmatprep.subr.mxu0 0.0
  %1690 = vmatpush1.msra.mxu0 %v378
  %1691 = vmatprep.subr.mxu0 0.0
  %1692 = vmatpush1.msra.mxu0 %v381
  %1693 = vmatprep.subr.mxu0 0.0
  %1694 = vmatpush1.msra.mxu0 %v384
  %1695 = vmatprep.subr.mxu0 0.0
  %1696 = vmatpush1.msra.mxu0 %v387
  %1697 = vmatprep.subr.mxu0 0.0
  %1698 = vmatpush1.msra.mxu0 %v390
  %1699 = vmatprep.subr.mxu0 0.0
  %1700 = vmatpush1.msra.mxu0 %v393
  %1701 = vmatprep.subr.mxu0 0.0
  %1702 = vmatpush1.msra.mxu0 %v396
  %1703 = vmatprep.subr.mxu0 0.0
  %1704 = vmatpush1.msra.mxu0 0.0
  %1705 = vmatprep.subr.mxu0 0.0
  %1706 = vmatpush1.msra.mxu0 0.0
  %1707 = vmatprep.subr.mxu0 0.0
  %1708 = vmatpush1.msra.mxu0 0.0
  %1709 = vmatprep.subr.mxu0 0.0
  %1710 = vmatpush1.msra.mxu0 0.0
  %1711 = vmatprep.subr.mxu0 0.0
  %1712 = vmatpush1.msra.mxu0 0.0
  %1713 = vmatprep.subr.mxu0 0.0
  %1714 = vmatpush1.msra.mxu0 0.0
  %1715 = vmatprep.subr.mxu0 0.0
  %1716 = vmatpush1.msra.mxu0 0.0
  %1717 = vmatprep.subr.mxu0 0.0
  %1718 = vmatpush1.msra.mxu0 0.0
  %1719 = vmatprep.subr.mxu0 0.0
  %1720 = vmatpush1.msra.mxu0 0.0
  %1721 = vmatprep.subr.mxu0 0.0
  %1722 = vmatpush1.msra.mxu0 0.0
  %1723 = vmatprep.subr.mxu0 0.0
  %1724 = vmatpush1.msra.mxu0 0.0
  %1725 = vmatprep.subr.mxu0 0.0
  %1726 = vmatpush1.msra.mxu0 0.0
  %1727 = vmatprep.subr.mxu0 0.0
  %1728 = vmatpush1.msra.mxu0 0.0
  %1729 = vmatprep.subr.mxu0 0.0
  %1730 = vmatpush1.msra.mxu0 0.0
  %1731 = vmatprep.subr.mxu0 0.0
  %1732 = vmatpush1.msra.mxu0 0.0
  %1733 = vmatprep.subr.mxu0 0.0
  %1734 = vmatpush1.msra.mxu0 0.0
  %1735 = vmatprep.mubr.f32.mxu0 0.0
  %1736 = vmatmul.mubr.f32.gmra.mrb[0].mxu0 %v1591
  %v1737 = vpop.f32.mrb[0].mxu0
  %v1738 = vadd.f32 0.0, %v1737
  %v1739 = vpop.f32.mrb[0].mxu0
  %1740 = vdwg.mxu0
  %v1741 = vadd.f32 %v1597, %v1667
  %v1742 = vxor.u32 %v1741, 2147483648
  %v1743 = vmul.f32 %v1742, 1.442695
  %v1744 = vpow.pop %v1743
  %v1745 = vadd.f32 %v1744, 1.0
  %v1746 = vrcp.pop %v1745
  %v1747 = vmul.f32 1.0, %v1746
  %v1748 = vadd.f32 %v1598, %v1669
  %v1749 = vxor.u32 %v1748, 2147483648
  %v1750 = vmul.f32 %v1749, 1.442695
  %v1751 = vpow.pop %v1750
  %v1752 = vadd.f32 %v1751, 1.0
  %v1753 = vrcp.pop %v1752
  %v1754 = vmul.f32 1.0, %v1753
  %v1755 = vadd.f32 %v1738, %v564
  %v1756 = vmul.f32 %v1747, %v1755
  %v1757 = vadd.f32 %v1599, %v1756
  %v1758 = vtanh.pop %v1757
  %v1759 = vsub.f32 %v1591, %v1758
  %v1760 = vmul.f32 %v1754, %v1759
  %v1761 = vadd.f32 %v1758, %v1760
  %s1762 = scalar_lea.vmem [#allocation4], 56
  %1763 = vst [vmem:[%s1762] sm:$0xff] %v1761
  %1764 = vst [vmem:[#allocation3] sm:$0xff] %v1761
  %v1765 = vld [vmem:[#allocation4] sm:$0xff]
  %v1766 = vld [vmem:[#allocation4 + $0x8] sm:$0xff]
  %v1767 = vld [vmem:[#allocation4 + $0x10] sm:$0xff]
  %v1768 = vld [vmem:[#allocation4 + $0x18] sm:$0xff]
  %v1769 = vld [vmem:[#allocation4 + $0x20] sm:$0xff]
  %v1770 = vld [vmem:[#allocation4 + $0x28] sm:$0xff]
  %v1771 = vld [vmem:[#allocation4 + $0x30] sm:$0xff]
  %v1772 = vld [vmem:[#allocation4 + $0x38] sm:$0xff]
  %v1773 = vld [vmem:[%s6] sm:$0xff]
  %v1774 = vld [vmem:[%s6 + $0x8] sm:$0xff]
  %v1775 = vld [vmem:[%s6 + $0x10] sm:$0xff]
  %v1776 = vld [vmem:[%s6 + $0x18] sm:$0xff]
  %v1777 = vld [vmem:[%s6 + $0x20] sm:$0xff]
  %v1778 = vld [vmem:[%s6 + $0x28] sm:$0xff]
  %v1779 = vld [vmem:[%s6 + $0x30] sm:$0xff]
  %v1780 = vld [vmem:[%s6 + $0x38] sm:$0xff]
  %v1781 = vld [vmem:[%s6 + $0x40] sm:$0xff]
  %v1782 = vld [vmem:[%s6 + $0x48] sm:$0xff]
  %v1783 = vld [vmem:[%s6 + $0x50] sm:$0xff]
  %v1784 = vld [vmem:[%s6 + $0x58] sm:$0xff]
  %v1785 = vld [vmem:[%s6 + $0x60] sm:$0xff]
  %v1786 = vld [vmem:[%s6 + $0x68] sm:$0xff]
  %v1787 = vld [vmem:[%s6 + $0x70] sm:$0xff]
  %v1788 = vld [vmem:[%s6 + $0x78] sm:$0xff]
  %v1789 = vld [vmem:[%s6 + $0x80] sm:$0xff]
  %v1790 = vld [vmem:[%s6 + $0x88] sm:$0xff]
  %v1791 = vld [vmem:[%s6 + $0x90] sm:$0xff]
  %v1792 = vld [vmem:[%s6 + $0x98] sm:$0xff]
  %v1793 = vld [vmem:[%s6 + $0xa0] sm:$0xff]
  %v1794 = vld [vmem:[%s6 + $0xa8] sm:$0xff]
  %v1795 = vld [vmem:[%s6 + $0xb0] sm:$0xff]
  %v1796 = vld [vmem:[%s6 + $0xb8] sm:$0xff]
  %v1797 = vld [vmem:[%s6 + $0xc0] sm:$0xff]
  %v1798 = vld [vmem:[%s6 + $0xc8] sm:$0xff]
  %v1799 = vld [vmem:[%s6 + $0xd0] sm:$0xff]
  %v1800 = vld [vmem:[%s6 + $0xd8] sm:$0xff]
  %v1801 = vld [vmem:[%s6 + $0xe0] sm:$0xff]
  %v1802 = vld [vmem:[%s6 + $0xe8] sm:$0xff]
  %v1803 = vld [vmem:[%s6 + $0xf0] sm:$0xff]
  %v1804 = vld [vmem:[%s6 + $0xf8] sm:$0xff]
  %v1805 = vld [vmem:[%s6 + $0x100] sm:$0xff]
  %v1806 = vld [vmem:[%s6 + $0x108] sm:$0xff]
  %v1807 = vld [vmem:[%s6 + $0x110] sm:$0xff]
  %v1808 = vld [vmem:[%s6 + $0x118] sm:$0xff]
  %v1809 = vld [vmem:[%s6 + $0x120] sm:$0xff]
  %v1810 = vld [vmem:[%s6 + $0x128] sm:$0xff]
  %v1811 = vld [vmem:[%s6 + $0x130] sm:$0xff]
  %v1812 = vld [vmem:[%s6 + $0x138] sm:$0xff]
  %v1813 = vld [vmem:[%s6 + $0x140] sm:$0xff]
  %v1814 = vld [vmem:[%s6 + $0x148] sm:$0xff]
  %v1815 = vld [vmem:[%s6 + $0x150] sm:$0xff]
  %v1816 = vld [vmem:[%s6 + $0x158] sm:$0xff]
  %v1817 = vld [vmem:[%s6 + $0x160] sm:$0xff]
  %v1818 = vld [vmem:[%s6 + $0x168] sm:$0xff]
  %v1819 = vld [vmem:[%s6 + $0x170] sm:$0xff]
  %v1820 = vld [vmem:[%s6 + $0x178] sm:$0xff]
  %v1821 = vld [vmem:[%s8] sm:$0x7]
  %v1823 = vlaneseq
  %v1824 = vshrl.u32 %v1823, 7
  %v1825 = vsub.s32 0, %v1824
  %v1826 = vrot.slane %v1821, %v1825
  %v1827 = vlaneseq
  %v1828 = vshrl.u32 %v1827, 7
  %v1829 = vsub.s32 1, %v1828
  %v1830 = vrot.slane %v1821, %v1829
  %v1831 = vlaneseq
  %v1832 = vshrl.u32 %v1831, 7
  %v1833 = vsub.s32 2, %v1832
  %v1834 = vrot.slane %v1821, %v1833
  %1838 = vmatprep.subr.mxu0 %v1774
  %1839 = vmatpush1.msra.mxu0 %v1773
  %1840 = vmatprep.subr.mxu0 %v1777
  %1841 = vmatpush1.msra.mxu0 %v1776
  %1842 = vmatprep.subr.mxu0 %v1780
  %1843 = vmatpush1.msra.mxu0 %v1779
  %1844 = vmatprep.subr.mxu0 %v1783
  %1845 = vmatpush1.msra.mxu0 %v1782
  %1846 = vmatprep.subr.mxu0 %v1786
  %1847 = vmatpush1.msra.mxu0 %v1785
  %1848 = vmatprep.subr.mxu0 %v1789
  %1849 = vmatpush1.msra.mxu0 %v1788
  %1850 = vmatprep.subr.mxu0 %v1792
  %1851 = vmatpush1.msra.mxu0 %v1791
  %1852 = vmatprep.subr.mxu0 %v1795
  %1853 = vmatpush1.msra.mxu0 %v1794
  %1854 = vmatprep.subr.mxu0 %v1798
  %1855 = vmatpush1.msra.mxu0 %v1797
  %1856 = vmatprep.subr.mxu0 %v1801
  %1857 = vmatpush1.msra.mxu0 %v1800
  %1858 = vmatprep.subr.mxu0 %v1804
  %1859 = vmatpush1.msra.mxu0 %v1803
  %1860 = vmatprep.subr.mxu0 %v1807
  %1861 = vmatpush1.msra.mxu0 %v1806
  %1862 = vmatprep.subr.mxu0 %v1810
  %1863 = vmatpush1.msra.mxu0 %v1809
  %1864 = vmatprep.subr.mxu0 %v1813
  %1865 = vmatpush1.msra.mxu0 %v1812
  %1866 = vmatprep.subr.mxu0 %v1816
  %1867 = vmatpush1.msra.mxu0 %v1815
  %1868 = vmatprep.subr.mxu0 %v1819
  %1869 = vmatpush1.msra.mxu0 %v1818
  %1870 = vmatprep.subr.mxu0 0.0
  %1871 = vmatpush1.msra.mxu0 0.0
  %1872 = vmatprep.subr.mxu0 0.0
  %1873 = vmatpush1.msra.mxu0 0.0
  %1874 = vmatprep.subr.mxu0 0.0
  %1875 = vmatpush1.msra.mxu0 0.0
  %1876 = vmatprep.subr.mxu0 0.0
  %1877 = vmatpush1.msra.mxu0 0.0
  %1878 = vmatprep.subr.mxu0 0.0
  %1879 = vmatpush1.msra.mxu0 0.0
  %1880 = vmatprep.subr.mxu0 0.0
  %1881 = vmatpush1.msra.mxu0 0.0
  %1882 = vmatprep.subr.mxu0 0.0
  %1883 = vmatpush1.msra.mxu0 0.0
  %1884 = vmatprep.subr.mxu0 0.0
  %1885 = vmatpush1.msra.mxu0 0.0
  %1886 = vmatprep.subr.mxu0 0.0
  %1887 = vmatpush1.msra.mxu0 0.0
  %1888 = vmatprep.subr.mxu0 0.0
  %1889 = vmatpush1.msra.mxu0 0.0
  %1890 = vmatprep.subr.mxu0 0.0
  %1891 = vmatpush1.msra.mxu0 0.0
  %1892 = vmatprep.subr.mxu0 0.0
  %1893 = vmatpush1.msra.mxu0 0.0
  %1894 = vmatprep.subr.mxu0 0.0
  %1895 = vmatpush1.msra.mxu0 0.0
  %1896 = vmatprep.subr.mxu0 0.0
  %1897 = vmatpush1.msra.mxu0 0.0
  %1898 = vmatprep.subr.mxu0 0.0
  %1899 = vmatpush1.msra.mxu0 0.0
  %1900 = vmatprep.subr.mxu0 0.0
  %1901 = vmatpush1.msra.mxu0 0.0
  %1902 = vmatprep.mubr.f32.mxu0 0.0
  %1903 = vmatmul.mubr.f32.gmra.mrb[0].mxu0 %v1765
  %v1904 = vpop.f32.mrb[0].mxu0
  %v1905 = vadd.f32 %v1826, %v1904
  %v1906 = vpop.f32.mrb[0].mxu0
  %v1907 = vadd.f32 %v1830, %v1906
  %1908 = vmatprep.mubr.f32.mxu0 0.0
  %1909 = vmatmul.mubr.f32.gmra.mrb[0].mxu0 %v1766
  %v1910 = vpop.f32.mrb[0].mxu0
  %v1911 = vadd.f32 %v1826, %v1910
  %v1912 = vpop.f32.mrb[0].mxu0
  %v1913 = vadd.f32 %v1830, %v1912
  %1914 = vmatprep.mubr.f32.mxu0 0.0
  %1915 = vmatmul.mubr.f32.gmra.mrb[0].mxu0 %v1767
  %v1916 = vpop.f32.mrb[0].mxu0
  %v1917 = vadd.f32 %v1826, %v1916
  %v1918 = vpop.f32.mrb[0].mxu0
  %v1919 = vadd.f32 %v1830, %v1918
  %1920 = vmatprep.mubr.f32.mxu0 0.0
  %1921 = vmatmul.mubr.f32.gmra.mrb[0].mxu0 %v1768
  %v1922 = vpop.f32.mrb[0].mxu0
  %v1923 = vadd.f32 %v1826, %v1922
  %v1924 = vpop.f32.mrb[0].mxu0
  %v1925 = vadd.f32 %v1830, %v1924
  %1926 = vmatprep.mubr.f32.mxu0 0.0
  %1927 = vmatmul.mubr.f32.gmra.mrb[0].mxu0 %v1769
  %v1928 = vpop.f32.mrb[0].mxu0
  %v1929 = vadd.f32 %v1826, %v1928
  %v1930 = vpop.f32.mrb[0].mxu0
  %v1931 = vadd.f32 %v1830, %v1930
  %1932 = vmatprep.mubr.f32.mxu0 0.0
  %1933 = vmatmul.mubr.f32.gmra.mrb[0].mxu0 %v1770
  %v1934 = vpop.f32.mrb[0].mxu0
  %v1935 = vadd.f32 %v1826, %v1934
  %v1936 = vpop.f32.mrb[0].mxu0
  %v1937 = vadd.f32 %v1830, %v1936
  %1938 = vmatprep.mubr.f32.mxu0 0.0
  %1939 = vmatmul.mubr.f32.gmra.mrb[0].mxu0 %v1771
  %v1940 = vpop.f32.mrb[0].mxu0
  %v1941 = vadd.f32 %v1826, %v1940
  %v1942 = vpop.f32.mrb[0].mxu0
  %v1943 = vadd.f32 %v1830, %v1942
  %1944 = vmatprep.mubr.f32.mxu0 0.0
  %1945 = vmatmul.mubr.f32.gmra.mrb[0].mxu0 %v1772
  %v1946 = vpop.f32.mrb[0].mxu0
  %v1947 = vadd.f32 %v1826, %v1946
  %v1948 = vpop.f32.mrb[0].mxu0
  %v1949 = vadd.f32 %v1830, %v1948
  %1950 = vdwg.mxu0
  %1951 = vmatprep.subr.mxu0 0.0
  %1952 = vmatpush1.msra.mxu0 %v1775
  %1953 = vmatprep.subr.mxu0 0.0
  %1954 = vmatpush1.msra.mxu0 %v1778
  %1955 = vmatprep.subr.mxu0 0.0
  %1956 = vmatpush1.msra.mxu0 %v1781
  %1957 = vmatprep.subr.mxu0 0.0
  %1958 = vmatpush1.msra.mxu0 %v1784
  %1959 = vmatprep.subr.mxu0 0.0
  %1960 = vmatpush1.msra.mxu0 %v1787
  %1961 = vmatprep.subr.mxu0 0.0
  %1962 = vmatpush1.msra.mxu0 %v1790
  %1963 = vmatprep.subr.mxu0 0.0
  %1964 = vmatpush1.msra.mxu0 %v1793
  %1965 = vmatprep.subr.mxu0 0.0
  %1966 = vmatpush1.msra.mxu0 %v1796
  %1967 = vmatprep.subr.mxu0 0.0
  %1968 = vmatpush1.msra.mxu0 %v1799
  %1969 = vmatprep.subr.mxu0 0.0
  %1970 = vmatpush1.msra.mxu0 %v1802
  %1971 = vmatprep.subr.mxu0 0.0
  %1972 = vmatpush1.msra.mxu0 %v1805
  %1973 = vmatprep.subr.mxu0 0.0
  %1974 = vmatpush1.msra.mxu0 %v1808
  %1975 = vmatprep.subr.mxu0 0.0
  %1976 = vmatpush1.msra.mxu0 %v1811
  %1977 = vmatprep.subr.mxu0 0.0
  %1978 = vmatpush1.msra.mxu0 %v1814
  %1979 = vmatprep.subr.mxu0 0.0
  %1980 = vmatpush1.msra.mxu0 %v1817
  %1981 = vmatprep.subr.mxu0 0.0
  %1982 = vmatpush1.msra.mxu0 %v1820
  %1983 = vmatprep.subr.mxu0 0.0
  %1984 = vmatpush1.msra.mxu0 0.0
  %1985 = vmatprep.subr.mxu0 0.0
  %1986 = vmatpush1.msra.mxu0 0.0
  %1987 = vmatprep.subr.mxu0 0.0
  %1988 = vmatpush1.msra.mxu0 0.0
  %1989 = vmatprep.subr.mxu0 0.0
  %1990 = vmatpush1.msra.mxu0 0.0
  %1991 = vmatprep.subr.mxu0 0.0
  %1992 = vmatpush1.msra.mxu0 0.0
  %1993 = vmatprep.subr.mxu0 0.0
  %1994 = vmatpush1.msra.mxu0 0.0
  %1995 = vmatprep.subr.mxu0 0.0
  %1996 = vmatpush1.msra.mxu0 0.0
  %1997 = vmatprep.subr.mxu0 0.0
  %1998 = vmatpush1.msra.mxu0 0.0
  %1999 = vmatprep.subr.mxu0 0.0
  %2000 = vmatpush1.msra.mxu0 0.0
  %2001 = vmatprep.subr.mxu0 0.0
  %2002 = vmatpush1.msra.mxu0 0.0
  %2003 = vmatprep.subr.mxu0 0.0
  %2004 = vmatpush1.msra.mxu0 0.0
  %2005 = vmatprep.subr.mxu0 0.0
  %2006 = vmatpush1.msra.mxu0 0.0
  %2007 = vmatprep.subr.mxu0 0.0
  %2008 = vmatpush1.msra.mxu0 0.0
  %2009 = vmatprep.subr.mxu0 0.0
  %2010 = vmatpush1.msra.mxu0 0.0
  %2011 = vmatprep.subr.mxu0 0.0
  %2012 = vmatpush1.msra.mxu0 0.0
  %2013 = vmatprep.subr.mxu0 0.0
  %2014 = vmatpush1.msra.mxu0 0.0
  %2015 = vmatprep.mubr.f32.mxu0 0.0
  %2016 = vmatmul.mubr.f32.gmra.mrb[0].mxu0 %v1765
  %v2017 = vpop.f32.mrb[0].mxu0
  %v2018 = vadd.f32 %v1834, %v2017
  %v2019 = vpop.f32.mrb[0].mxu0
  %2020 = vmatprep.mubr.f32.mxu0 0.0
  %2021 = vmatmul.mubr.f32.gmra.mrb[0].mxu0 %v1766
  %v2022 = vpop.f32.mrb[0].mxu0
  %v2023 = vadd.f32 %v1834, %v2022
  %v2024 = vpop.f32.mrb[0].mxu0
  %2025 = vmatprep.mubr.f32.mxu0 0.0
  %2026 = vmatmul.mubr.f32.gmra.mrb[0].mxu0 %v1767
  %v2027 = vpop.f32.mrb[0].mxu0
  %v2028 = vadd.f32 %v1834, %v2027
  %v2029 = vpop.f32.mrb[0].mxu0
  %2030 = vmatprep.mubr.f32.mxu0 0.0
  %2031 = vmatmul.mubr.f32.gmra.mrb[0].mxu0 %v1768
  %v2032 = vpop.f32.mrb[0].mxu0
  %v2033 = vadd.f32 %v1834, %v2032
  %v2034 = vpop.f32.mrb[0].mxu0
  %2035 = vmatprep.mubr.f32.mxu0 0.0
  %2036 = vmatmul.mubr.f32.gmra.mrb[0].mxu0 %v1769
  %v2037 = vpop.f32.mrb[0].mxu0
  %v2038 = vadd.f32 %v1834, %v2037
  %v2039 = vpop.f32.mrb[0].mxu0
  %2040 = vmatprep.mubr.f32.mxu0 0.0
  %2041 = vmatmul.mubr.f32.gmra.mrb[0].mxu0 %v1770
  %v2042 = vpop.f32.mrb[0].mxu0
  %v2043 = vadd.f32 %v1834, %v2042
  %v2044 = vpop.f32.mrb[0].mxu0
  %2045 = vmatprep.mubr.f32.mxu0 0.0
  %2046 = vmatmul.mubr.f32.gmra.mrb[0].mxu0 %v1771
  %v2047 = vpop.f32.mrb[0].mxu0
  %v2048 = vadd.f32 %v1834, %v2047
  %v2049 = vpop.f32.mrb[0].mxu0
  %2050 = vmatprep.mubr.f32.mxu0 0.0
  %2051 = vmatmul.mubr.f32.gmra.mrb[0].mxu0 %v1772
  %v2052 = vpop.f32.mrb[0].mxu0
  %v2053 = vadd.f32 %v1834, %v2052
  %v2054 = vpop.f32.mrb[0].mxu0
  %2055 = vdwg.mxu0
  %2056 = vst [vmem:[#allocation2] sm:$0xff] %v1905
  %2057 = vst [vmem:[#allocation2 + $0x8] sm:$0xff] %v1907
  %2058 = vst [vmem:[#allocation2 + $0x10] sm:$0xff] %v2018
  %2059 = vst [vmem:[#allocation2 + $0x18] sm:$0xff] %v1911
  %2060 = vst [vmem:[#allocation2 + $0x20] sm:$0xff] %v1913
  %2061 = vst [vmem:[#allocation2 + $0x28] sm:$0xff] %v2023
  %2062 = vst [vmem:[#allocation2 + $0x30] sm:$0xff] %v1917
  %2063 = vst [vmem:[#allocation2 + $0x38] sm:$0xff] %v1919
  %2064 = vst [vmem:[#allocation2 + $0x40] sm:$0xff] %v2028
  %2065 = vst [vmem:[#allocation2 + $0x48] sm:$0xff] %v1923
  %2066 = vst [vmem:[#allocation2 + $0x50] sm:$0xff] %v1925
  %2067 = vst [vmem:[#allocation2 + $0x58] sm:$0xff] %v2033
  %2068 = vst [vmem:[#allocation2 + $0x60] sm:$0xff] %v1929
  %2069 = vst [vmem:[#allocation2 + $0x68] sm:$0xff] %v1931
  %2070 = vst [vmem:[#allocation2 + $0x70] sm:$0xff] %v2038
  %2071 = vst [vmem:[#allocation2 + $0x78] sm:$0xff] %v1935
  %2072 = vst [vmem:[#allocation2 + $0x80] sm:$0xff] %v1937
  %2073 = vst [vmem:[#allocation2 + $0x88] sm:$0xff] %v2043
  %2074 = vst [vmem:[#allocation2 + $0x90] sm:$0xff] %v1941
  %2075 = vst [vmem:[#allocation2 + $0x98] sm:$0xff] %v1943
  %2076 = vst [vmem:[#allocation2 + $0xa0] sm:$0xff] %v2048
  %2077 = vst [vmem:[#allocation2 + $0xa8] sm:$0xff] %v1947
  %2078 = vst [vmem:[#allocation2 + $0xb0] sm:$0xff] %v1949
  %2079 = vst [vmem:[#allocation2 + $0xb8] sm:$0xff] %v2053
  %v2080 = vld [vmem:[%s7] sm:$0xff]
  %v2081 = vld [vmem:[%s7 + $0x8] sm:$0xff]
  %v2082 = vld [vmem:[%s7 + $0x10] sm:$0xff]
  %v2083 = vld [vmem:[%s7 + $0x18] sm:$0xff]
  %v2084 = vld [vmem:[%s7 + $0x20] sm:$0xff]
  %v2085 = vld [vmem:[%s7 + $0x28] sm:$0xff]
  %v2086 = vld [vmem:[%s7 + $0x30] sm:$0xff]
  %v2087 = vld [vmem:[%s7 + $0x38] sm:$0xff]
  %v2088 = vld [vmem:[%s7 + $0x40] sm:$0xff]
  %v2089 = vld [vmem:[%s7 + $0x48] sm:$0xff]
  %v2090 = vld [vmem:[%s7 + $0x50] sm:$0xff]
  %v2091 = vld [vmem:[%s7 + $0x58] sm:$0xff]
  %v2092 = vld [vmem:[%s7 + $0x60] sm:$0xff]
  %v2093 = vld [vmem:[%s7 + $0x68] sm:$0xff]
  %v2094 = vld [vmem:[%s7 + $0x70] sm:$0xff]
  %v2095 = vld [vmem:[%s7 + $0x78] sm:$0xff]
  %v2096 = vld [vmem:[%s7 + $0x80] sm:$0xff]
  %v2097 = vld [vmem:[%s7 + $0x88] sm:$0xff]
  %v2098 = vld [vmem:[%s7 + $0x90] sm:$0xff]
  %v2099 = vld [vmem:[%s7 + $0x98] sm:$0xff]
  %v2100 = vld [vmem:[%s7 + $0xa0] sm:$0xff]
  %v2101 = vld [vmem:[%s7 + $0xa8] sm:$0xff]
  %v2102 = vld [vmem:[%s7 + $0xb0] sm:$0xff]
  %v2103 = vld [vmem:[%s7 + $0xb8] sm:$0xff]
  %v2104 = vld [vmem:[%s7 + $0xc0] sm:$0xff]
  %v2105 = vld [vmem:[%s7 + $0xc8] sm:$0xff]
  %v2106 = vld [vmem:[%s7 + $0xd0] sm:$0xff]
  %v2107 = vld [vmem:[%s7 + $0xd8] sm:$0xff]
  %v2108 = vld [vmem:[%s7 + $0xe0] sm:$0xff]
  %v2109 = vld [vmem:[%s7 + $0xe8] sm:$0xff]
  %v2110 = vld [vmem:[%s7 + $0xf0] sm:$0xff]
  %v2111 = vld [vmem:[%s7 + $0xf8] sm:$0xff]
  %v2112 = vld [vmem:[%s7 + $0x100] sm:$0xff]
  %v2113 = vld [vmem:[%s7 + $0x108] sm:$0xff]
  %v2114 = vld [vmem:[%s7 + $0x110] sm:$0xff]
  %v2115 = vld [vmem:[%s7 + $0x118] sm:$0xff]
  %v2116 = vld [vmem:[%s7 + $0x120] sm:$0xff]
  %v2117 = vld [vmem:[%s7 + $0x128] sm:$0xff]
  %v2118 = vld [vmem:[%s7 + $0x130] sm:$0xff]
  %v2119 = vld [vmem:[%s7 + $0x138] sm:$0xff]
  %v2120 = vld [vmem:[%s7 + $0x140] sm:$0xff]
  %v2121 = vld [vmem:[%s7 + $0x148] sm:$0xff]
  %v2122 = vld [vmem:[%s7 + $0x150] sm:$0xff]
  %v2123 = vld [vmem:[%s7 + $0x158] sm:$0xff]
  %v2124 = vld [vmem:[%s7 + $0x160] sm:$0xff]
  %v2125 = vld [vmem:[%s7 + $0x168] sm:$0xff]
  %v2126 = vld [vmem:[%s7 + $0x170] sm:$0xff]
  %v2127 = vld [vmem:[%s7 + $0x178] sm:$0xff]
  %v2128 = vld [vmem:[%s9] sm:$0x1]
  %s2129 = scalar_lea.vmem [#allocation3], 8
  %v2130 = vld [vmem:[%s2129] sm:$0xff]
  %v2131 = vld [vmem:[%s401] sm:$0xff]
  %v2132 = vld [vmem:[%s401 + $0x8] sm:$0xff]
  %v2133 = vld [vmem:[%s401 + $0x10] sm:$0xff]
  %2134 = vmatprep.subr.mxu0 %v2081
  %2135 = vmatpush1.msra.mxu0 %v2080
  %2136 = vmatprep.subr.mxu0 %v2084
  %2137 = vmatpush1.msra.mxu0 %v2083
  %2138 = vmatprep.subr.mxu0 %v2087
  %2139 = vmatpush1.msra.mxu0 %v2086
  %2140 = vmatprep.subr.mxu0 %v2090
  %2141 = vmatpush1.msra.mxu0 %v2089
  %2142 = vmatprep.subr.mxu0 %v2093
  %2143 = vmatpush1.msra.mxu0 %v2092
  %2144 = vmatprep.subr.mxu0 %v2096
  %2145 = vmatpush1.msra.mxu0 %v2095
  %2146 = vmatprep.subr.mxu0 %v2099
  %2147 = vmatpush1.msra.mxu0 %v2098
  %2148 = vmatprep.subr.mxu0 %v2102
  %2149 = vmatpush1.msra.mxu0 %v2101
  %2150 = vmatprep.subr.mxu0 %v2105
  %2151 = vmatpush1.msra.mxu0 %v2104
  %2152 = vmatprep.subr.mxu0 %v2108
  %2153 = vmatpush1.msra.mxu0 %v2107
  %2154 = vmatprep.subr.mxu0 %v2111
  %2155 = vmatpush1.msra.mxu0 %v2110
  %2156 = vmatprep.subr.mxu0 %v2114
  %2157 = vmatpush1.msra.mxu0 %v2113
  %2158 = vmatprep.subr.mxu0 %v2117
  %2159 = vmatpush1.msra.mxu0 %v2116
  %2160 = vmatprep.subr.mxu0 %v2120
  %2161 = vmatpush1.msra.mxu0 %v2119
  %2162 = vmatprep.subr.mxu0 %v2123
  %2163 = vmatpush1.msra.mxu0 %v2122
  %2164 = vmatprep.subr.mxu0 %v2126
  %2165 = vmatpush1.msra.mxu0 %v2125
  %2166 = vmatprep.subr.mxu0 0.0
  %2167 = vmatpush1.msra.mxu0 0.0
  %2168 = vmatprep.subr.mxu0 0.0
  %2169 = vmatpush1.msra.mxu0 0.0
  %2170 = vmatprep.subr.mxu0 0.0
  %2171 = vmatpush1.msra.mxu0 0.0
  %2172 = vmatprep.subr.mxu0 0.0
  %2173 = vmatpush1.msra.mxu0 0.0
  %2174 = vmatprep.subr.mxu0 0.0
  %2175 = vmatpush1.msra.mxu0 0.0
  %2176 = vmatprep.subr.mxu0 0.0
  %2177 = vmatpush1.msra.mxu0 0.0
  %2178 = vmatprep.subr.mxu0 0.0
  %2179 = vmatpush1.msra.mxu0 0.0
  %2180 = vmatprep.subr.mxu0 0.0
  %2181 = vmatpush1.msra.mxu0 0.0
  %2182 = vmatprep.subr.mxu0 0.0
  %2183 = vmatpush1.msra.mxu0 0.0
  %2184 = vmatprep.subr.mxu0 0.0
  %2185 = vmatpush1.msra.mxu0 0.0
  %2186 = vmatprep.subr.mxu0 0.0
  %2187 = vmatpush1.msra.mxu0 0.0
  %2188 = vmatprep.subr.mxu0 0.0
  %2189 = vmatpush1.msra.mxu0 0.0
  %2190 = vmatprep.subr.mxu0 0.0
  %2191 = vmatpush1.msra.mxu0 0.0
  %2192 = vmatprep.subr.mxu0 0.0
  %2193 = vmatpush1.msra.mxu0 0.0
  %2194 = vmatprep.subr.mxu0 0.0
  %2195 = vmatpush1.msra.mxu0 0.0
  %2196 = vmatprep.subr.mxu0 0.0
  %2197 = vmatpush1.msra.mxu0 0.0
  %2198 = vmatprep.mubr.f32.mxu0 0.0
  %2199 = vmatmul.mubr.f32.gmra.mrb[0].mxu0 %v2130
  %v2200 = vpop.f32.mrb[0].mxu0
  %v2201 = vadd.f32 0.0, %v2200
  %v2202 = vpop.f32.mrb[0].mxu0
  %v2203 = vadd.f32 0.0, %v2202
  %2204 = vdwg.mxu0
  %2205 = vmatprep.subr.mxu0 0.0
  %2206 = vmatpush1.msra.mxu0 %v2082
  %2207 = vmatprep.subr.mxu0 0.0
  %2208 = vmatpush1.msra.mxu0 %v2085
  %2209 = vmatprep.subr.mxu0 0.0
  %2210 = vmatpush1.msra.mxu0 %v2088
  %2211 = vmatprep.subr.mxu0 0.0
  %2212 = vmatpush1.msra.mxu0 %v2091
  %2213 = vmatprep.subr.mxu0 0.0
  %2214 = vmatpush1.msra.mxu0 %v2094
  %2215 = vmatprep.subr.mxu0 0.0
  %2216 = vmatpush1.msra.mxu0 %v2097
  %2217 = vmatprep.subr.mxu0 0.0
  %2218 = vmatpush1.msra.mxu0 %v2100
  %2219 = vmatprep.subr.mxu0 0.0
  %2220 = vmatpush1.msra.mxu0 %v2103
  %2221 = vmatprep.subr.mxu0 0.0
  %2222 = vmatpush1.msra.mxu0 %v2106
  %2223 = vmatprep.subr.mxu0 0.0
  %2224 = vmatpush1.msra.mxu0 %v2109
  %2225 = vmatprep.subr.mxu0 0.0
  %2226 = vmatpush1.msra.mxu0 %v2112
  %2227 = vmatprep.subr.mxu0 0.0
  %2228 = vmatpush1.msra.mxu0 %v2115
  %2229 = vmatprep.subr.mxu0 0.0
  %2230 = vmatpush1.msra.mxu0 %v2118
  %2231 = vmatprep.subr.mxu0 0.0
  %2232 = vmatpush1.msra.mxu0 %v2121
  %2233 = vmatprep.subr.mxu0 0.0
  %2234 = vmatpush1.msra.mxu0 %v2124
  %2235 = vmatprep.subr.mxu0 0.0
  %2236 = vmatpush1.msra.mxu0 %v2127
  %2237 = vmatprep.subr.mxu0 0.0
  %2238 = vmatpush1.msra.mxu0 0.0
  %2239 = vmatprep.subr.mxu0 0.0
  %2240 = vmatpush1.msra.mxu0 0.0
  %2241 = vmatprep.subr.mxu0 0.0
  %2242 = vmatpush1.msra.mxu0 0.0
  %2243 = vmatprep.subr.mxu0 0.0
  %2244 = vmatpush1.msra.mxu0 0.0
  %2245 = vmatprep.subr.mxu0 0.0
  %2246 = vmatpush1.msra.mxu0 0.0
  %2247 = vmatprep.subr.mxu0 0.0
  %2248 = vmatpush1.msra.mxu0 0.0
  %2249 = vmatprep.subr.mxu0 0.0
  %2250 = vmatpush1.msra.mxu0 0.0
  %2251 = vmatprep.subr.mxu0 0.0
  %2252 = vmatpush1.msra.mxu0 0.0
  %2253 = vmatprep.subr.mxu0 0.0
  %2254 = vmatpush1.msra.mxu0 0.0
  %2255 = vmatprep.subr.mxu0 0.0
  %2256 = vmatpush1.msra.mxu0 0.0
  %2257 = vmatprep.subr.mxu0 0.0
  %2258 = vmatpush1.msra.mxu0 0.0
  %2259 = vmatprep.subr.mxu0 0.0
  %2260 = vmatpush1.msra.mxu0 0.0
  %2261 = vmatprep.subr.mxu0 0.0
  %2262 = vmatpush1.msra.mxu0 0.0
  %2263 = vmatprep.subr.mxu0 0.0
  %2264 = vmatpush1.msra.mxu0 0.0
  %2265 = vmatprep.subr.mxu0 0.0
  %2266 = vmatpush1.msra.mxu0 0.0
  %2267 = vmatprep.subr.mxu0 0.0
  %2268 = vmatpush1.msra.mxu0 0.0
  %2269 = vmatprep.mubr.f32.mxu0 0.0
  %2270 = vmatmul.mubr.f32.gmra.mrb[0].mxu0 %v2130
  %v2271 = vpop.f32.mrb[0].mxu0
  %v2272 = vadd.f32 0.0, %v2271
  %v2273 = vpop.f32.mrb[0].mxu0
  %2274 = vdwg.mxu0
  %v2275 = vadd.f32 %v2131, %v2201
  %v2276 = vxor.u32 %v2275, 2147483648
  %v2277 = vmul.f32 %v2276, 1.442695
  %v2278 = vpow.pop %v2277
  %v2279 = vadd.f32 %v2278, 1.0
  %v2280 = vrcp.pop %v2279
  %v2281 = vmul.f32 1.0, %v2280
  %v2282 = vadd.f32 %v2132, %v2203
  %v2283 = vxor.u32 %v2282, 2147483648
  %v2284 = vmul.f32 %v2283, 1.442695
  %v2285 = vpow.pop %v2284
  %v2286 = vadd.f32 %v2285, 1.0
  %v2287 = vrcp.pop %v2286
  %v2288 = vmul.f32 1.0, %v2287
  %v2290 = vlaneseq
  %v2291 = vshrl.u32 %v2290, 7
  %v2292 = vsub.s32 0, %v2291
  %v2293 = vrot.slane %v2128, %v2292
  %v2295 = vadd.f32 %v2272, %v2293
  %v2296 = vmul.f32 %v2281, %v2295
  %v2297 = vadd.f32 %v2133, %v2296
  %v2298 = vtanh.pop %v2297
  %v2299 = vsub.f32 %v2130, %v2298
  %v2300 = vmul.f32 %v2288, %v2299
  %v2301 = vadd.f32 %v2298, %v2300
  %2302 = vst [vmem:[%s10] sm:$0xff] %v2301
  %v2303 = vld [vmem:[%s576] sm:$0xff]
  %v2304 = vld [vmem:[%s576 + $0x8] sm:$0xff]
  %v2305 = vld [vmem:[%s576 + $0x10] sm:$0xff]
  %2306 = vmatprep.subr.mxu0 %v2081
  %2307 = vmatpush1.msra.mxu0 %v2080
  %2308 = vmatprep.subr.mxu0 %v2084
  %2309 = vmatpush1.msra.mxu0 %v2083
  %2310 = vmatprep.subr.mxu0 %v2087
  %2311 = vmatpush1.msra.mxu0 %v2086
  %2312 = vmatprep.subr.mxu0 %v2090
  %2313 = vmatpush1.msra.mxu0 %v2089
  %2314 = vmatprep.subr.mxu0 %v2093
  %2315 = vmatpush1.msra.mxu0 %v2092
  %2316 = vmatprep.subr.mxu0 %v2096
  %2317 = vmatpush1.msra.mxu0 %v2095
  %2318 = vmatprep.subr.mxu0 %v2099
  %2319 = vmatpush1.msra.mxu0 %v2098
  %2320 = vmatprep.subr.mxu0 %v2102
  %2321 = vmatpush1.msra.mxu0 %v2101
  %2322 = vmatprep.subr.mxu0 %v2105
  %2323 = vmatpush1.msra.mxu0 %v2104
  %2324 = vmatprep.subr.mxu0 %v2108
  %2325 = vmatpush1.msra.mxu0 %v2107
  %2326 = vmatprep.subr.mxu0 %v2111
  %2327 = vmatpush1.msra.mxu0 %v2110
  %2328 = vmatprep.subr.mxu0 %v2114
  %2329 = vmatpush1.msra.mxu0 %v2113
  %2330 = vmatprep.subr.mxu0 %v2117
  %2331 = vmatpush1.msra.mxu0 %v2116
  %2332 = vmatprep.subr.mxu0 %v2120
  %2333 = vmatpush1.msra.mxu0 %v2119
  %2334 = vmatprep.subr.mxu0 %v2123
  %2335 = vmatpush1.msra.mxu0 %v2122
  %2336 = vmatprep.subr.mxu0 %v2126
  %2337 = vmatpush1.msra.mxu0 %v2125
  %2338 = vmatprep.subr.mxu0 0.0
  %2339 = vmatpush1.msra.mxu0 0.0
  %2340 = vmatprep.subr.mxu0 0.0
  %2341 = vmatpush1.msra.mxu0 0.0
  %2342 = vmatprep.subr.mxu0 0.0
  %2343 = vmatpush1.msra.mxu0 0.0
  %2344 = vmatprep.subr.mxu0 0.0
  %2345 = vmatpush1.msra.mxu0 0.0
  %2346 = vmatprep.subr.mxu0 0.0
  %2347 = vmatpush1.msra.mxu0 0.0
  %2348 = vmatprep.subr.mxu0 0.0
  %2349 = vmatpush1.msra.mxu0 0.0
  %2350 = vmatprep.subr.mxu0 0.0
  %2351 = vmatpush1.msra.mxu0 0.0
  %2352 = vmatprep.subr.mxu0 0.0
  %2353 = vmatpush1.msra.mxu0 0.0
  %2354 = vmatprep.subr.mxu0 0.0
  %2355 = vmatpush1.msra.mxu0 0.0
  %2356 = vmatprep.subr.mxu0 0.0
  %2357 = vmatpush1.msra.mxu0 0.0
  %2358 = vmatprep.subr.mxu0 0.0
  %2359 = vmatpush1.msra.mxu0 0.0
  %2360 = vmatprep.subr.mxu0 0.0
  %2361 = vmatpush1.msra.mxu0 0.0
  %2362 = vmatprep.subr.mxu0 0.0
  %2363 = vmatpush1.msra.mxu0 0.0
  %2364 = vmatprep.subr.mxu0 0.0
  %2365 = vmatpush1.msra.mxu0 0.0
  %2366 = vmatprep.subr.mxu0 0.0
  %2367 = vmatpush1.msra.mxu0 0.0
  %2368 = vmatprep.subr.mxu0 0.0
  %2369 = vmatpush1.msra.mxu0 0.0
  %2370 = vmatprep.mubr.f32.mxu0 0.0
  %2371 = vmatmul.mubr.f32.gmra.mrb[0].mxu0 %v2301
  %v2372 = vpop.f32.mrb[0].mxu0
  %v2373 = vadd.f32 0.0, %v2372
  %v2374 = vpop.f32.mrb[0].mxu0
  %v2375 = vadd.f32 0.0, %v2374
  %2376 = vdwg.mxu0
  %2377 = vmatprep.subr.mxu0 0.0
  %2378 = vmatpush1.msra.mxu0 %v2082
  %2379 = vmatprep.subr.mxu0 0.0
  %2380 = vmatpush1.msra.mxu0 %v2085
  %2381 = vmatprep.subr.mxu0 0.0
  %2382 = vmatpush1.msra.mxu0 %v2088
  %2383 = vmatprep.subr.mxu0 0.0
  %2384 = vmatpush1.msra.mxu0 %v2091
  %2385 = vmatprep.subr.mxu0 0.0
  %2386 = vmatpush1.msra.mxu0 %v2094
  %2387 = vmatprep.subr.mxu0 0.0
  %2388 = vmatpush1.msra.mxu0 %v2097
  %2389 = vmatprep.subr.mxu0 0.0
  %2390 = vmatpush1.msra.mxu0 %v2100
  %2391 = vmatprep.subr.mxu0 0.0
  %2392 = vmatpush1.msra.mxu0 %v2103
  %2393 = vmatprep.subr.mxu0 0.0
  %2394 = vmatpush1.msra.mxu0 %v2106
  %2395 = vmatprep.subr.mxu0 0.0
  %2396 = vmatpush1.msra.mxu0 %v2109
  %2397 = vmatprep.subr.mxu0 0.0
  %2398 = vmatpush1.msra.mxu0 %v2112
  %2399 = vmatprep.subr.mxu0 0.0
  %2400 = vmatpush1.msra.mxu0 %v2115
  %2401 = vmatprep.subr.mxu0 0.0
  %2402 = vmatpush1.msra.mxu0 %v2118
  %2403 = vmatprep.subr.mxu0 0.0
  %2404 = vmatpush1.msra.mxu0 %v2121
  %2405 = vmatprep.subr.mxu0 0.0
  %2406 = vmatpush1.msra.mxu0 %v2124
  %2407 = vmatprep.subr.mxu0 0.0
  %2408 = vmatpush1.msra.mxu0 %v2127
  %2409 = vmatprep.subr.mxu0 0.0
  %2410 = vmatpush1.msra.mxu0 0.0
  %2411 = vmatprep.subr.mxu0 0.0
  %2412 = vmatpush1.msra.mxu0 0.0
  %2413 = vmatprep.subr.mxu0 0.0
  %2414 = vmatpush1.msra.mxu0 0.0
  %2415 = vmatprep.subr.mxu0 0.0
  %2416 = vmatpush1.msra.mxu0 0.0
  %2417 = vmatprep.subr.mxu0 0.0
  %2418 = vmatpush1.msra.mxu0 0.0
  %2419 = vmatprep.subr.mxu0 0.0
  %2420 = vmatpush1.msra.mxu0 0.0
  %2421 = vmatprep.subr.mxu0 0.0
  %2422 = vmatpush1.msra.mxu0 0.0
  %2423 = vmatprep.subr.mxu0 0.0
  %2424 = vmatpush1.msra.mxu0 0.0
  %2425 = vmatprep.subr.mxu0 0.0
  %2426 = vmatpush1.msra.mxu0 0.0
  %2427 = vmatprep.subr.mxu0 0.0
  %2428 = vmatpush1.msra.mxu0 0.0
  %2429 = vmatprep.subr.mxu0 0.0
  %2430 = vmatpush1.msra.mxu0 0.0
  %2431 = vmatprep.subr.mxu0 0.0
  %2432 = vmatpush1.msra.mxu0 0.0
  %2433 = vmatprep.subr.mxu0 0.0
  %2434 = vmatpush1.msra.mxu0 0.0
  %2435 = vmatprep.subr.mxu0 0.0
  %2436 = vmatpush1.msra.mxu0 0.0
  %2437 = vmatprep.subr.mxu0 0.0
  %2438 = vmatpush1.msra.mxu0 0.0
  %2439 = vmatprep.subr.mxu0 0.0
  %2440 = vmatpush1.msra.mxu0 0.0
  %2441 = vmatprep.mubr.f32.mxu0 0.0
  %2442 = vmatmul.mubr.f32.gmra.mrb[0].mxu0 %v2301
  %v2443 = vpop.f32.mrb[0].mxu0
  %v2444 = vadd.f32 0.0, %v2443
  %v2445 = vpop.f32.mrb[0].mxu0
  %2446 = vdwg.mxu0
  %v2447 = vadd.f32 %v2303, %v2373
  %v2448 = vxor.u32 %v2447, 2147483648
  %v2449 = vmul.f32 %v2448, 1.442695
  %v2450 = vpow.pop %v2449
  %v2451 = vadd.f32 %v2450, 1.0
  %v2452 = vrcp.pop %v2451
  %v2453 = vmul.f32 1.0, %v2452
  %v2454 = vadd.f32 %v2304, %v2375
  %v2455 = vxor.u32 %v2454, 2147483648
  %v2456 = vmul.f32 %v2455, 1.442695
  %v2457 = vpow.pop %v2456
  %v2458 = vadd.f32 %v2457, 1.0
  %v2459 = vrcp.pop %v2458
  %v2460 = vmul.f32 1.0, %v2459
  %v2461 = vadd.f32 %v2444, %v2293
  %v2462 = vmul.f32 %v2453, %v2461
  %v2463 = vadd.f32 %v2305, %v2462
  %v2464 = vtanh.pop %v2463
  %v2465 = vsub.f32 %v2301, %v2464
  %v2466 = vmul.f32 %v2460, %v2465
  %v2467 = vadd.f32 %v2464, %v2466
  %s2468 = scalar_lea.vmem %s10, 8
  %2469 = vst [vmem:[%s2468] sm:$0xff] %v2467
  %v2470 = vld [vmem:[%s746] sm:$0xff]
  %v2471 = vld [vmem:[%s746 + $0x8] sm:$0xff]
  %v2472 = vld [vmem:[%s746 + $0x10] sm:$0xff]
  %2473 = vmatprep.subr.mxu0 %v2081
  %2474 = vmatpush1.msra.mxu0 %v2080
  %2475 = vmatprep.subr.mxu0 %v2084
  %2476 = vmatpush1.msra.mxu0 %v2083
  %2477 = vmatprep.subr.mxu0 %v2087
  %2478 = vmatpush1.msra.mxu0 %v2086
  %2479 = vmatprep.subr.mxu0 %v2090
  %2480 = vmatpush1.msra.mxu0 %v2089
  %2481 = vmatprep.subr.mxu0 %v2093
  %2482 = vmatpush1.msra.mxu0 %v2092
  %2483 = vmatprep.subr.mxu0 %v2096
  %2484 = vmatpush1.msra.mxu0 %v2095
  %2485 = vmatprep.subr.mxu0 %v2099
  %2486 = vmatpush1.msra.mxu0 %v2098
  %2487 = vmatprep.subr.mxu0 %v2102
  %2488 = vmatpush1.msra.mxu0 %v2101
  %2489 = vmatprep.subr.mxu0 %v2105
  %2490 = vmatpush1.msra.mxu0 %v2104
  %2491 = vmatprep.subr.mxu0 %v2108
  %2492 = vmatpush1.msra.mxu0 %v2107
  %2493 = vmatprep.subr.mxu0 %v2111
  %2494 = vmatpush1.msra.mxu0 %v2110
  %2495 = vmatprep.subr.mxu0 %v2114
  %2496 = vmatpush1.msra.mxu0 %v2113
  %2497 = vmatprep.subr.mxu0 %v2117
  %2498 = vmatpush1.msra.mxu0 %v2116
  %2499 = vmatprep.subr.mxu0 %v2120
  %2500 = vmatpush1.msra.mxu0 %v2119
  %2501 = vmatprep.subr.mxu0 %v2123
  %2502 = vmatpush1.msra.mxu0 %v2122
  %2503 = vmatprep.subr.mxu0 %v2126
  %2504 = vmatpush1.msra.mxu0 %v2125
  %2505 = vmatprep.subr.mxu0 0.0
  %2506 = vmatpush1.msra.mxu0 0.0
  %2507 = vmatprep.subr.mxu0 0.0
  %2508 = vmatpush1.msra.mxu0 0.0
  %2509 = vmatprep.subr.mxu0 0.0
  %2510 = vmatpush1.msra.mxu0 0.0
  %2511 = vmatprep.subr.mxu0 0.0
  %2512 = vmatpush1.msra.mxu0 0.0
  %2513 = vmatprep.subr.mxu0 0.0
  %2514 = vmatpush1.msra.mxu0 0.0
  %2515 = vmatprep.subr.mxu0 0.0
  %2516 = vmatpush1.msra.mxu0 0.0
  %2517 = vmatprep.subr.mxu0 0.0
  %2518 = vmatpush1.msra.mxu0 0.0
  %2519 = vmatprep.subr.mxu0 0.0
  %2520 = vmatpush1.msra.mxu0 0.0
  %2521 = vmatprep.subr.mxu0 0.0
  %2522 = vmatpush1.msra.mxu0 0.0
  %2523 = vmatprep.subr.mxu0 0.0
  %2524 = vmatpush1.msra.mxu0 0.0
  %2525 = vmatprep.subr.mxu0 0.0
  %2526 = vmatpush1.msra.mxu0 0.0
  %2527 = vmatprep.subr.mxu0 0.0
  %2528 = vmatpush1.msra.mxu0 0.0
  %2529 = vmatprep.subr.mxu0 0.0
  %2530 = vmatpush1.msra.mxu0 0.0
  %2531 = vmatprep.subr.mxu0 0.0
  %2532 = vmatpush1.msra.mxu0 0.0
  %2533 = vmatprep.subr.mxu0 0.0
  %2534 = vmatpush1.msra.mxu0 0.0
  %2535 = vmatprep.subr.mxu0 0.0
  %2536 = vmatpush1.msra.mxu0 0.0
  %2537 = vmatprep.mubr.f32.mxu0 0.0
  %2538 = vmatmul.mubr.f32.gmra.mrb[0].mxu0 %v2467
  %v2539 = vpop.f32.mrb[0].mxu0
  %v2540 = vadd.f32 0.0, %v2539
  %v2541 = vpop.f32.mrb[0].mxu0
  %v2542 = vadd.f32 0.0, %v2541
  %2543 = vdwg.mxu0
  %2544 = vmatprep.subr.mxu0 0.0
  %2545 = vmatpush1.msra.mxu0 %v2082
  %2546 = vmatprep.subr.mxu0 0.0
  %2547 = vmatpush1.msra.mxu0 %v2085
  %2548 = vmatprep.subr.mxu0 0.0
  %2549 = vmatpush1.msra.mxu0 %v2088
  %2550 = vmatprep.subr.mxu0 0.0
  %2551 = vmatpush1.msra.mxu0 %v2091
  %2552 = vmatprep.subr.mxu0 0.0
  %2553 = vmatpush1.msra.mxu0 %v2094
  %2554 = vmatprep.subr.mxu0 0.0
  %2555 = vmatpush1.msra.mxu0 %v2097
  %2556 = vmatprep.subr.mxu0 0.0
  %2557 = vmatpush1.msra.mxu0 %v2100
  %2558 = vmatprep.subr.mxu0 0.0
  %2559 = vmatpush1.msra.mxu0 %v2103
  %2560 = vmatprep.subr.mxu0 0.0
  %2561 = vmatpush1.msra.mxu0 %v2106
  %2562 = vmatprep.subr.mxu0 0.0
  %2563 = vmatpush1.msra.mxu0 %v2109
  %2564 = vmatprep.subr.mxu0 0.0
  %2565 = vmatpush1.msra.mxu0 %v2112
  %2566 = vmatprep.subr.mxu0 0.0
  %2567 = vmatpush1.msra.mxu0 %v2115
  %2568 = vmatprep.subr.mxu0 0.0
  %2569 = vmatpush1.msra.mxu0 %v2118
  %2570 = vmatprep.subr.mxu0 0.0
  %2571 = vmatpush1.msra.mxu0 %v2121
  %2572 = vmatprep.subr.mxu0 0.0
  %2573 = vmatpush1.msra.mxu0 %v2124
  %2574 = vmatprep.subr.mxu0 0.0
  %2575 = vmatpush1.msra.mxu0 %v2127
  %2576 = vmatprep.subr.mxu0 0.0
  %2577 = vmatpush1.msra.mxu0 0.0
  %2578 = vmatprep.subr.mxu0 0.0
  %2579 = vmatpush1.msra.mxu0 0.0
  %2580 = vmatprep.subr.mxu0 0.0
  %2581 = vmatpush1.msra.mxu0 0.0
  %2582 = vmatprep.subr.mxu0 0.0
  %2583 = vmatpush1.msra.mxu0 0.0
  %2584 = vmatprep.subr.mxu0 0.0
  %2585 = vmatpush1.msra.mxu0 0.0
  %2586 = vmatprep.subr.mxu0 0.0
  %2587 = vmatpush1.msra.mxu0 0.0
  %2588 = vmatprep.subr.mxu0 0.0
  %2589 = vmatpush1.msra.mxu0 0.0
  %2590 = vmatprep.subr.mxu0 0.0
  %2591 = vmatpush1.msra.mxu0 0.0
  %2592 = vmatprep.subr.mxu0 0.0
  %2593 = vmatpush1.msra.mxu0 0.0
  %2594 = vmatprep.subr.mxu0 0.0
  %2595 = vmatpush1.msra.mxu0 0.0
  %2596 = vmatprep.subr.mxu0 0.0
  %2597 = vmatpush1.msra.mxu0 0.0
  %2598 = vmatprep.subr.mxu0 0.0
  %2599 = vmatpush1.msra.mxu0 0.0
  %2600 = vmatprep.subr.mxu0 0.0
  %2601 = vmatpush1.msra.mxu0 0.0
  %2602 = vmatprep.subr.mxu0 0.0
  %2603 = vmatpush1.msra.mxu0 0.0
  %2604 = vmatprep.subr.mxu0 0.0
  %2605 = vmatpush1.msra.mxu0 0.0
  %2606 = vmatprep.subr.mxu0 0.0
  %2607 = vmatpush1.msra.mxu0 0.0
  %2608 = vmatprep.mubr.f32.mxu0 0.0
  %2609 = vmatmul.mubr.f32.gmra.mrb[0].mxu0 %v2467
  %v2610 = vpop.f32.mrb[0].mxu0
  %v2611 = vadd.f32 0.0, %v2610
  %v2612 = vpop.f32.mrb[0].mxu0
  %2613 = vdwg.mxu0
  %v2614 = vadd.f32 %v2470, %v2540
  %v2615 = vxor.u32 %v2614, 2147483648
  %v2616 = vmul.f32 %v2615, 1.442695
  %v2617 = vpow.pop %v2616
  %v2618 = vadd.f32 %v2617, 1.0
  %v2619 = vrcp.pop %v2618
  %v2620 = vmul.f32 1.0, %v2619
  %v2621 = vadd.f32 %v2471, %v2542
  %v2622 = vxor.u32 %v2621, 2147483648
  %v2623 = vmul.f32 %v2622, 1.442695
  %v2624 = vpow.pop %v2623
  %v2625 = vadd.f32 %v2624, 1.0
  %v2626 = vrcp.pop %v2625
  %v2627 = vmul.f32 1.0, %v2626
  %v2628 = vadd.f32 %v2611, %v2293
  %v2629 = vmul.f32 %v2620, %v2628
  %v2630 = vadd.f32 %v2472, %v2629
  %v2631 = vtanh.pop %v2630
  %v2632 = vsub.f32 %v2467, %v2631
  %v2633 = vmul.f32 %v2627, %v2632
  %v2634 = vadd.f32 %v2631, %v2633
  %s2635 = scalar_lea.vmem %s10, 16
  %2636 = vst [vmem:[%s2635] sm:$0xff] %v2634
  %v2637 = vld [vmem:[%s916] sm:$0xff]
  %v2638 = vld [vmem:[%s916 + $0x8] sm:$0xff]
  %v2639 = vld [vmem:[%s916 + $0x10] sm:$0xff]
  %2640 = vmatprep.subr.mxu0 %v2081
  %2641 = vmatpush1.msra.mxu0 %v2080
  %2642 = vmatprep.subr.mxu0 %v2084
  %2643 = vmatpush1.msra.mxu0 %v2083
  %2644 = vmatprep.subr.mxu0 %v2087
  %2645 = vmatpush1.msra.mxu0 %v2086
  %2646 = vmatprep.subr.mxu0 %v2090
  %2647 = vmatpush1.msra.mxu0 %v2089
  %2648 = vmatprep.subr.mxu0 %v2093
  %2649 = vmatpush1.msra.mxu0 %v2092
  %2650 = vmatprep.subr.mxu0 %v2096
  %2651 = vmatpush1.msra.mxu0 %v2095
  %2652 = vmatprep.subr.mxu0 %v2099
  %2653 = vmatpush1.msra.mxu0 %v2098
  %2654 = vmatprep.subr.mxu0 %v2102
  %2655 = vmatpush1.msra.mxu0 %v2101
  %2656 = vmatprep.subr.mxu0 %v2105
  %2657 = vmatpush1.msra.mxu0 %v2104
  %2658 = vmatprep.subr.mxu0 %v2108
  %2659 = vmatpush1.msra.mxu0 %v2107
  %2660 = vmatprep.subr.mxu0 %v2111
  %2661 = vmatpush1.msra.mxu0 %v2110
  %2662 = vmatprep.subr.mxu0 %v2114
  %2663 = vmatpush1.msra.mxu0 %v2113
  %2664 = vmatprep.subr.mxu0 %v2117
  %2665 = vmatpush1.msra.mxu0 %v2116
  %2666 = vmatprep.subr.mxu0 %v2120
  %2667 = vmatpush1.msra.mxu0 %v2119
  %2668 = vmatprep.subr.mxu0 %v2123
  %2669 = vmatpush1.msra.mxu0 %v2122
  %2670 = vmatprep.subr.mxu0 %v2126
  %2671 = vmatpush1.msra.mxu0 %v2125
  %2672 = vmatprep.subr.mxu0 0.0
  %2673 = vmatpush1.msra.mxu0 0.0
  %2674 = vmatprep.subr.mxu0 0.0
  %2675 = vmatpush1.msra.mxu0 0.0
  %2676 = vmatprep.subr.mxu0 0.0
  %2677 = vmatpush1.msra.mxu0 0.0
  %2678 = vmatprep.subr.mxu0 0.0
  %2679 = vmatpush1.msra.mxu0 0.0
  %2680 = vmatprep.subr.mxu0 0.0
  %2681 = vmatpush1.msra.mxu0 0.0
  %2682 = vmatprep.subr.mxu0 0.0
  %2683 = vmatpush1.msra.mxu0 0.0
  %2684 = vmatprep.subr.mxu0 0.0
  %2685 = vmatpush1.msra.mxu0 0.0
  %2686 = vmatprep.subr.mxu0 0.0
  %2687 = vmatpush1.msra.mxu0 0.0
  %2688 = vmatprep.subr.mxu0 0.0
  %2689 = vmatpush1.msra.mxu0 0.0
  %2690 = vmatprep.subr.mxu0 0.0
  %2691 = vmatpush1.msra.mxu0 0.0
  %2692 = vmatprep.subr.mxu0 0.0
  %2693 = vmatpush1.msra.mxu0 0.0
  %2694 = vmatprep.subr.mxu0 0.0
  %2695 = vmatpush1.msra.mxu0 0.0
  %2696 = vmatprep.subr.mxu0 0.0
  %2697 = vmatpush1.msra.mxu0 0.0
  %2698 = vmatprep.subr.mxu0 0.0
  %2699 = vmatpush1.msra.mxu0 0.0
  %2700 = vmatprep.subr.mxu0 0.0
  %2701 = vmatpush1.msra.mxu0 0.0
  %2702 = vmatprep.subr.mxu0 0.0
  %2703 = vmatpush1.msra.mxu0 0.0
  %2704 = vmatprep.mubr.f32.mxu0 0.0
  %2705 = vmatmul.mubr.f32.gmra.mrb[0].mxu0 %v2634
  %v2706 = vpop.f32.mrb[0].mxu0
  %v2707 = vadd.f32 0.0, %v2706
  %v2708 = vpop.f32.mrb[0].mxu0
  %v2709 = vadd.f32 0.0, %v2708
  %2710 = vdwg.mxu0
  %2711 = vmatprep.subr.mxu0 0.0
  %2712 = vmatpush1.msra.mxu0 %v2082
  %2713 = vmatprep.subr.mxu0 0.0
  %2714 = vmatpush1.msra.mxu0 %v2085
  %2715 = vmatprep.subr.mxu0 0.0
  %2716 = vmatpush1.msra.mxu0 %v2088
  %2717 = vmatprep.subr.mxu0 0.0
  %2718 = vmatpush1.msra.mxu0 %v2091
  %2719 = vmatprep.subr.mxu0 0.0
  %2720 = vmatpush1.msra.mxu0 %v2094
  %2721 = vmatprep.subr.mxu0 0.0
  %2722 = vmatpush1.msra.mxu0 %v2097
  %2723 = vmatprep.subr.mxu0 0.0
  %2724 = vmatpush1.msra.mxu0 %v2100
  %2725 = vmatprep.subr.mxu0 0.0
  %2726 = vmatpush1.msra.mxu0 %v2103
  %2727 = vmatprep.subr.mxu0 0.0
  %2728 = vmatpush1.msra.mxu0 %v2106
  %2729 = vmatprep.subr.mxu0 0.0
  %2730 = vmatpush1.msra.mxu0 %v2109
  %2731 = vmatprep.subr.mxu0 0.0
  %2732 = vmatpush1.msra.mxu0 %v2112
  %2733 = vmatprep.subr.mxu0 0.0
  %2734 = vmatpush1.msra.mxu0 %v2115
  %2735 = vmatprep.subr.mxu0 0.0
  %2736 = vmatpush1.msra.mxu0 %v2118
  %2737 = vmatprep.subr.mxu0 0.0
  %2738 = vmatpush1.msra.mxu0 %v2121
  %2739 = vmatprep.subr.mxu0 0.0
  %2740 = vmatpush1.msra.mxu0 %v2124
  %2741 = vmatprep.subr.mxu0 0.0
  %2742 = vmatpush1.msra.mxu0 %v2127
  %2743 = vmatprep.subr.mxu0 0.0
  %2744 = vmatpush1.msra.mxu0 0.0
  %2745 = vmatprep.subr.mxu0 0.0
  %2746 = vmatpush1.msra.mxu0 0.0
  %2747 = vmatprep.subr.mxu0 0.0
  %2748 = vmatpush1.msra.mxu0 0.0
  %2749 = vmatprep.subr.mxu0 0.0
  %2750 = vmatpush1.msra.mxu0 0.0
  %2751 = vmatprep.subr.mxu0 0.0
  %2752 = vmatpush1.msra.mxu0 0.0
  %2753 = vmatprep.subr.mxu0 0.0
  %2754 = vmatpush1.msra.mxu0 0.0
  %2755 = vmatprep.subr.mxu0 0.0
  %2756 = vmatpush1.msra.mxu0 0.0
  %2757 = vmatprep.subr.mxu0 0.0
  %2758 = vmatpush1.msra.mxu0 0.0
  %2759 = vmatprep.subr.mxu0 0.0
  %2760 = vmatpush1.msra.mxu0 0.0
  %2761 = vmatprep.subr.mxu0 0.0
  %2762 = vmatpush1.msra.mxu0 0.0
  %2763 = vmatprep.subr.mxu0 0.0
  %2764 = vmatpush1.msra.mxu0 0.0
  %2765 = vmatprep.subr.mxu0 0.0
  %2766 = vmatpush1.msra.mxu0 0.0
  %2767 = vmatprep.subr.mxu0 0.0
  %2768 = vmatpush1.msra.mxu0 0.0
  %2769 = vmatprep.subr.mxu0 0.0
  %2770 = vmatpush1.msra.mxu0 0.0
  %2771 = vmatprep.subr.mxu0 0.0
  %2772 = vmatpush1.msra.mxu0 0.0
  %2773 = vmatprep.subr.mxu0 0.0
  %2774 = vmatpush1.msra.mxu0 0.0
  %2775 = vmatprep.mubr.f32.mxu0 0.0
  %2776 = vmatmul.mubr.f32.gmra.mrb[0].mxu0 %v2634
  %v2777 = vpop.f32.mrb[0].mxu0
  %v2778 = vadd.f32 0.0, %v2777
  %v2779 = vpop.f32.mrb[0].mxu0
  %2780 = vdwg.mxu0
  %v2781 = vadd.f32 %v2637, %v2707
  %v2782 = vxor.u32 %v2781, 2147483648
  %v2783 = vmul.f32 %v2782, 1.442695
  %v2784 = vpow.pop %v2783
  %v2785 = vadd.f32 %v2784, 1.0
  %v2786 = vrcp.pop %v2785
  %v2787 = vmul.f32 1.0, %v2786
  %v2788 = vadd.f32 %v2638, %v2709
  %v2789 = vxor.u32 %v2788, 2147483648
  %v2790 = vmul.f32 %v2789, 1.442695
  %v2791 = vpow.pop %v2790
  %v2792 = vadd.f32 %v2791, 1.0
  %v2793 = vrcp.pop %v2792
  %v2794 = vmul.f32 1.0, %v2793
  %v2795 = vadd.f32 %v2778, %v2293
  %v2796 = vmul.f32 %v2787, %v2795
  %v2797 = vadd.f32 %v2639, %v2796
  %v2798 = vtanh.pop %v2797
  %v2799 = vsub.f32 %v2634, %v2798
  %v2800 = vmul.f32 %v2794, %v2799
  %v2801 = vadd.f32 %v2798, %v2800
  %s2802 = scalar_lea.vmem %s10, 24
  %2803 = vst [vmem:[%s2802] sm:$0xff] %v2801
  %v2804 = vld [vmem:[%s1086] sm:$0xff]
  %v2805 = vld [vmem:[%s1086 + $0x8] sm:$0xff]
  %v2806 = vld [vmem:[%s1086 + $0x10] sm:$0xff]
  %2807 = vmatprep.subr.mxu0 %v2081
  %2808 = vmatpush1.msra.mxu0 %v2080
  %2809 = vmatprep.subr.mxu0 %v2084
  %2810 = vmatpush1.msra.mxu0 %v2083
  %2811 = vmatprep.subr.mxu0 %v2087
  %2812 = vmatpush1.msra.mxu0 %v2086
  %2813 = vmatprep.subr.mxu0 %v2090
  %2814 = vmatpush1.msra.mxu0 %v2089
  %2815 = vmatprep.subr.mxu0 %v2093
  %2816 = vmatpush1.msra.mxu0 %v2092
  %2817 = vmatprep.subr.mxu0 %v2096
  %2818 = vmatpush1.msra.mxu0 %v2095
  %2819 = vmatprep.subr.mxu0 %v2099
  %2820 = vmatpush1.msra.mxu0 %v2098
  %2821 = vmatprep.subr.mxu0 %v2102
  %2822 = vmatpush1.msra.mxu0 %v2101
  %2823 = vmatprep.subr.mxu0 %v2105
  %2824 = vmatpush1.msra.mxu0 %v2104
  %2825 = vmatprep.subr.mxu0 %v2108
  %2826 = vmatpush1.msra.mxu0 %v2107
  %2827 = vmatprep.subr.mxu0 %v2111
  %2828 = vmatpush1.msra.mxu0 %v2110
  %2829 = vmatprep.subr.mxu0 %v2114
  %2830 = vmatpush1.msra.mxu0 %v2113
  %2831 = vmatprep.subr.mxu0 %v2117
  %2832 = vmatpush1.msra.mxu0 %v2116
  %2833 = vmatprep.subr.mxu0 %v2120
  %2834 = vmatpush1.msra.mxu0 %v2119
  %2835 = vmatprep.subr.mxu0 %v2123
  %2836 = vmatpush1.msra.mxu0 %v2122
  %2837 = vmatprep.subr.mxu0 %v2126
  %2838 = vmatpush1.msra.mxu0 %v2125
  %2839 = vmatprep.subr.mxu0 0.0
  %2840 = vmatpush1.msra.mxu0 0.0
  %2841 = vmatprep.subr.mxu0 0.0
  %2842 = vmatpush1.msra.mxu0 0.0
  %2843 = vmatprep.subr.mxu0 0.0
  %2844 = vmatpush1.msra.mxu0 0.0
  %2845 = vmatprep.subr.mxu0 0.0
  %2846 = vmatpush1.msra.mxu0 0.0
  %2847 = vmatprep.subr.mxu0 0.0
  %2848 = vmatpush1.msra.mxu0 0.0
  %2849 = vmatprep.subr.mxu0 0.0
  %2850 = vmatpush1.msra.mxu0 0.0
  %2851 = vmatprep.subr.mxu0 0.0
  %2852 = vmatpush1.msra.mxu0 0.0
  %2853 = vmatprep.subr.mxu0 0.0
  %2854 = vmatpush1.msra.mxu0 0.0
  %2855 = vmatprep.subr.mxu0 0.0
  %2856 = vmatpush1.msra.mxu0 0.0
  %2857 = vmatprep.subr.mxu0 0.0
  %2858 = vmatpush1.msra.mxu0 0.0
  %2859 = vmatprep.subr.mxu0 0.0
  %2860 = vmatpush1.msra.mxu0 0.0
  %2861 = vmatprep.subr.mxu0 0.0
  %2862 = vmatpush1.msra.mxu0 0.0
  %2863 = vmatprep.subr.mxu0 0.0
  %2864 = vmatpush1.msra.mxu0 0.0
  %2865 = vmatprep.subr.mxu0 0.0
  %2866 = vmatpush1.msra.mxu0 0.0
  %2867 = vmatprep.subr.mxu0 0.0
  %2868 = vmatpush1.msra.mxu0 0.0
  %2869 = vmatprep.subr.mxu0 0.0
  %2870 = vmatpush1.msra.mxu0 0.0
  %2871 = vmatprep.mubr.f32.mxu0 0.0
  %2872 = vmatmul.mubr.f32.gmra.mrb[0].mxu0 %v2801
  %v2873 = vpop.f32.mrb[0].mxu0
  %v2874 = vadd.f32 0.0, %v2873
  %v2875 = vpop.f32.mrb[0].mxu0
  %v2876 = vadd.f32 0.0, %v2875
  %2877 = vdwg.mxu0
  %2878 = vmatprep.subr.mxu0 0.0
  %2879 = vmatpush1.msra.mxu0 %v2082
  %2880 = vmatprep.subr.mxu0 0.0
  %2881 = vmatpush1.msra.mxu0 %v2085
  %2882 = vmatprep.subr.mxu0 0.0
  %2883 = vmatpush1.msra.mxu0 %v2088
  %2884 = vmatprep.subr.mxu0 0.0
  %2885 = vmatpush1.msra.mxu0 %v2091
  %2886 = vmatprep.subr.mxu0 0.0
  %2887 = vmatpush1.msra.mxu0 %v2094
  %2888 = vmatprep.subr.mxu0 0.0
  %2889 = vmatpush1.msra.mxu0 %v2097
  %2890 = vmatprep.subr.mxu0 0.0
  %2891 = vmatpush1.msra.mxu0 %v2100
  %2892 = vmatprep.subr.mxu0 0.0
  %2893 = vmatpush1.msra.mxu0 %v2103
  %2894 = vmatprep.subr.mxu0 0.0
  %2895 = vmatpush1.msra.mxu0 %v2106
  %2896 = vmatprep.subr.mxu0 0.0
  %2897 = vmatpush1.msra.mxu0 %v2109
  %2898 = vmatprep.subr.mxu0 0.0
  %2899 = vmatpush1.msra.mxu0 %v2112
  %2900 = vmatprep.subr.mxu0 0.0
  %2901 = vmatpush1.msra.mxu0 %v2115
  %2902 = vmatprep.subr.mxu0 0.0
  %2903 = vmatpush1.msra.mxu0 %v2118
  %2904 = vmatprep.subr.mxu0 0.0
  %2905 = vmatpush1.msra.mxu0 %v2121
  %2906 = vmatprep.subr.mxu0 0.0
  %2907 = vmatpush1.msra.mxu0 %v2124
  %2908 = vmatprep.subr.mxu0 0.0
  %2909 = vmatpush1.msra.mxu0 %v2127
  %2910 = vmatprep.subr.mxu0 0.0
  %2911 = vmatpush1.msra.mxu0 0.0
  %2912 = vmatprep.subr.mxu0 0.0
  %2913 = vmatpush1.msra.mxu0 0.0
  %2914 = vmatprep.subr.mxu0 0.0
  %2915 = vmatpush1.msra.mxu0 0.0
  %2916 = vmatprep.subr.mxu0 0.0
  %2917 = vmatpush1.msra.mxu0 0.0
  %2918 = vmatprep.subr.mxu0 0.0
  %2919 = vmatpush1.msra.mxu0 0.0
  %2920 = vmatprep.subr.mxu0 0.0
  %2921 = vmatpush1.msra.mxu0 0.0
  %2922 = vmatprep.subr.mxu0 0.0
  %2923 = vmatpush1.msra.mxu0 0.0
  %2924 = vmatprep.subr.mxu0 0.0
  %2925 = vmatpush1.msra.mxu0 0.0
  %2926 = vmatprep.subr.mxu0 0.0
  %2927 = vmatpush1.msra.mxu0 0.0
  %2928 = vmatprep.subr.mxu0 0.0
  %2929 = vmatpush1.msra.mxu0 0.0
  %2930 = vmatprep.subr.mxu0 0.0
  %2931 = vmatpush1.msra.mxu0 0.0
  %2932 = vmatprep.subr.mxu0 0.0
  %2933 = vmatpush1.msra.mxu0 0.0
  %2934 = vmatprep.subr.mxu0 0.0
  %2935 = vmatpush1.msra.mxu0 0.0
  %2936 = vmatprep.subr.mxu0 0.0
  %2937 = vmatpush1.msra.mxu0 0.0
  %2938 = vmatprep.subr.mxu0 0.0
  %2939 = vmatpush1.msra.mxu0 0.0
  %2940 = vmatprep.subr.mxu0 0.0
  %2941 = vmatpush1.msra.mxu0 0.0
  %2942 = vmatprep.mubr.f32.mxu0 0.0
  %2943 = vmatmul.mubr.f32.gmra.mrb[0].mxu0 %v2801
  %v2944 = vpop.f32.mrb[0].mxu0
  %v2945 = vadd.f32 0.0, %v2944
  %v2946 = vpop.f32.mrb[0].mxu0
  %2947 = vdwg.mxu0
  %v2948 = vadd.f32 %v2804, %v2874
  %v2949 = vxor.u32 %v2948, 2147483648
  %v2950 = vmul.f32 %v2949, 1.442695
  %v2951 = vpow.pop %v2950
  %v2952 = vadd.f32 %v2951, 1.0
  %v2953 = vrcp.pop %v2952
  %v2954 = vmul.f32 1.0, %v2953
  %v2955 = vadd.f32 %v2805, %v2876
  %v2956 = vxor.u32 %v2955, 2147483648
  %v2957 = vmul.f32 %v2956, 1.442695
  %v2958 = vpow.pop %v2957
  %v2959 = vadd.f32 %v2958, 1.0
  %v2960 = vrcp.pop %v2959
  %v2961 = vmul.f32 1.0, %v2960
  %v2962 = vadd.f32 %v2945, %v2293
  %v2963 = vmul.f32 %v2954, %v2962
  %v2964 = vadd.f32 %v2806, %v2963
  %v2965 = vtanh.pop %v2964
  %v2966 = vsub.f32 %v2801, %v2965
  %v2967 = vmul.f32 %v2961, %v2966
  %v2968 = vadd.f32 %v2965, %v2967
  %s2969 = scalar_lea.vmem %s10, 32
  %2970 = vst [vmem:[%s2969] sm:$0xff] %v2968
  %v2971 = vld [vmem:[%s1256] sm:$0xff]
  %v2972 = vld [vmem:[%s1256 + $0x8] sm:$0xff]
  %v2973 = vld [vmem:[%s1256 + $0x10] sm:$0xff]
  %2974 = vmatprep.subr.mxu0 %v2081
  %2975 = vmatpush1.msra.mxu0 %v2080
  %2976 = vmatprep.subr.mxu0 %v2084
  %2977 = vmatpush1.msra.mxu0 %v2083
  %2978 = vmatprep.subr.mxu0 %v2087
  %2979 = vmatpush1.msra.mxu0 %v2086
  %2980 = vmatprep.subr.mxu0 %v2090
  %2981 = vmatpush1.msra.mxu0 %v2089
  %2982 = vmatprep.subr.mxu0 %v2093
  %2983 = vmatpush1.msra.mxu0 %v2092
  %2984 = vmatprep.subr.mxu0 %v2096
  %2985 = vmatpush1.msra.mxu0 %v2095
  %2986 = vmatprep.subr.mxu0 %v2099
  %2987 = vmatpush1.msra.mxu0 %v2098
  %2988 = vmatprep.subr.mxu0 %v2102
  %2989 = vmatpush1.msra.mxu0 %v2101
  %2990 = vmatprep.subr.mxu0 %v2105
  %2991 = vmatpush1.msra.mxu0 %v2104
  %2992 = vmatprep.subr.mxu0 %v2108
  %2993 = vmatpush1.msra.mxu0 %v2107
  %2994 = vmatprep.subr.mxu0 %v2111
  %2995 = vmatpush1.msra.mxu0 %v2110
  %2996 = vmatprep.subr.mxu0 %v2114
  %2997 = vmatpush1.msra.mxu0 %v2113
  %2998 = vmatprep.subr.mxu0 %v2117
  %2999 = vmatpush1.msra.mxu0 %v2116
  %3000 = vmatprep.subr.mxu0 %v2120
  %3001 = vmatpush1.msra.mxu0 %v2119
  %3002 = vmatprep.subr.mxu0 %v2123
  %3003 = vmatpush1.msra.mxu0 %v2122
  %3004 = vmatprep.subr.mxu0 %v2126
  %3005 = vmatpush1.msra.mxu0 %v2125
  %3006 = vmatprep.subr.mxu0 0.0
  %3007 = vmatpush1.msra.mxu0 0.0
  %3008 = vmatprep.subr.mxu0 0.0
  %3009 = vmatpush1.msra.mxu0 0.0
  %3010 = vmatprep.subr.mxu0 0.0
  %3011 = vmatpush1.msra.mxu0 0.0
  %3012 = vmatprep.subr.mxu0 0.0
  %3013 = vmatpush1.msra.mxu0 0.0
  %3014 = vmatprep.subr.mxu0 0.0
  %3015 = vmatpush1.msra.mxu0 0.0
  %3016 = vmatprep.subr.mxu0 0.0
  %3017 = vmatpush1.msra.mxu0 0.0
  %3018 = vmatprep.subr.mxu0 0.0
  %3019 = vmatpush1.msra.mxu0 0.0
  %3020 = vmatprep.subr.mxu0 0.0
  %3021 = vmatpush1.msra.mxu0 0.0
  %3022 = vmatprep.subr.mxu0 0.0
  %3023 = vmatpush1.msra.mxu0 0.0
  %3024 = vmatprep.subr.mxu0 0.0
  %3025 = vmatpush1.msra.mxu0 0.0
  %3026 = vmatprep.subr.mxu0 0.0
  %3027 = vmatpush1.msra.mxu0 0.0
  %3028 = vmatprep.subr.mxu0 0.0
  %3029 = vmatpush1.msra.mxu0 0.0
  %3030 = vmatprep.subr.mxu0 0.0
  %3031 = vmatpush1.msra.mxu0 0.0
  %3032 = vmatprep.subr.mxu0 0.0
  %3033 = vmatpush1.msra.mxu0 0.0
  %3034 = vmatprep.subr.mxu0 0.0
  %3035 = vmatpush1.msra.mxu0 0.0
  %3036 = vmatprep.subr.mxu0 0.0
  %3037 = vmatpush1.msra.mxu0 0.0
  %3038 = vmatprep.mubr.f32.mxu0 0.0
  %3039 = vmatmul.mubr.f32.gmra.mrb[0].mxu0 %v2968
  %v3040 = vpop.f32.mrb[0].mxu0
  %v3041 = vadd.f32 0.0, %v3040
  %v3042 = vpop.f32.mrb[0].mxu0
  %v3043 = vadd.f32 0.0, %v3042
  %3044 = vdwg.mxu0
  %3045 = vmatprep.subr.mxu0 0.0
  %3046 = vmatpush1.msra.mxu0 %v2082
  %3047 = vmatprep.subr.mxu0 0.0
  %3048 = vmatpush1.msra.mxu0 %v2085
  %3049 = vmatprep.subr.mxu0 0.0
  %3050 = vmatpush1.msra.mxu0 %v2088
  %3051 = vmatprep.subr.mxu0 0.0
  %3052 = vmatpush1.msra.mxu0 %v2091
  %3053 = vmatprep.subr.mxu0 0.0
  %3054 = vmatpush1.msra.mxu0 %v2094
  %3055 = vmatprep.subr.mxu0 0.0
  %3056 = vmatpush1.msra.mxu0 %v2097
  %3057 = vmatprep.subr.mxu0 0.0
  %3058 = vmatpush1.msra.mxu0 %v2100
  %3059 = vmatprep.subr.mxu0 0.0
  %3060 = vmatpush1.msra.mxu0 %v2103
  %3061 = vmatprep.subr.mxu0 0.0
  %3062 = vmatpush1.msra.mxu0 %v2106
  %3063 = vmatprep.subr.mxu0 0.0
  %3064 = vmatpush1.msra.mxu0 %v2109
  %3065 = vmatprep.subr.mxu0 0.0
  %3066 = vmatpush1.msra.mxu0 %v2112
  %3067 = vmatprep.subr.mxu0 0.0
  %3068 = vmatpush1.msra.mxu0 %v2115
  %3069 = vmatprep.subr.mxu0 0.0
  %3070 = vmatpush1.msra.mxu0 %v2118
  %3071 = vmatprep.subr.mxu0 0.0
  %3072 = vmatpush1.msra.mxu0 %v2121
  %3073 = vmatprep.subr.mxu0 0.0
  %3074 = vmatpush1.msra.mxu0 %v2124
  %3075 = vmatprep.subr.mxu0 0.0
  %3076 = vmatpush1.msra.mxu0 %v2127
  %3077 = vmatprep.subr.mxu0 0.0
  %3078 = vmatpush1.msra.mxu0 0.0
  %3079 = vmatprep.subr.mxu0 0.0
  %3080 = vmatpush1.msra.mxu0 0.0
  %3081 = vmatprep.subr.mxu0 0.0
  %3082 = vmatpush1.msra.mxu0 0.0
  %3083 = vmatprep.subr.mxu0 0.0
  %3084 = vmatpush1.msra.mxu0 0.0
  %3085 = vmatprep.subr.mxu0 0.0
  %3086 = vmatpush1.msra.mxu0 0.0
  %3087 = vmatprep.subr.mxu0 0.0
  %3088 = vmatpush1.msra.mxu0 0.0
  %3089 = vmatprep.subr.mxu0 0.0
  %3090 = vmatpush1.msra.mxu0 0.0
  %3091 = vmatprep.subr.mxu0 0.0
  %3092 = vmatpush1.msra.mxu0 0.0
  %3093 = vmatprep.subr.mxu0 0.0
  %3094 = vmatpush1.msra.mxu0 0.0
  %3095 = vmatprep.subr.mxu0 0.0
  %3096 = vmatpush1.msra.mxu0 0.0
  %3097 = vmatprep.subr.mxu0 0.0
  %3098 = vmatpush1.msra.mxu0 0.0
  %3099 = vmatprep.subr.mxu0 0.0
  %3100 = vmatpush1.msra.mxu0 0.0
  %3101 = vmatprep.subr.mxu0 0.0
  %3102 = vmatpush1.msra.mxu0 0.0
  %3103 = vmatprep.subr.mxu0 0.0
  %3104 = vmatpush1.msra.mxu0 0.0
  %3105 = vmatprep.subr.mxu0 0.0
  %3106 = vmatpush1.msra.mxu0 0.0
  %3107 = vmatprep.subr.mxu0 0.0
  %3108 = vmatpush1.msra.mxu0 0.0
  %3109 = vmatprep.mubr.f32.mxu0 0.0
  %3110 = vmatmul.mubr.f32.gmra.mrb[0].mxu0 %v2968
  %v3111 = vpop.f32.mrb[0].mxu0
  %v3112 = vadd.f32 0.0, %v3111
  %v3113 = vpop.f32.mrb[0].mxu0
  %3114 = vdwg.mxu0
  %v3115 = vadd.f32 %v2971, %v3041
  %v3116 = vxor.u32 %v3115, 2147483648
  %v3117 = vmul.f32 %v3116, 1.442695
  %v3118 = vpow.pop %v3117
  %v3119 = vadd.f32 %v3118, 1.0
  %v3120 = vrcp.pop %v3119
  %v3121 = vmul.f32 1.0, %v3120
  %v3122 = vadd.f32 %v2972, %v3043
  %v3123 = vxor.u32 %v3122, 2147483648
  %v3124 = vmul.f32 %v3123, 1.442695
  %v3125 = vpow.pop %v3124
  %v3126 = vadd.f32 %v3125, 1.0
  %v3127 = vrcp.pop %v3126
  %v3128 = vmul.f32 1.0, %v3127
  %v3129 = vadd.f32 %v3112, %v2293
  %v3130 = vmul.f32 %v3121, %v3129
  %v3131 = vadd.f32 %v2973, %v3130
  %v3132 = vtanh.pop %v3131
  %v3133 = vsub.f32 %v2968, %v3132
  %v3134 = vmul.f32 %v3128, %v3133
  %v3135 = vadd.f32 %v3132, %v3134
  %s3136 = scalar_lea.vmem %s10, 40
  %3137 = vst [vmem:[%s3136] sm:$0xff] %v3135
  %v3138 = vld [vmem:[%s1426] sm:$0xff]
  %v3139 = vld [vmem:[%s1426 + $0x8] sm:$0xff]
  %v3140 = vld [vmem:[%s1426 + $0x10] sm:$0xff]
  %3141 = vmatprep.subr.mxu0 %v2081
  %3142 = vmatpush1.msra.mxu0 %v2080
  %3143 = vmatprep.subr.mxu0 %v2084
  %3144 = vmatpush1.msra.mxu0 %v2083
  %3145 = vmatprep.subr.mxu0 %v2087
  %3146 = vmatpush1.msra.mxu0 %v2086
  %3147 = vmatprep.subr.mxu0 %v2090
  %3148 = vmatpush1.msra.mxu0 %v2089
  %3149 = vmatprep.subr.mxu0 %v2093
  %3150 = vmatpush1.msra.mxu0 %v2092
  %3151 = vmatprep.subr.mxu0 %v2096
  %3152 = vmatpush1.msra.mxu0 %v2095
  %3153 = vmatprep.subr.mxu0 %v2099
  %3154 = vmatpush1.msra.mxu0 %v2098
  %3155 = vmatprep.subr.mxu0 %v2102
  %3156 = vmatpush1.msra.mxu0 %v2101
  %3157 = vmatprep.subr.mxu0 %v2105
  %3158 = vmatpush1.msra.mxu0 %v2104
  %3159 = vmatprep.subr.mxu0 %v2108
  %3160 = vmatpush1.msra.mxu0 %v2107
  %3161 = vmatprep.subr.mxu0 %v2111
  %3162 = vmatpush1.msra.mxu0 %v2110
  %3163 = vmatprep.subr.mxu0 %v2114
  %3164 = vmatpush1.msra.mxu0 %v2113
  %3165 = vmatprep.subr.mxu0 %v2117
  %3166 = vmatpush1.msra.mxu0 %v2116
  %3167 = vmatprep.subr.mxu0 %v2120
  %3168 = vmatpush1.msra.mxu0 %v2119
  %3169 = vmatprep.subr.mxu0 %v2123
  %3170 = vmatpush1.msra.mxu0 %v2122
  %3171 = vmatprep.subr.mxu0 %v2126
  %3172 = vmatpush1.msra.mxu0 %v2125
  %3173 = vmatprep.subr.mxu0 0.0
  %3174 = vmatpush1.msra.mxu0 0.0
  %3175 = vmatprep.subr.mxu0 0.0
  %3176 = vmatpush1.msra.mxu0 0.0
  %3177 = vmatprep.subr.mxu0 0.0
  %3178 = vmatpush1.msra.mxu0 0.0
  %3179 = vmatprep.subr.mxu0 0.0
  %3180 = vmatpush1.msra.mxu0 0.0
  %3181 = vmatprep.subr.mxu0 0.0
  %3182 = vmatpush1.msra.mxu0 0.0
  %3183 = vmatprep.subr.mxu0 0.0
  %3184 = vmatpush1.msra.mxu0 0.0
  %3185 = vmatprep.subr.mxu0 0.0
  %3186 = vmatpush1.msra.mxu0 0.0
  %3187 = vmatprep.subr.mxu0 0.0
  %3188 = vmatpush1.msra.mxu0 0.0
  %3189 = vmatprep.subr.mxu0 0.0
  %3190 = vmatpush1.msra.mxu0 0.0
  %3191 = vmatprep.subr.mxu0 0.0
  %3192 = vmatpush1.msra.mxu0 0.0
  %3193 = vmatprep.subr.mxu0 0.0
  %3194 = vmatpush1.msra.mxu0 0.0
  %3195 = vmatprep.subr.mxu0 0.0
  %3196 = vmatpush1.msra.mxu0 0.0
  %3197 = vmatprep.subr.mxu0 0.0
  %3198 = vmatpush1.msra.mxu0 0.0
  %3199 = vmatprep.subr.mxu0 0.0
  %3200 = vmatpush1.msra.mxu0 0.0
  %3201 = vmatprep.subr.mxu0 0.0
  %3202 = vmatpush1.msra.mxu0 0.0
  %3203 = vmatprep.subr.mxu0 0.0
  %3204 = vmatpush1.msra.mxu0 0.0
  %3205 = vmatprep.mubr.f32.mxu0 0.0
  %3206 = vmatmul.mubr.f32.gmra.mrb[0].mxu0 %v3135
  %v3207 = vpop.f32.mrb[0].mxu0
  %v3208 = vadd.f32 0.0, %v3207
  %v3209 = vpop.f32.mrb[0].mxu0
  %v3210 = vadd.f32 0.0, %v3209
  %3211 = vdwg.mxu0
  %3212 = vmatprep.subr.mxu0 0.0
  %3213 = vmatpush1.msra.mxu0 %v2082
  %3214 = vmatprep.subr.mxu0 0.0
  %3215 = vmatpush1.msra.mxu0 %v2085
  %3216 = vmatprep.subr.mxu0 0.0
  %3217 = vmatpush1.msra.mxu0 %v2088
  %3218 = vmatprep.subr.mxu0 0.0
  %3219 = vmatpush1.msra.mxu0 %v2091
  %3220 = vmatprep.subr.mxu0 0.0
  %3221 = vmatpush1.msra.mxu0 %v2094
  %3222 = vmatprep.subr.mxu0 0.0
  %3223 = vmatpush1.msra.mxu0 %v2097
  %3224 = vmatprep.subr.mxu0 0.0
  %3225 = vmatpush1.msra.mxu0 %v2100
  %3226 = vmatprep.subr.mxu0 0.0
  %3227 = vmatpush1.msra.mxu0 %v2103
  %3228 = vmatprep.subr.mxu0 0.0
  %3229 = vmatpush1.msra.mxu0 %v2106
  %3230 = vmatprep.subr.mxu0 0.0
  %3231 = vmatpush1.msra.mxu0 %v2109
  %3232 = vmatprep.subr.mxu0 0.0
  %3233 = vmatpush1.msra.mxu0 %v2112
  %3234 = vmatprep.subr.mxu0 0.0
  %3235 = vmatpush1.msra.mxu0 %v2115
  %3236 = vmatprep.subr.mxu0 0.0
  %3237 = vmatpush1.msra.mxu0 %v2118
  %3238 = vmatprep.subr.mxu0 0.0
  %3239 = vmatpush1.msra.mxu0 %v2121
  %3240 = vmatprep.subr.mxu0 0.0
  %3241 = vmatpush1.msra.mxu0 %v2124
  %3242 = vmatprep.subr.mxu0 0.0
  %3243 = vmatpush1.msra.mxu0 %v2127
  %3244 = vmatprep.subr.mxu0 0.0
  %3245 = vmatpush1.msra.mxu0 0.0
  %3246 = vmatprep.subr.mxu0 0.0
  %3247 = vmatpush1.msra.mxu0 0.0
  %3248 = vmatprep.subr.mxu0 0.0
  %3249 = vmatpush1.msra.mxu0 0.0
  %3250 = vmatprep.subr.mxu0 0.0
  %3251 = vmatpush1.msra.mxu0 0.0
  %3252 = vmatprep.subr.mxu0 0.0
  %3253 = vmatpush1.msra.mxu0 0.0
  %3254 = vmatprep.subr.mxu0 0.0
  %3255 = vmatpush1.msra.mxu0 0.0
  %3256 = vmatprep.subr.mxu0 0.0
  %3257 = vmatpush1.msra.mxu0 0.0
  %3258 = vmatprep.subr.mxu0 0.0
  %3259 = vmatpush1.msra.mxu0 0.0
  %3260 = vmatprep.subr.mxu0 0.0
  %3261 = vmatpush1.msra.mxu0 0.0
  %3262 = vmatprep.subr.mxu0 0.0
  %3263 = vmatpush1.msra.mxu0 0.0
  %3264 = vmatprep.subr.mxu0 0.0
  %3265 = vmatpush1.msra.mxu0 0.0
  %3266 = vmatprep.subr.mxu0 0.0
  %3267 = vmatpush1.msra.mxu0 0.0
  %3268 = vmatprep.subr.mxu0 0.0
  %3269 = vmatpush1.msra.mxu0 0.0
  %3270 = vmatprep.subr.mxu0 0.0
  %3271 = vmatpush1.msra.mxu0 0.0
  %3272 = vmatprep.subr.mxu0 0.0
  %3273 = vmatpush1.msra.mxu0 0.0
  %3274 = vmatprep.subr.mxu0 0.0
  %3275 = vmatpush1.msra.mxu0 0.0
  %3276 = vmatprep.mubr.f32.mxu0 0.0
  %3277 = vmatmul.mubr.f32.gmra.mrb[0].mxu0 %v3135
  %v3278 = vpop.f32.mrb[0].mxu0
  %v3279 = vadd.f32 0.0, %v3278
  %v3280 = vpop.f32.mrb[0].mxu0
  %3281 = vdwg.mxu0
  %v3282 = vadd.f32 %v3138, %v3208
  %v3283 = vxor.u32 %v3282, 2147483648
  %v3284 = vmul.f32 %v3283, 1.442695
  %v3285 = vpow.pop %v3284
  %v3286 = vadd.f32 %v3285, 1.0
  %v3287 = vrcp.pop %v3286
  %v3288 = vmul.f32 1.0, %v3287
  %v3289 = vadd.f32 %v3139, %v3210
  %v3290 = vxor.u32 %v3289, 2147483648
  %v3291 = vmul.f32 %v3290, 1.442695
  %v3292 = vpow.pop %v3291
  %v3293 = vadd.f32 %v3292, 1.0
  %v3294 = vrcp.pop %v3293
  %v3295 = vmul.f32 1.0, %v3294
  %v3296 = vadd.f32 %v3279, %v2293
  %v3297 = vmul.f32 %v3288, %v3296
  %v3298 = vadd.f32 %v3140, %v3297
  %v3299 = vtanh.pop %v3298
  %v3300 = vsub.f32 %v3135, %v3299
  %v3301 = vmul.f32 %v3295, %v3300
  %v3302 = vadd.f32 %v3299, %v3301
  %s3303 = scalar_lea.vmem %s10, 48
  %3304 = vst [vmem:[%s3303] sm:$0xff] %v3302
  %v3305 = vld [vmem:[%s1596] sm:$0xff]
  %v3306 = vld [vmem:[%s1596 + $0x8] sm:$0xff]
  %v3307 = vld [vmem:[%s1596 + $0x10] sm:$0xff]
  %3308 = vmatprep.subr.mxu0 %v2081
  %3309 = vmatpush1.msra.mxu0 %v2080
  %3310 = vmatprep.subr.mxu0 %v2084
  %3311 = vmatpush1.msra.mxu0 %v2083
  %3312 = vmatprep.subr.mxu0 %v2087
  %3313 = vmatpush1.msra.mxu0 %v2086
  %3314 = vmatprep.subr.mxu0 %v2090
  %3315 = vmatpush1.msra.mxu0 %v2089
  %3316 = vmatprep.subr.mxu0 %v2093
  %3317 = vmatpush1.msra.mxu0 %v2092
  %3318 = vmatprep.subr.mxu0 %v2096
  %3319 = vmatpush1.msra.mxu0 %v2095
  %3320 = vmatprep.subr.mxu0 %v2099
  %3321 = vmatpush1.msra.mxu0 %v2098
  %3322 = vmatprep.subr.mxu0 %v2102
  %3323 = vmatpush1.msra.mxu0 %v2101
  %3324 = vmatprep.subr.mxu0 %v2105
  %3325 = vmatpush1.msra.mxu0 %v2104
  %3326 = vmatprep.subr.mxu0 %v2108
  %3327 = vmatpush1.msra.mxu0 %v2107
  %3328 = vmatprep.subr.mxu0 %v2111
  %3329 = vmatpush1.msra.mxu0 %v2110
  %3330 = vmatprep.subr.mxu0 %v2114
  %3331 = vmatpush1.msra.mxu0 %v2113
  %3332 = vmatprep.subr.mxu0 %v2117
  %3333 = vmatpush1.msra.mxu0 %v2116
  %3334 = vmatprep.subr.mxu0 %v2120
  %3335 = vmatpush1.msra.mxu0 %v2119
  %3336 = vmatprep.subr.mxu0 %v2123
  %3337 = vmatpush1.msra.mxu0 %v2122
  %3338 = vmatprep.subr.mxu0 %v2126
  %3339 = vmatpush1.msra.mxu0 %v2125
  %3340 = vmatprep.subr.mxu0 0.0
  %3341 = vmatpush1.msra.mxu0 0.0
  %3342 = vmatprep.subr.mxu0 0.0
  %3343 = vmatpush1.msra.mxu0 0.0
  %3344 = vmatprep.subr.mxu0 0.0
  %3345 = vmatpush1.msra.mxu0 0.0
  %3346 = vmatprep.subr.mxu0 0.0
  %3347 = vmatpush1.msra.mxu0 0.0
  %3348 = vmatprep.subr.mxu0 0.0
  %3349 = vmatpush1.msra.mxu0 0.0
  %3350 = vmatprep.subr.mxu0 0.0
  %3351 = vmatpush1.msra.mxu0 0.0
  %3352 = vmatprep.subr.mxu0 0.0
  %3353 = vmatpush1.msra.mxu0 0.0
  %3354 = vmatprep.subr.mxu0 0.0
  %3355 = vmatpush1.msra.mxu0 0.0
  %3356 = vmatprep.subr.mxu0 0.0
  %3357 = vmatpush1.msra.mxu0 0.0
  %3358 = vmatprep.subr.mxu0 0.0
  %3359 = vmatpush1.msra.mxu0 0.0
  %3360 = vmatprep.subr.mxu0 0.0
  %3361 = vmatpush1.msra.mxu0 0.0
  %3362 = vmatprep.subr.mxu0 0.0
  %3363 = vmatpush1.msra.mxu0 0.0
  %3364 = vmatprep.subr.mxu0 0.0
  %3365 = vmatpush1.msra.mxu0 0.0
  %3366 = vmatprep.subr.mxu0 0.0
  %3367 = vmatpush1.msra.mxu0 0.0
  %3368 = vmatprep.subr.mxu0 0.0
  %3369 = vmatpush1.msra.mxu0 0.0
  %3370 = vmatprep.subr.mxu0 0.0
  %3371 = vmatpush1.msra.mxu0 0.0
  %3372 = vmatprep.mubr.f32.mxu0 0.0
  %3373 = vmatmul.mubr.f32.gmra.mrb[0].mxu0 %v3302
  %v3374 = vpop.f32.mrb[0].mxu0
  %v3375 = vadd.f32 0.0, %v3374
  %v3376 = vpop.f32.mrb[0].mxu0
  %v3377 = vadd.f32 0.0, %v3376
  %3378 = vdwg.mxu0
  %3379 = vmatprep.subr.mxu0 0.0
  %3380 = vmatpush1.msra.mxu0 %v2082
  %3381 = vmatprep.subr.mxu0 0.0
  %3382 = vmatpush1.msra.mxu0 %v2085
  %3383 = vmatprep.subr.mxu0 0.0
  %3384 = vmatpush1.msra.mxu0 %v2088
  %3385 = vmatprep.subr.mxu0 0.0
  %3386 = vmatpush1.msra.mxu0 %v2091
  %3387 = vmatprep.subr.mxu0 0.0
  %3388 = vmatpush1.msra.mxu0 %v2094
  %3389 = vmatprep.subr.mxu0 0.0
  %3390 = vmatpush1.msra.mxu0 %v2097
  %3391 = vmatprep.subr.mxu0 0.0
  %3392 = vmatpush1.msra.mxu0 %v2100
  %3393 = vmatprep.subr.mxu0 0.0
  %3394 = vmatpush1.msra.mxu0 %v2103
  %3395 = vmatprep.subr.mxu0 0.0
  %3396 = vmatpush1.msra.mxu0 %v2106
  %3397 = vmatprep.subr.mxu0 0.0
  %3398 = vmatpush1.msra.mxu0 %v2109
  %3399 = vmatprep.subr.mxu0 0.0
  %3400 = vmatpush1.msra.mxu0 %v2112
  %3401 = vmatprep.subr.mxu0 0.0
  %3402 = vmatpush1.msra.mxu0 %v2115
  %3403 = vmatprep.subr.mxu0 0.0
  %3404 = vmatpush1.msra.mxu0 %v2118
  %3405 = vmatprep.subr.mxu0 0.0
  %3406 = vmatpush1.msra.mxu0 %v2121
  %3407 = vmatprep.subr.mxu0 0.0
  %3408 = vmatpush1.msra.mxu0 %v2124
  %3409 = vmatprep.subr.mxu0 0.0
  %3410 = vmatpush1.msra.mxu0 %v2127
  %3411 = vmatprep.subr.mxu0 0.0
  %3412 = vmatpush1.msra.mxu0 0.0
  %3413 = vmatprep.subr.mxu0 0.0
  %3414 = vmatpush1.msra.mxu0 0.0
  %3415 = vmatprep.subr.mxu0 0.0
  %3416 = vmatpush1.msra.mxu0 0.0
  %3417 = vmatprep.subr.mxu0 0.0
  %3418 = vmatpush1.msra.mxu0 0.0
  %3419 = vmatprep.subr.mxu0 0.0
  %3420 = vmatpush1.msra.mxu0 0.0
  %3421 = vmatprep.subr.mxu0 0.0
  %3422 = vmatpush1.msra.mxu0 0.0
  %3423 = vmatprep.subr.mxu0 0.0
  %3424 = vmatpush1.msra.mxu0 0.0
  %3425 = vmatprep.subr.mxu0 0.0
  %3426 = vmatpush1.msra.mxu0 0.0
  %3427 = vmatprep.subr.mxu0 0.0
  %3428 = vmatpush1.msra.mxu0 0.0
  %3429 = vmatprep.subr.mxu0 0.0
  %3430 = vmatpush1.msra.mxu0 0.0
  %3431 = vmatprep.subr.mxu0 0.0
  %3432 = vmatpush1.msra.mxu0 0.0
  %3433 = vmatprep.subr.mxu0 0.0
  %3434 = vmatpush1.msra.mxu0 0.0
  %3435 = vmatprep.subr.mxu0 0.0
  %3436 = vmatpush1.msra.mxu0 0.0
  %3437 = vmatprep.subr.mxu0 0.0
  %3438 = vmatpush1.msra.mxu0 0.0
  %3439 = vmatprep.subr.mxu0 0.0
  %3440 = vmatpush1.msra.mxu0 0.0
  %3441 = vmatprep.subr.mxu0 0.0
  %3442 = vmatpush1.msra.mxu0 0.0
  %3443 = vmatprep.mubr.f32.mxu0 0.0
  %3444 = vmatmul.mubr.f32.gmra.mrb[0].mxu0 %v3302
  %v3445 = vpop.f32.mrb[0].mxu0
  %v3446 = vadd.f32 0.0, %v3445
  %v3447 = vpop.f32.mrb[0].mxu0
  %3448 = vdwg.mxu0
  %v3449 = vadd.f32 %v3305, %v3375
  %v3450 = vxor.u32 %v3449, 2147483648
  %v3451 = vmul.f32 %v3450, 1.442695
  %v3452 = vpow.pop %v3451
  %v3453 = vadd.f32 %v3452, 1.0
  %v3454 = vrcp.pop %v3453
  %v3455 = vmul.f32 1.0, %v3454
  %v3456 = vadd.f32 %v3306, %v3377
  %v3457 = vxor.u32 %v3456, 2147483648
  %v3458 = vmul.f32 %v3457, 1.442695
  %v3459 = vpow.pop %v3458
  %v3460 = vadd.f32 %v3459, 1.0
  %v3461 = vrcp.pop %v3460
  %v3462 = vmul.f32 1.0, %v3461
  %v3463 = vadd.f32 %v3446, %v2293
  %v3464 = vmul.f32 %v3455, %v3463
  %v3465 = vadd.f32 %v3307, %v3464
  %v3466 = vtanh.pop %v3465
  %v3467 = vsub.f32 %v3302, %v3466
  %v3468 = vmul.f32 %v3462, %v3467
  %v3469 = vadd.f32 %v3466, %v3468
  %s3470 = scalar_lea.vmem %s10, 56
  %3471 = vst [vmem:[%s3470] sm:$0xff] %v3469
  %3472 = vst [vmem:[%s2129] sm:$0xff] %v3469
  // Predicated region
  $region46: #{grouped_gru_forward.1} parent=0 // pred_check
    %p3473 = pneg %p37
  $region47: #{grouped_gru_forward.1} parent=0 // pred_check_branch
    %3475 = sbr.rel (%p3473) target = $region49
  $region48: #{grouped_gru_forward.1} parent=0 // pred_region
    %v3476 = vld [vmem:[#allocation3] sm:$0xff]
    %v3477 = vld [vmem:[#allocation3 + $0x8] sm:$0xff]
    %3478 = vst [vmem:[%s11] sm:$0xff] %v3476
    %3479 = vst [vmem:[%s11 + $0x8] sm:$0xff] %v3477
  $region49: #{grouped_gru_forward.1} parent=0 // pred_fallthru
    _
  // Predicated region
  $region50: #{grouped_gru_forward.1} parent=0 // pred_check
    _
  $region51: #{grouped_gru_forward.1} parent=0 // pred_check_branch
    %3481 = sbr.rel (0) target = $region53
  $region52: #{grouped_gru_forward.1} parent=0 // pred_region
    _
  $region53: #{grouped_gru_forward.1} parent=0 // pred_fallthru
    _
  // Predicated region
  $region54: #{grouped_gru_forward.1} parent=0 // pred_check
    _
  $region55: #{grouped_gru_forward.1} parent=0 // pred_check_branch
    %3483 = sbr.rel (0) target = $region57
  $region56: #{grouped_gru_forward.1} parent=0 // pred_region
    _
  $region57: #{grouped_gru_forward.1} parent=0 // pred_fallthru
    _
  // Predicated region
  $region58: #{grouped_gru_forward.1} parent=0 // pred_check
    _
  $region59: #{grouped_gru_forward.1} parent=0 // pred_check_branch
    %3485 = sbr.rel (0) target = $region61
  $region60: #{grouped_gru_forward.1} parent=0 // pred_region
    _
  $region61: #{grouped_gru_forward.1} parent=0 // pred_fallthru
    _
  // Predicated region
  $region62: #{grouped_gru_forward.1} parent=0 // pred_check
    _
  $region63: #{grouped_gru_forward.1} parent=0 // pred_check_branch
    %3487 = sbr.rel (0) target = $region65
  $region64: #{grouped_gru_forward.1} parent=0 // pred_region
    _
  $region65: #{grouped_gru_forward.1} parent=0 // pred_fallthru
    _

</llo_original>
